<compile_context>
chip_gen: v7x
topology: tpu7x:2x2x1
jax: 0.10.0
libtpu: 0.0.40
codegen_flags: <defaults>
</compile_context>

<pallas_src>
import functools

import jax
import jax.numpy as jnp
import numpy as np
from jax.experimental import pallas as pl
from jax.experimental.pallas import tpu as pltpu


def _round_up(n, m):
    return ((n + m - 1) // m) * m


def _pad_to(a, shape, value=0.0):
    pads = [(0, t - s) for s, t in zip(a.shape, shape)]
    return jnp.pad(a, pads, constant_values=value)


def nice_kernel(xe_ref, xo_ref, w_in_ref, b_in_ref, w_mid_ref, b_mid_ref,
                w_out_ref, b_out_ref, ese_ref, eso_ref, out_ref, *,
                mask_config, wh_valid):
    even = xe_ref[...]            # (TB, Whp) f32, units 0,2,4,...
    odd = xo_ref[...]             # (TB, Whp) f32, units 1,3,5,...
    C = w_in_ref.shape[0]         # number of coupling layers
    H1 = w_mid_ref.shape[1]       # hidden - 1 mid blocks
    bf16 = jnp.bfloat16

    # ---- coupling layers (f: X -> Z), statically unrolled ----
    for c in range(C):
        mc = (mask_config + c) % 2
        if mc:
            on, off = even, odd      # transform even units, condition on odd
        else:
            off, on = even, odd      # transform odd units, condition on even

        # bf16 MXU matmuls with f32 accumulation; biases / ReLU / adds in f32.
        h = jnp.dot(off.astype(bf16), w_in_ref[c],
                    preferred_element_type=jnp.float32) + b_in_ref[c]
        h = jnp.maximum(h, 0.0)
        for j in range(H1):
            h = jnp.dot(h.astype(bf16), w_mid_ref[c, j],
                        preferred_element_type=jnp.float32) + b_mid_ref[c, j]
            h = jnp.maximum(h, 0.0)
        shift = jnp.dot(h.astype(bf16), w_out_ref[c],
                        preferred_element_type=jnp.float32) + b_out_ref[c]
        on = on + shift              # forward direction (reverse=False)

        if mc:
            even, odd = on, off
        else:
            even, odd = off, on

    # ---- scaling layer (exp(scale) precomputed in the wrapper) ----
    ze = even * ese_ref[...]         # (TB, Whp)
    zo = odd * eso_ref[...]

    # ---- standard-logistic prior log-prob ----
    # -(softplus(z) + softplus(-z)) == -(|z| + 2*log1p(exp(-|z|)))
    def lp_elem(z):
        a = jnp.abs(z)
        return -(a + 2.0 * jnp.log1p(jnp.exp(-a)))

    whp = even.shape[1]
    lane = jax.lax.broadcasted_iota(jnp.int32, (1, whp), 1)
    mask = (lane < wh_valid).astype(jnp.float32)   # zero out padded features

    lp = jnp.sum(lp_elem(ze) * mask, axis=1, keepdims=True)
    lp = lp + jnp.sum(lp_elem(zo) * mask, axis=1, keepdims=True)   # (TB, 1)

    # Lane-dense store: write a full 128-wide slab (unmasked vst); the wrapper
    # slices column 0.  log_det_J is added outside the kernel.
    out_ref[...] = jnp.broadcast_to(lp, out_ref.shape)


def nice_log_prob(x, params, mask_config, block_b=128):
    x = x.astype(jnp.float32)
    B, W = x.shape
    Wh = W // 2
    Whp = _round_up(Wh, 128)

    block_b = min(block_b, _round_up(B, 8))
    Bp = _round_up(B, block_b)

    x2 = x.reshape(B, Wh, 2)
    x_even = _pad_to(x2[:, :, 0], (Bp, Whp))
    x_odd = _pad_to(x2[:, :, 1], (Bp, Whp))

    w_in, b_in = params["w_in"], params["b_in"]        # (C, Wh, M), (C, 1, M)
    w_mid, b_mid = params["w_mid"], params["b_mid"]    # (C, H1, M, M), (C, H1, 1, M)
    w_out, b_out = params["w_out"], params["b_out"]    # (C, M, Wh), (C, 1, Wh)
    C, _, M = w_in.shape
    H1 = w_mid.shape[1]
    Mp = _round_up(M, 128)

    bf16 = jnp.bfloat16
    w_in_p = _pad_to(w_in, (C, Whp, Mp)).astype(bf16)
    b_in_p = _pad_to(b_in, (C, 1, Mp))
    w_mid_p = _pad_to(w_mid, (C, H1, Mp, Mp)).astype(bf16)
    b_mid_p = _pad_to(b_mid, (C, H1, 1, Mp))
    w_out_p = _pad_to(w_out, (C, Mp, Whp)).astype(bf16)
    b_out_p = _pad_to(b_out, (C, 1, Whp))

    # Grid-invariant scale work hoisted out of the kernel.
    scale = params["scale"].reshape(1, Wh, 2)
    exp_se = _pad_to(jnp.exp(scale[:, :, 0]), (1, Whp), 1.0)
    exp_so = _pad_to(jnp.exp(scale[:, :, 1]), (1, Whp), 1.0)
    log_det_J = jnp.sum(params["scale"])

    kernel = functools.partial(nice_kernel, mask_config=mask_config, wh_valid=Wh)
    out = pl.pallas_call(
        kernel,
        out_shape=jax.ShapeDtypeStruct((Bp, 128), jnp.float32),
        grid=(Bp // block_b,),
        in_specs=[
            pl.BlockSpec((block_b, Whp), lambda b: (b, 0)),          # x_even
            pl.BlockSpec((block_b, Whp), lambda b: (b, 0)),          # x_odd
            pl.BlockSpec((C, Whp, Mp), lambda b: (0, 0, 0)),         # w_in (bf16)
            pl.BlockSpec((C, 1, Mp), lambda b: (0, 0, 0)),           # b_in
            pl.BlockSpec((C, H1, Mp, Mp), lambda b: (0, 0, 0, 0)),   # w_mid (bf16)
            pl.BlockSpec((C, H1, 1, Mp), lambda b: (0, 0, 0, 0)),    # b_mid
            pl.BlockSpec((C, Mp, Whp), lambda b: (0, 0, 0)),         # w_out (bf16)
            pl.BlockSpec((C, 1, Whp), lambda b: (0, 0, 0)),          # b_out
            pl.BlockSpec((1, Whp), lambda b: (0, 0)),                # exp(scale) even
            pl.BlockSpec((1, Whp), lambda b: (0, 0)),                # exp(scale) odd
        ],
        out_specs=pl.BlockSpec((block_b, 128), lambda b: (b, 0)),
        compiler_params=pltpu.CompilerParams(
            dimension_semantics=("parallel",),
            vmem_limit_bytes=64 * 1024 * 1024),
    )(x_even, x_odd, w_in_p, b_in_p, w_mid_p, b_mid_p, w_out_p, b_out_p,
      exp_se, exp_so)
    return out[:B, 0] + log_det_J


def init_params(key, in_out_dim, mid_dim, hidden, coupling):
    """Deterministic init mimicking PyTorch nn.Linear defaults (U(-1/sqrt(fan_in), ...))."""
    Wh = in_out_dim // 2
    H1 = hidden - 1

    def linear(k, fan_in, fan_out):
        bound = 1.0 / np.sqrt(fan_in)
        kw, kb = jax.random.split(k)
        w = jax.random.uniform(kw, (fan_in, fan_out), jnp.float32, -bound, bound)
        b = jax.random.uniform(kb, (1, fan_out), jnp.float32, -bound, bound)
        return w, b

    keys = jax.random.split(key, coupling * (2 + H1))
    ki = 0
    w_in, b_in, w_mid, b_mid, w_out, b_out = [], [], [], [], [], []
    for _ in range(coupling):
        w, b = linear(keys[ki], Wh, mid_dim); ki += 1
        w_in.append(w); b_in.append(b)
        wm, bm = [], []
        for _ in range(H1):
            w, b = linear(keys[ki], mid_dim, mid_dim); ki += 1
            wm.append(w); bm.append(b)
        w_mid.append(jnp.stack(wm)); b_mid.append(jnp.stack(bm))
        w, b = linear(keys[ki], mid_dim, Wh); ki += 1
        w_out.append(w); b_out.append(b)

    return dict(
        w_in=jnp.stack(w_in), b_in=jnp.stack(b_in),
        w_mid=jnp.stack(w_mid), b_mid=jnp.stack(b_mid),
        w_out=jnp.stack(w_out), b_out=jnp.stack(b_out),
        scale=jnp.zeros((1, in_out_dim), jnp.float32),   # Scaling layer init = zeros
    )


def reference_log_prob(x, params, mask_config):
    """Pure-JAX mirror of the PyTorch forward (interleaved layout), using the
    same bf16-matmul / f32-accumulate precision as the kernel, for validation."""
    B, W = x.shape
    Wh = W // 2
    C = params["w_in"].shape[0]
    H1 = params["w_mid"].shape[1]
    bf16 = jnp.bfloat16
    for c in range(C):
        mc = (mask_config + c) % 2
        x2 = x.reshape(B, Wh, 2)
        if mc:
            on, off = x2[:, :, 0], x2[:, :, 1]
        else:
            off, on = x2[:, :, 0], x2[:, :, 1]
        h = jnp.dot(off.astype(bf16), params["w_in"][c].astype(bf16),
                    preferred_element_type=jnp.float32) + params["b_in"][c]
        h = jax.nn.relu(h)
        for j in range(H1):
            h = jnp.dot(h.astype(bf16), params["w_mid"][c, j].astype(bf16),
                        preferred_element_type=jnp.float32) + params["b_mid"][c, j]
            h = jax.nn.relu(h)
        shift = jnp.dot(h.astype(bf16), params["w_out"][c].astype(bf16),
                        preferred_element_type=jnp.float32) + params["b_out"][c]
        on = on + shift
        if mc:
            x2 = jnp.stack((on, off), axis=2)
        else:
            x2 = jnp.stack((off, on), axis=2)
        x = x2.reshape(B, W)
    scale = params["scale"]
    z = x * jnp.exp(scale)
    log_det_J = jnp.sum(scale)
    lp = -(jax.nn.softplus(z) + jax.nn.softplus(-z))
    return jnp.sum(lp, axis=1) + log_det_J


if __name__ == "__main__":
    # Config consistent with the module's constructor:
    # NICE(prior=std logistic, coupling=4, in_out_dim=64, mid_dim=128, hidden=3, mask_config=1)
    B, in_out_dim, mid_dim, hidden, coupling, mask_config = 256, 64, 128, 3, 4, 1

    key = jax.random.PRNGKey(0)
    kx, kp = jax.random.split(key)
    x = jax.random.normal(kx, (B, in_out_dim), jnp.float32)
    params = init_params(kp, in_out_dim, mid_dim, hidden, coupling)

    ll = nice_log_prob(x, params, mask_config)
    ll = jax.block_until_ready(ll)

    ll_ref = jax.block_until_ready(reference_log_prob(x, params, mask_config))
    if not np.allclose(np.asarray(ll), np.asarray(ll_ref), rtol=1e-3, atol=1e-2):
        raise AssertionError(f"mismatch: {ll[:8]} vs {ll_ref[:8]}")

    print("KERNEL_OK")
</pallas_src>

<mosaic_0001>
module attributes {stable_mosaic.version = 11 : i64} {
  func.func @nice_kernel(%arg0: i32, %arg1: memref<128x128xf32, #tpu.memory_space<vmem>>, %arg2: memref<128x128xf32, #tpu.memory_space<vmem>>, %arg3: memref<4x128x128xbf16, #tpu.memory_space<vmem>>, %arg4: memref<4x1x128xf32, #tpu.memory_space<vmem>>, %arg5: memref<4x2x128x128xbf16, #tpu.memory_space<vmem>>, %arg6: memref<4x2x1x128xf32, #tpu.memory_space<vmem>>, %arg7: memref<4x128x128xbf16, #tpu.memory_space<vmem>>, %arg8: memref<4x1x128xf32, #tpu.memory_space<vmem>>, %arg9: memref<1x128xf32, #tpu.memory_space<vmem>>, %arg10: memref<1x128xf32, #tpu.memory_space<vmem>>, %arg11: memref<128x128xf32, #tpu.memory_space<vmem>>) attributes {dimension_semantics = [#tpu.dimension_semantics<parallel>], iteration_bounds = array<i64: 2>, scalar_prefetch = 0 : i64, scratch_operands = 0 : i64, tpu.core_type = #tpu.core_type<tc>, window_params = [{transform_indices = @transform_0, window_bounds = array<i64: 128, 128>}, {transform_indices = @transform_1, window_bounds = array<i64: 128, 128>}, {pipeline_mode = #tpu.pipeline_mode<synchronous>, transform_indices = @transform_2, window_bounds = array<i64: 4, 128, 128>}, {pipeline_mode = #tpu.pipeline_mode<synchronous>, transform_indices = @transform_3, window_bounds = array<i64: 4, 1, 128>}, {pipeline_mode = #tpu.pipeline_mode<synchronous>, transform_indices = @transform_4, window_bounds = array<i64: 4, 2, 128, 128>}, {pipeline_mode = #tpu.pipeline_mode<synchronous>, transform_indices = @transform_5, window_bounds = array<i64: 4, 2, 1, 128>}, {pipeline_mode = #tpu.pipeline_mode<synchronous>, transform_indices = @transform_6, window_bounds = array<i64: 4, 128, 128>}, {pipeline_mode = #tpu.pipeline_mode<synchronous>, transform_indices = @transform_7, window_bounds = array<i64: 4, 1, 128>}, {pipeline_mode = #tpu.pipeline_mode<synchronous>, transform_indices = @transform_8, window_bounds = array<i64: 1, 128>}, {pipeline_mode = #tpu.pipeline_mode<synchronous>, transform_indices = @transform_9, window_bounds = array<i64: 1, 128>}, {transform_indices = @transform_10, window_bounds = array<i64: 128, 128>}]} {
    %c0 = arith.constant 0 : index
    %c0_0 = arith.constant 0 : index
    %0 = vector.load %arg1[%c0, %c0_0] : memref<128x128xf32, #tpu.memory_space<vmem>>, vector<128x128xf32>
    %c0_1 = arith.constant 0 : index
    %c0_2 = arith.constant 0 : index
    %1 = vector.load %arg2[%c0_1, %c0_2] : memref<128x128xf32, #tpu.memory_space<vmem>>, vector<128x128xf32>
    %2 = arith.truncf %1 : vector<128x128xf32> to vector<128x128xbf16>
    %c0_3 = arith.constant 0 : index
    %c0_4 = arith.constant 0 : index
    %c0_5 = arith.constant 0 : index
    %3 = vector.load %arg3[%c0_3, %c0_4, %c0_5] : memref<4x128x128xbf16, #tpu.memory_space<vmem>>, vector<1x128x128xbf16>
    %4 = vector.shape_cast %3 : vector<1x128x128xbf16> to vector<128x128xbf16>
    %cst = arith.constant dense<0.000000e+00> : vector<128x128xf32>
    %5 = tpu.matmul %2, %4, %cst {dimension_numbers = #tpu.dot_dimension_numbers<[1], [0], [0], [1], [0, 0, 1, 1], [], []>} : vector<128x128xbf16>, vector<128x128xbf16>, vector<128x128xf32> -> vector<128x128xf32>
    %c0_6 = arith.constant 0 : index
    %c0_7 = arith.constant 0 : index
    %c0_8 = arith.constant 0 : index
    %6 = vector.load %arg4[%c0_6, %c0_7, %c0_8] : memref<4x1x128xf32, #tpu.memory_space<vmem>>, vector<1x1x128xf32>
    %7 = vector.shape_cast %6 : vector<1x1x128xf32> to vector<1x128xf32>
    %8 = vector.broadcast %7 : vector<1x128xf32> to vector<128x128xf32>
    %9 = arith.addf %5, %8 : vector<128x128xf32>
    %cst_9 = arith.constant 0.000000e+00 : f32
    %10 = vector.broadcast %cst_9 : f32 to vector<128x128xf32>
    %11 = arith.maximumf %9, %10 : vector<128x128xf32>
    %12 = arith.truncf %11 : vector<128x128xf32> to vector<128x128xbf16>
    %c0_10 = arith.constant 0 : index
    %c0_11 = arith.constant 0 : index
    %c0_12 = arith.constant 0 : index
    %c0_13 = arith.constant 0 : index
    %13 = vector.load %arg5[%c0_10, %c0_11, %c0_12, %c0_13] : memref<4x2x128x128xbf16, #tpu.memory_space<vmem>>, vector<1x1x128x128xbf16>
    %14 = vector.shape_cast %13 : vector<1x1x128x128xbf16> to vector<128x128xbf16>
    %cst_14 = arith.constant dense<0.000000e+00> : vector<128x128xf32>
    %15 = tpu.matmul %12, %14, %cst_14 {dimension_numbers = #tpu.dot_dimension_numbers<[1], [0], [0], [1], [0, 0, 1, 1], [], []>} : vector<128x128xbf16>, vector<128x128xbf16>, vector<128x128xf32> -> vector<128x128xf32>
    %c0_15 = arith.constant 0 : index
    %c0_16 = arith.constant 0 : index
    %c0_17 = arith.constant 0 : index
    %c0_18 = arith.constant 0 : index
    %16 = vector.load %arg6[%c0_15, %c0_16, %c0_17, %c0_18] : memref<4x2x1x128xf32, #tpu.memory_space<vmem>>, vector<1x1x1x128xf32>
    %17 = vector.shape_cast %16 : vector<1x1x1x128xf32> to vector<1x128xf32>
    %18 = vector.broadcast %17 : vector<1x128xf32> to vector<128x128xf32>
    %19 = arith.addf %15, %18 : vector<128x128xf32>
    %cst_19 = arith.constant 0.000000e+00 : f32
    %20 = vector.broadcast %cst_19 : f32 to vector<128x128xf32>
    %21 = arith.maximumf %19, %20 : vector<128x128xf32>
    %22 = arith.truncf %21 : vector<128x128xf32> to vector<128x128xbf16>
    %c0_20 = arith.constant 0 : index
    %c1 = arith.constant 1 : index
    %c0_21 = arith.constant 0 : index
    %c0_22 = arith.constant 0 : index
    %23 = vector.load %arg5[%c0_20, %c1, %c0_21, %c0_22] : memref<4x2x128x128xbf16, #tpu.memory_space<vmem>>, vector<1x1x128x128xbf16>
    %24 = vector.shape_cast %23 : vector<1x1x128x128xbf16> to vector<128x128xbf16>
    %cst_23 = arith.constant dense<0.000000e+00> : vector<128x128xf32>
    %25 = tpu.matmul %22, %24, %cst_23 {dimension_numbers = #tpu.dot_dimension_numbers<[1], [0], [0], [1], [0, 0, 1, 1], [], []>} : vector<128x128xbf16>, vector<128x128xbf16>, vector<128x128xf32> -> vector<128x128xf32>
    %c0_24 = arith.constant 0 : index
    %c1_25 = arith.constant 1 : index
    %c0_26 = arith.constant 0 : index
    %c0_27 = arith.constant 0 : index
    %26 = vector.load %arg6[%c0_24, %c1_25, %c0_26, %c0_27] : memref<4x2x1x128xf32, #tpu.memory_space<vmem>>, vector<1x1x1x128xf32>
    %27 = vector.shape_cast %26 : vector<1x1x1x128xf32> to vector<1x128xf32>
    %28 = vector.broadcast %27 : vector<1x128xf32> to vector<128x128xf32>
    %29 = arith.addf %25, %28 : vector<128x128xf32>
    %cst_28 = arith.constant 0.000000e+00 : f32
    %30 = vector.broadcast %cst_28 : f32 to vector<128x128xf32>
    %31 = arith.maximumf %29, %30 : vector<128x128xf32>
    %32 = arith.truncf %31 : vector<128x128xf32> to vector<128x128xbf16>
    %c0_29 = arith.constant 0 : index
    %c0_30 = arith.constant 0 : index
    %c0_31 = arith.constant 0 : index
    %33 = vector.load %arg7[%c0_29, %c0_30, %c0_31] : memref<4x128x128xbf16, #tpu.memory_space<vmem>>, vector<1x128x128xbf16>
    %34 = vector.shape_cast %33 : vector<1x128x128xbf16> to vector<128x128xbf16>
    %cst_32 = arith.constant dense<0.000000e+00> : vector<128x128xf32>
    %35 = tpu.matmul %32, %34, %cst_32 {dimension_numbers = #tpu.dot_dimension_numbers<[1], [0], [0], [1], [0, 0, 1, 1], [], []>} : vector<128x128xbf16>, vector<128x128xbf16>, vector<128x128xf32> -> vector<128x128xf32>
    %c0_33 = arith.constant 0 : index
    %c0_34 = arith.constant 0 : index
    %c0_35 = arith.constant 0 : index
    %36 = vector.load %arg8[%c0_33, %c0_34, %c0_35] : memref<4x1x128xf32, #tpu.memory_space<vmem>>, vector<1x1x128xf32>
    %37 = vector.shape_cast %36 : vector<1x1x128xf32> to vector<1x128xf32>
    %38 = vector.broadcast %37 : vector<1x128xf32> to vector<128x128xf32>
    %39 = arith.addf %35, %38 : vector<128x128xf32>
    %40 = arith.addf %0, %39 : vector<128x128xf32>
    %41 = arith.truncf %40 : vector<128x128xf32> to vector<128x128xbf16>
    %c1_36 = arith.constant 1 : index
    %c0_37 = arith.constant 0 : index
    %c0_38 = arith.constant 0 : index
    %42 = vector.load %arg3[%c1_36, %c0_37, %c0_38] : memref<4x128x128xbf16, #tpu.memory_space<vmem>>, vector<1x128x128xbf16>
    %43 = vector.shape_cast %42 : vector<1x128x128xbf16> to vector<128x128xbf16>
    %cst_39 = arith.constant dense<0.000000e+00> : vector<128x128xf32>
    %44 = tpu.matmul %41, %43, %cst_39 {dimension_numbers = #tpu.dot_dimension_numbers<[1], [0], [0], [1], [0, 0, 1, 1], [], []>} : vector<128x128xbf16>, vector<128x128xbf16>, vector<128x128xf32> -> vector<128x128xf32>
    %c1_40 = arith.constant 1 : index
    %c0_41 = arith.constant 0 : index
    %c0_42 = arith.constant 0 : index
    %45 = vector.load %arg4[%c1_40, %c0_41, %c0_42] : memref<4x1x128xf32, #tpu.memory_space<vmem>>, vector<1x1x128xf32>
    %46 = vector.shape_cast %45 : vector<1x1x128xf32> to vector<1x128xf32>
    %47 = vector.broadcast %46 : vector<1x128xf32> to vector<128x128xf32>
    %48 = arith.addf %44, %47 : vector<128x128xf32>
    %cst_43 = arith.constant 0.000000e+00 : f32
    %49 = vector.broadcast %cst_43 : f32 to vector<128x128xf32>
    %50 = arith.maximumf %48, %49 : vector<128x128xf32>
    %51 = arith.truncf %50 : vector<128x128xf32> to vector<128x128xbf16>
    %c1_44 = arith.constant 1 : index
    %c0_45 = arith.constant 0 : index
    %c0_46 = arith.constant 0 : index
    %c0_47 = arith.constant 0 : index
    %52 = vector.load %arg5[%c1_44, %c0_45, %c0_46, %c0_47] : memref<4x2x128x128xbf16, #tpu.memory_space<vmem>>, vector<1x1x128x128xbf16>
    %53 = vector.shape_cast %52 : vector<1x1x128x128xbf16> to vector<128x128xbf16>
    %cst_48 = arith.constant dense<0.000000e+00> : vector<128x128xf32>
    %54 = tpu.matmul %51, %53, %cst_48 {dimension_numbers = #tpu.dot_dimension_numbers<[1], [0], [0], [1], [0, 0, 1, 1], [], []>} : vector<128x128xbf16>, vector<128x128xbf16>, vector<128x128xf32> -> vector<128x128xf32>
    %c1_49 = arith.constant 1 : index
    %c0_50 = arith.constant 0 : index
    %c0_51 = arith.constant 0 : index
    %c0_52 = arith.constant 0 : index
    %55 = vector.load %arg6[%c1_49, %c0_50, %c0_51, %c0_52] : memref<4x2x1x128xf32, #tpu.memory_space<vmem>>, vector<1x1x1x128xf32>
    %56 = vector.shape_cast %55 : vector<1x1x1x128xf32> to vector<1x128xf32>
    %57 = vector.broadcast %56 : vector<1x128xf32> to vector<128x128xf32>
    %58 = arith.addf %54, %57 : vector<128x128xf32>
    %cst_53 = arith.constant 0.000000e+00 : f32
    %59 = vector.broadcast %cst_53 : f32 to vector<128x128xf32>
    %60 = arith.maximumf %58, %59 : vector<128x128xf32>
    %61 = arith.truncf %60 : vector<128x128xf32> to vector<128x128xbf16>
    %c1_54 = arith.constant 1 : index
    %c1_55 = arith.constant 1 : index
    %c0_56 = arith.constant 0 : index
    %c0_57 = arith.constant 0 : index
    %62 = vector.load %arg5[%c1_54, %c1_55, %c0_56, %c0_57] : memref<4x2x128x128xbf16, #tpu.memory_space<vmem>>, vector<1x1x128x128xbf16>
    %63 = vector.shape_cast %62 : vector<1x1x128x128xbf16> to vector<128x128xbf16>
    %cst_58 = arith.constant dense<0.000000e+00> : vector<128x128xf32>
    %64 = tpu.matmul %61, %63, %cst_58 {dimension_numbers = #tpu.dot_dimension_numbers<[1], [0], [0], [1], [0, 0, 1, 1], [], []>} : vector<128x128xbf16>, vector<128x128xbf16>, vector<128x128xf32> -> vector<128x128xf32>
    %c1_59 = arith.constant 1 : index
    %c1_60 = arith.constant 1 : index
    %c0_61 = arith.constant 0 : index
    %c0_62 = arith.constant 0 : index
    %65 = vector.load %arg6[%c1_59, %c1_60, %c0_61, %c0_62] : memref<4x2x1x128xf32, #tpu.memory_space<vmem>>, vector<1x1x1x128xf32>
    %66 = vector.shape_cast %65 : vector<1x1x1x128xf32> to vector<1x128xf32>
    %67 = vector.broadcast %66 : vector<1x128xf32> to vector<128x128xf32>
    %68 = arith.addf %64, %67 : vector<128x128xf32>
    %cst_63 = arith.constant 0.000000e+00 : f32
    %69 = vector.broadcast %cst_63 : f32 to vector<128x128xf32>
    %70 = arith.maximumf %68, %69 : vector<128x128xf32>
    %71 = arith.truncf %70 : vector<128x128xf32> to vector<128x128xbf16>
    %c1_64 = arith.constant 1 : index
    %c0_65 = arith.constant 0 : index
    %c0_66 = arith.constant 0 : index
    %72 = vector.load %arg7[%c1_64, %c0_65, %c0_66] : memref<4x128x128xbf16, #tpu.memory_space<vmem>>, vector<1x128x128xbf16>
    %73 = vector.shape_cast %72 : vector<1x128x128xbf16> to vector<128x128xbf16>
    %cst_67 = arith.constant dense<0.000000e+00> : vector<128x128xf32>
    %74 = tpu.matmul %71, %73, %cst_67 {dimension_numbers = #tpu.dot_dimension_numbers<[1], [0], [0], [1], [0, 0, 1, 1], [], []>} : vector<128x128xbf16>, vector<128x128xbf16>, vector<128x128xf32> -> vector<128x128xf32>
    %c1_68 = arith.constant 1 : index
    %c0_69 = arith.constant 0 : index
    %c0_70 = arith.constant 0 : index
    %75 = vector.load %arg8[%c1_68, %c0_69, %c0_70] : memref<4x1x128xf32, #tpu.memory_space<vmem>>, vector<1x1x128xf32>
    %76 = vector.shape_cast %75 : vector<1x1x128xf32> to vector<1x128xf32>
    %77 = vector.broadcast %76 : vector<1x128xf32> to vector<128x128xf32>
    %78 = arith.addf %74, %77 : vector<128x128xf32>
    %79 = arith.addf %1, %78 : vector<128x128xf32>
    %80 = arith.truncf %79 : vector<128x128xf32> to vector<128x128xbf16>
    %c2 = arith.constant 2 : index
    %c0_71 = arith.constant 0 : index
    %c0_72 = arith.constant 0 : index
    %81 = vector.load %arg3[%c2, %c0_71, %c0_72] : memref<4x128x128xbf16, #tpu.memory_space<vmem>>, vector<1x128x128xbf16>
    %82 = vector.shape_cast %81 : vector<1x128x128xbf16> to vector<128x128xbf16>
    %cst_73 = arith.constant dense<0.000000e+00> : vector<128x128xf32>
    %83 = tpu.matmul %80, %82, %cst_73 {dimension_numbers = #tpu.dot_dimension_numbers<[1], [0], [0], [1], [0, 0, 1, 1], [], []>} : vector<128x128xbf16>, vector<128x128xbf16>, vector<128x128xf32> -> vector<128x128xf32>
    %c2_74 = arith.constant 2 : index
    %c0_75 = arith.constant 0 : index
    %c0_76 = arith.constant 0 : index
    %84 = vector.load %arg4[%c2_74, %c0_75, %c0_76] : memref<4x1x128xf32, #tpu.memory_space<vmem>>, vector<1x1x128xf32>
    %85 = vector.shape_cast %84 : vector<1x1x128xf32> to vector<1x128xf32>
    %86 = vector.broadcast %85 : vector<1x128xf32> to vector<128x128xf32>
    %87 = arith.addf %83, %86 : vector<128x128xf32>
    %cst_77 = arith.constant 0.000000e+00 : f32
    %88 = vector.broadcast %cst_77 : f32 to vector<128x128xf32>
    %89 = arith.maximumf %87, %88 : vector<128x128xf32>
    %90 = arith.truncf %89 : vector<128x128xf32> to vector<128x128xbf16>
    %c2_78 = arith.constant 2 : index
    %c0_79 = arith.constant 0 : index
    %c0_80 = arith.constant 0 : index
    %c0_81 = arith.constant 0 : index
    %91 = vector.load %arg5[%c2_78, %c0_79, %c0_80, %c0_81] : memref<4x2x128x128xbf16, #tpu.memory_space<vmem>>, vector<1x1x128x128xbf16>
    %92 = vector.shape_cast %91 : vector<1x1x128x128xbf16> to vector<128x128xbf16>
    %cst_82 = arith.constant dense<0.000000e+00> : vector<128x128xf32>
    %93 = tpu.matmul %90, %92, %cst_82 {dimension_numbers = #tpu.dot_dimension_numbers<[1], [0], [0], [1], [0, 0, 1, 1], [], []>} : vector<128x128xbf16>, vector<128x128xbf16>, vector<128x128xf32> -> vector<128x128xf32>
    %c2_83 = arith.constant 2 : index
    %c0_84 = arith.constant 0 : index
    %c0_85 = arith.constant 0 : index
    %c0_86 = arith.constant 0 : index
    %94 = vector.load %arg6[%c2_83, %c0_84, %c0_85, %c0_86] : memref<4x2x1x128xf32, #tpu.memory_space<vmem>>, vector<1x1x1x128xf32>
    %95 = vector.shape_cast %94 : vector<1x1x1x128xf32> to vector<1x128xf32>
    %96 = vector.broadcast %95 : vector<1x128xf32> to vector<128x128xf32>
    %97 = arith.addf %93, %96 : vector<128x128xf32>
    %cst_87 = arith.constant 0.000000e+00 : f32
    %98 = vector.broadcast %cst_87 : f32 to vector<128x128xf32>
    %99 = arith.maximumf %97, %98 : vector<128x128xf32>
    %100 = arith.truncf %99 : vector<128x128xf32> to vector<128x128xbf16>
    %c2_88 = arith.constant 2 : index
    %c1_89 = arith.constant 1 : index
    %c0_90 = arith.constant 0 : index
    %c0_91 = arith.constant 0 : index
    %101 = vector.load %arg5[%c2_88, %c1_89, %c0_90, %c0_91] : memref<4x2x128x128xbf16, #tpu.memory_space<vmem>>, vector<1x1x128x128xbf16>
    %102 = vector.shape_cast %101 : vector<1x1x128x128xbf16> to vector<128x128xbf16>
    %cst_92 = arith.constant dense<0.000000e+00> : vector<128x128xf32>
    %103 = tpu.matmul %100, %102, %cst_92 {dimension_numbers = #tpu.dot_dimension_numbers<[1], [0], [0], [1], [0, 0, 1, 1], [], []>} : vector<128x128xbf16>, vector<128x128xbf16>, vector<128x128xf32> -> vector<128x128xf32>
    %c2_93 = arith.constant 2 : index
    %c1_94 = arith.constant 1 : index
    %c0_95 = arith.constant 0 : index
    %c0_96 = arith.constant 0 : index
    %104 = vector.load %arg6[%c2_93, %c1_94, %c0_95, %c0_96] : memref<4x2x1x128xf32, #tpu.memory_space<vmem>>, vector<1x1x1x128xf32>
    %105 = vector.shape_cast %104 : vector<1x1x1x128xf32> to vector<1x128xf32>
    %106 = vector.broadcast %105 : vector<1x128xf32> to vector<128x128xf32>
    %107 = arith.addf %103, %106 : vector<128x128xf32>
    %cst_97 = arith.constant 0.000000e+00 : f32
    %108 = vector.broadcast %cst_97 : f32 to vector<128x128xf32>
    %109 = arith.maximumf %107, %108 : vector<128x128xf32>
    %110 = arith.truncf %109 : vector<128x128xf32> to vector<128x128xbf16>
    %c2_98 = arith.constant 2 : index
    %c0_99 = arith.constant 0 : index
    %c0_100 = arith.constant 0 : index
    %111 = vector.load %arg7[%c2_98, %c0_99, %c0_100] : memref<4x128x128xbf16, #tpu.memory_space<vmem>>, vector<1x128x128xbf16>
    %112 = vector.shape_cast %111 : vector<1x128x128xbf16> to vector<128x128xbf16>
    %cst_101 = arith.constant dense<0.000000e+00> : vector<128x128xf32>
    %113 = tpu.matmul %110, %112, %cst_101 {dimension_numbers = #tpu.dot_dimension_numbers<[1], [0], [0], [1], [0, 0, 1, 1], [], []>} : vector<128x128xbf16>, vector<128x128xbf16>, vector<128x128xf32> -> vector<128x128xf32>
    %c2_102 = arith.constant 2 : index
    %c0_103 = arith.constant 0 : index
    %c0_104 = arith.constant 0 : index
    %114 = vector.load %arg8[%c2_102, %c0_103, %c0_104] : memref<4x1x128xf32, #tpu.memory_space<vmem>>, vector<1x1x128xf32>
    %115 = vector.shape_cast %114 : vector<1x1x128xf32> to vector<1x128xf32>
    %116 = vector.broadcast %115 : vector<1x128xf32> to vector<128x128xf32>
    %117 = arith.addf %113, %116 : vector<128x128xf32>
    %118 = arith.addf %40, %117 : vector<128x128xf32>
    %119 = arith.truncf %118 : vector<128x128xf32> to vector<128x128xbf16>
    %c3 = arith.constant 3 : index
    %c0_105 = arith.constant 0 : index
    %c0_106 = arith.constant 0 : index
    %120 = vector.load %arg3[%c3, %c0_105, %c0_106] : memref<4x128x128xbf16, #tpu.memory_space<vmem>>, vector<1x128x128xbf16>
    %121 = vector.shape_cast %120 : vector<1x128x128xbf16> to vector<128x128xbf16>
    %cst_107 = arith.constant dense<0.000000e+00> : vector<128x128xf32>
    %122 = tpu.matmul %119, %121, %cst_107 {dimension_numbers = #tpu.dot_dimension_numbers<[1], [0], [0], [1], [0, 0, 1, 1], [], []>} : vector<128x128xbf16>, vector<128x128xbf16>, vector<128x128xf32> -> vector<128x128xf32>
    %c3_108 = arith.constant 3 : index
    %c0_109 = arith.constant 0 : index
    %c0_110 = arith.constant 0 : index
    %123 = vector.load %arg4[%c3_108, %c0_109, %c0_110] : memref<4x1x128xf32, #tpu.memory_space<vmem>>, vector<1x1x128xf32>
    %124 = vector.shape_cast %123 : vector<1x1x128xf32> to vector<1x128xf32>
    %125 = vector.broadcast %124 : vector<1x128xf32> to vector<128x128xf32>
    %126 = arith.addf %122, %125 : vector<128x128xf32>
    %cst_111 = arith.constant 0.000000e+00 : f32
    %127 = vector.broadcast %cst_111 : f32 to vector<128x128xf32>
    %128 = arith.maximumf %126, %127 : vector<128x128xf32>
    %129 = arith.truncf %128 : vector<128x128xf32> to vector<128x128xbf16>
    %c3_112 = arith.constant 3 : index
    %c0_113 = arith.constant 0 : index
    %c0_114 = arith.constant 0 : index
    %c0_115 = arith.constant 0 : index
    %130 = vector.load %arg5[%c3_112, %c0_113, %c0_114, %c0_115] : memref<4x2x128x128xbf16, #tpu.memory_space<vmem>>, vector<1x1x128x128xbf16>
    %131 = vector.shape_cast %130 : vector<1x1x128x128xbf16> to vector<128x128xbf16>
    %cst_116 = arith.constant dense<0.000000e+00> : vector<128x128xf32>
    %132 = tpu.matmul %129, %131, %cst_116 {dimension_numbers = #tpu.dot_dimension_numbers<[1], [0], [0], [1], [0, 0, 1, 1], [], []>} : vector<128x128xbf16>, vector<128x128xbf16>, vector<128x128xf32> -> vector<128x128xf32>
    %c3_117 = arith.constant 3 : index
    %c0_118 = arith.constant 0 : index
    %c0_119 = arith.constant 0 : index
    %c0_120 = arith.constant 0 : index
    %133 = vector.load %arg6[%c3_117, %c0_118, %c0_119, %c0_120] : memref<4x2x1x128xf32, #tpu.memory_space<vmem>>, vector<1x1x1x128xf32>
    %134 = vector.shape_cast %133 : vector<1x1x1x128xf32> to vector<1x128xf32>
    %135 = vector.broadcast %134 : vector<1x128xf32> to vector<128x128xf32>
    %136 = arith.addf %132, %135 : vector<128x128xf32>
    %cst_121 = arith.constant 0.000000e+00 : f32
    %137 = vector.broadcast %cst_121 : f32 to vector<128x128xf32>
    %138 = arith.maximumf %136, %137 : vector<128x128xf32>
    %139 = arith.truncf %138 : vector<128x128xf32> to vector<128x128xbf16>
    %c3_122 = arith.constant 3 : index
    %c1_123 = arith.constant 1 : index
    %c0_124 = arith.constant 0 : index
    %c0_125 = arith.constant 0 : index
    %140 = vector.load %arg5[%c3_122, %c1_123, %c0_124, %c0_125] : memref<4x2x128x128xbf16, #tpu.memory_space<vmem>>, vector<1x1x128x128xbf16>
    %141 = vector.shape_cast %140 : vector<1x1x128x128xbf16> to vector<128x128xbf16>
    %cst_126 = arith.constant dense<0.000000e+00> : vector<128x128xf32>
    %142 = tpu.matmul %139, %141, %cst_126 {dimension_numbers = #tpu.dot_dimension_numbers<[1], [0], [0], [1], [0, 0, 1, 1], [], []>} : vector<128x128xbf16>, vector<128x128xbf16>, vector<128x128xf32> -> vector<128x128xf32>
    %c3_127 = arith.constant 3 : index
    %c1_128 = arith.constant 1 : index
    %c0_129 = arith.constant 0 : index
    %c0_130 = arith.constant 0 : index
    %143 = vector.load %arg6[%c3_127, %c1_128, %c0_129, %c0_130] : memref<4x2x1x128xf32, #tpu.memory_space<vmem>>, vector<1x1x1x128xf32>
    %144 = vector.shape_cast %143 : vector<1x1x1x128xf32> to vector<1x128xf32>
    %145 = vector.broadcast %144 : vector<1x128xf32> to vector<128x128xf32>
    %146 = arith.addf %142, %145 : vector<128x128xf32>
    %cst_131 = arith.constant 0.000000e+00 : f32
    %147 = vector.broadcast %cst_131 : f32 to vector<128x128xf32>
    %148 = arith.maximumf %146, %147 : vector<128x128xf32>
    %149 = arith.truncf %148 : vector<128x128xf32> to vector<128x128xbf16>
    %c3_132 = arith.constant 3 : index
    %c0_133 = arith.constant 0 : index
    %c0_134 = arith.constant 0 : index
    %150 = vector.load %arg7[%c3_132, %c0_133, %c0_134] : memref<4x128x128xbf16, #tpu.memory_space<vmem>>, vector<1x128x128xbf16>
    %151 = vector.shape_cast %150 : vector<1x128x128xbf16> to vector<128x128xbf16>
    %cst_135 = arith.constant dense<0.000000e+00> : vector<128x128xf32>
    %152 = tpu.matmul %149, %151, %cst_135 {dimension_numbers = #tpu.dot_dimension_numbers<[1], [0], [0], [1], [0, 0, 1, 1], [], []>} : vector<128x128xbf16>, vector<128x128xbf16>, vector<128x128xf32> -> vector<128x128xf32>
    %c3_136 = arith.constant 3 : index
    %c0_137 = arith.constant 0 : index
    %c0_138 = arith.constant 0 : index
    %153 = vector.load %arg8[%c3_136, %c0_137, %c0_138] : memref<4x1x128xf32, #tpu.memory_space<vmem>>, vector<1x1x128xf32>
    %154 = vector.shape_cast %153 : vector<1x1x128xf32> to vector<1x128xf32>
    %155 = vector.broadcast %154 : vector<1x128xf32> to vector<128x128xf32>
    %156 = arith.addf %152, %155 : vector<128x128xf32>
    %157 = arith.addf %79, %156 : vector<128x128xf32>
    %c0_139 = arith.constant 0 : index
    %c0_140 = arith.constant 0 : index
    %158 = vector.load %arg9[%c0_139, %c0_140] : memref<1x128xf32, #tpu.memory_space<vmem>>, vector<1x128xf32>
    %159 = vector.broadcast %158 : vector<1x128xf32> to vector<128x128xf32>
    %160 = arith.mulf %118, %159 : vector<128x128xf32>
    %c0_141 = arith.constant 0 : index
    %c0_142 = arith.constant 0 : index
    %161 = vector.load %arg10[%c0_141, %c0_142] : memref<1x128xf32, #tpu.memory_space<vmem>>, vector<1x128xf32>
    %162 = vector.broadcast %161 : vector<1x128xf32> to vector<128x128xf32>
    %163 = arith.mulf %157, %162 : vector<128x128xf32>
    %164 = tpu.iota {dimensions = array<i32: 1>} : vector<1x128xi32>
    %c32_i32 = arith.constant 32 : i32
    %165 = vector.broadcast %c32_i32 : i32 to vector<1x128xi32>
    %166 = arith.cmpi slt, %164, %165 : vector<1x128xi32>
    %167 = arith.extui %166 : vector<1x128xi1> to vector<1x128xi32>
    %168 = arith.sitofp %167 : vector<1x128xi32> to vector<1x128xf32>
    %169 = math.absf %160 : vector<128x128xf32>
    %cst_143 = arith.constant 0.000000e+00 : f32
    %170 = vector.broadcast %cst_143 : f32 to vector<128x128xf32>
    %171 = arith.subf %170, %169 : vector<128x128xf32>
    %172 = math.exp %171 : vector<128x128xf32>
    %173 = math.log1p %172 : vector<128x128xf32>
    %cst_144 = arith.constant 2.000000e+00 : f32
    %174 = vector.broadcast %cst_144 : f32 to vector<128x128xf32>
    %175 = arith.mulf %174, %173 : vector<128x128xf32>
    %176 = arith.addf %169, %175 : vector<128x128xf32>
    %cst_145 = arith.constant 0.000000e+00 : f32
    %177 = vector.broadcast %cst_145 : f32 to vector<128x128xf32>
    %178 = arith.subf %177, %176 : vector<128x128xf32>
    %179 = vector.broadcast %168 : vector<1x128xf32> to vector<128x128xf32>
    %180 = arith.mulf %178, %179 : vector<128x128xf32>
    %cst_146 = arith.constant dense<0.000000e+00> : vector<128xf32>
    %181 = vector.multi_reduction <add>, %180, %cst_146 [1] : vector<128x128xf32> to vector<128xf32>
    %182 = vector.shape_cast %181 : vector<128xf32> to vector<128x1xf32>
    %183 = math.absf %163 : vector<128x128xf32>
    %cst_147 = arith.constant 0.000000e+00 : f32
    %184 = vector.broadcast %cst_147 : f32 to vector<128x128xf32>
    %185 = arith.subf %184, %183 : vector<128x128xf32>
    %186 = math.exp %185 : vector<128x128xf32>
    %187 = math.log1p %186 : vector<128x128xf32>
    %cst_148 = arith.constant 2.000000e+00 : f32
    %188 = vector.broadcast %cst_148 : f32 to vector<128x128xf32>
    %189 = arith.mulf %188, %187 : vector<128x128xf32>
    %190 = arith.addf %183, %189 : vector<128x128xf32>
    %cst_149 = arith.constant 0.000000e+00 : f32
    %191 = vector.broadcast %cst_149 : f32 to vector<128x128xf32>
    %192 = arith.subf %191, %190 : vector<128x128xf32>
    %193 = vector.broadcast %168 : vector<1x128xf32> to vector<128x128xf32>
    %194 = arith.mulf %192, %193 : vector<128x128xf32>
    %cst_150 = arith.constant dense<0.000000e+00> : vector<128xf32>
    %195 = vector.multi_reduction <add>, %194, %cst_150 [1] : vector<128x128xf32> to vector<128xf32>
    %196 = vector.shape_cast %195 : vector<128xf32> to vector<128x1xf32>
    %197 = arith.addf %182, %196 : vector<128x1xf32>
    %198 = vector.shape_cast %197 : vector<128x1xf32> to vector<128x1xf32>
    %199 = vector.broadcast %198 : vector<128x1xf32> to vector<128x128xf32>
    %c0_151 = arith.constant 0 : index
    %c0_152 = arith.constant 0 : index
    %200 = vector.load %arg11[%c0_151, %c0_152] : memref<128x128xf32, #tpu.memory_space<vmem>>, vector<128x128xf32>
    tpu.vector_store %arg11[%c0_151, %c0_152], %199 {strides = array<i32>} : memref<128x128xf32, #tpu.memory_space<vmem>>, vector<128x128xf32>,
    return
  }
  func.func @transform_0(%arg0: i32) -> (i32, i32) {
    %c0_i32 = arith.constant 0 : i32
    %c0_i32_0 = arith.constant 0 : i32
    return %arg0, %c0_i32 : i32, i32
  }
  func.func @transform_1(%arg0: i32) -> (i32, i32) {
    %c0_i32 = arith.constant 0 : i32
    %c0_i32_0 = arith.constant 0 : i32
    return %arg0, %c0_i32 : i32, i32
  }
  func.func @transform_2(%arg0: i32) -> (i32, i32, i32) {
    %c0_i32 = arith.constant 0 : i32
    %c0_i32_0 = arith.constant 0 : i32
    %c0_i32_1 = arith.constant 0 : i32
    %c0_i32_2 = arith.constant 0 : i32
    return %c0_i32, %c0_i32_0, %c0_i32_1 : i32, i32, i32
  }
  func.func @transform_3(%arg0: i32) -> (i32, i32, i32) {
    %c0_i32 = arith.constant 0 : i32
    %c0_i32_0 = arith.constant 0 : i32
    %c0_i32_1 = arith.constant 0 : i32
    %c0_i32_2 = arith.constant 0 : i32
    return %c0_i32, %c0_i32_0, %c0_i32_1 : i32, i32, i32
  }
  func.func @transform_4(%arg0: i32) -> (i32, i32, i32, i32) {
    %c0_i32 = arith.constant 0 : i32
    %c0_i32_0 = arith.constant 0 : i32
    %c0_i32_1 = arith.constant 0 : i32
    %c0_i32_2 = arith.constant 0 : i32
    %c0_i32_3 = arith.constant 0 : i32
    return %c0_i32, %c0_i32_0, %c0_i32_1, %c0_i32_2 : i32, i32, i32, i32
  }
  func.func @transform_5(%arg0: i32) -> (i32, i32, i32, i32) {
    %c0_i32 = arith.constant 0 : i32
    %c0_i32_0 = arith.constant 0 : i32
    %c0_i32_1 = arith.constant 0 : i32
    %c0_i32_2 = arith.constant 0 : i32
    %c0_i32_3 = arith.constant 0 : i32
    return %c0_i32, %c0_i32_0, %c0_i32_1, %c0_i32_2 : i32, i32, i32, i32
  }
  func.func @transform_6(%arg0: i32) -> (i32, i32, i32) {
    %c0_i32 = arith.constant 0 : i32
    %c0_i32_0 = arith.constant 0 : i32
    %c0_i32_1 = arith.constant 0 : i32
    %c0_i32_2 = arith.constant 0 : i32
    return %c0_i32, %c0_i32_0, %c0_i32_1 : i32, i32, i32
  }
  func.func @transform_7(%arg0: i32) -> (i32, i32, i32) {
    %c0_i32 = arith.constant 0 : i32
    %c0_i32_0 = arith.constant 0 : i32
    %c0_i32_1 = arith.constant 0 : i32
    %c0_i32_2 = arith.constant 0 : i32
    return %c0_i32, %c0_i32_0, %c0_i32_1 : i32, i32, i32
  }
  func.func @transform_8(%arg0: i32) -> (i32, i32) {
    %c0_i32 = arith.constant 0 : i32
    %c0_i32_0 = arith.constant 0 : i32
    %c0_i32_1 = arith.constant 0 : i32
    return %c0_i32, %c0_i32_0 : i32, i32
  }
  func.func @transform_9(%arg0: i32) -> (i32, i32) {
    %c0_i32 = arith.constant 0 : i32
    %c0_i32_0 = arith.constant 0 : i32
    %c0_i32_1 = arith.constant 0 : i32
    return %c0_i32, %c0_i32_0 : i32, i32
  }
  func.func @transform_10(%arg0: i32) -> (i32, i32) {
    %c0_i32 = arith.constant 0 : i32
    %c0_i32_0 = arith.constant 0 : i32
    return %arg0, %c0_i32 : i32, i32
  }
}

</mosaic_0001>

<llo_original>
// kernel: tpu_custom_call.1
$region0: #{tpu_custom_call.1}
  #allocation0 [shape = 'u32[]', space=smem, size = 0x4, offset = 0x4, fixed_abs, tag = 'smem constant byte address 0x4 - core index']
  #allocation1 [shape = 'u32[144,128]{1,0:T(1,128)}', space=vmem, size = 0x12000, scoped, tag = 'internal scratch']
  %s0 = inlined_call_operand.hbm [shape: f32[256,128], index: 0, kind: input, shape index: {}]
  %s1 = inlined_call_operand.hbm [shape: f32[256,128], index: 1, kind: input, shape index: {}]
  %s2 = inlined_call_operand.hbm [shape: bf16[4,128,128], index: 2, kind: input, shape index: {}]
  %s3 = inlined_call_operand.hbm [shape: f32[4,1,128], index: 3, kind: input, shape index: {}]
  %s4 = inlined_call_operand.hbm [shape: bf16[4,2,128,128], index: 4, kind: input, shape index: {}]
  %s5 = inlined_call_operand.hbm [shape: f32[4,2,1,128], index: 5, kind: input, shape index: {}]
  %s6 = inlined_call_operand.hbm [shape: bf16[4,128,128], index: 6, kind: input, shape index: {}]
  %s7 = inlined_call_operand.hbm [shape: f32[4,1,128], index: 7, kind: input, shape index: {}]
  %s8 = inlined_call_operand.hbm [shape: f32[1,128], index: 8, kind: input, shape index: {}]
  %s9 = inlined_call_operand.hbm [shape: f32[1,128], index: 9, kind: input, shape index: {}]
  %s10 = inlined_call_operand.hbm [shape: f32[256,128], index: 10, kind: output, shape index: {}]
  %s11 = sld [smem:[#allocation0]]
  $region113: #{tpu_custom_call.1} parent=0
    _
  %s13 = ssub.s32 1, %s11
  %s14 = scalar_select 0, %s13, %s11
  $region1: #{tpu_custom_call.1} parent=0
    #allocation2 [shape = 'u8[131072]{0}', space=vmem, size = 0x20000, scoped, tag = 'input window, operand 0']
    #allocation3 [shape = 's32[2]{0}', space=sflag, size = 0x8, scoped, tag = 'scoped memory for tpu_custom_call.1']
    #allocation4 [shape = 's32[2]{0}', space=sflag, size = 0x8, scoped, tag = 'scoped memory for tpu_custom_call.1']
    #allocation5 [shape = 'u8[131072]{0}', space=vmem, size = 0x20000, scoped, tag = 'input window, operand 1']
    #allocation6 [shape = 's32[2]{0}', space=sflag, size = 0x8, scoped, tag = 'scoped memory for tpu_custom_call.1']
    #allocation7 [shape = 'u8[131072]{0}', space=vmem, size = 0x20000, scoped, tag = 'input window, operand 2, single buffered']
    #allocation8 [shape = 'u8[2048]{0}', space=vmem, size = 0x800, scoped, tag = 'input window, operand 3, single buffered']
    #allocation9 [shape = 's32[1]{0}', space=sflag, size = 0x4, scoped, tag = 'scoped memory for tpu_custom_call.1']
    #allocation10 [shape = 'u8[262144]{0}', space=vmem, size = 0x40000, scoped, tag = 'input window, operand 4, single buffered']
    #allocation11 [shape = 'u8[4096]{0}', space=vmem, size = 0x1000, scoped, tag = 'input window, operand 5, single buffered']
    #allocation12 [shape = 's32[1]{0}', space=sflag, size = 0x4, scoped, tag = 'scoped memory for tpu_custom_call.1']
    #allocation13 [shape = 'u8[131072]{0}', space=vmem, size = 0x20000, scoped, tag = 'input window, operand 6, single buffered']
    #allocation14 [shape = 'u8[2048]{0}', space=vmem, size = 0x800, scoped, tag = 'input window, operand 7, single buffered']
    #allocation15 [shape = 's32[1]{0}', space=sflag, size = 0x4, scoped, tag = 'scoped memory for tpu_custom_call.1']
    #allocation16 [shape = 'u8[512]{0}', space=vmem, size = 0x400, scoped, tag = 'input window, operand 8, single buffered']
    #allocation17 [shape = 'u8[512]{0}', space=vmem, size = 0x400, scoped, tag = 'input window, operand 9, single buffered']
    #allocation18 [shape = 's32[1]{0}', space=sflag, size = 0x4, scoped, tag = 'scoped memory for tpu_custom_call.1']
    #allocation19 [shape = 'u8[131072]{0}', space=vmem, size = 0x20000, scoped, tag = 'output window, operand 0']
    %15 = vsyncpa [#allocation3], 0
    %s16 = scalar_lea.sflag [#allocation3], 1
    %17 = vsyncpa %s16, 0
    %18 = vsyncpa [#allocation6], 0
    %s19 = scalar_lea.sflag [#allocation6], 1
    %20 = vsyncpa %s19, 0
    %21 = vsyncpa [#allocation9], 0
    %22 = vsyncpa [#allocation12], 0
    %23 = vsyncpa [#allocation15], 0
    %24 = vsyncpa [#allocation18], 0
    %25 = vsyncpa [#allocation4], 0
    %s26 = scalar_lea.sflag [#allocation4], 1
    %27 = vsyncpa %s26, 0
    loop: start=0, step=1, limit=4
    $region2: #{tpu_custom_call.1} parent=1 // loop_pre_header
      _
    $region3: #{tpu_custom_call.1} parent=1 // loop_header
      %s29 = sphi 0, %s33
      %p30 = scmp.ge.s32.totalorder %s29, 4
      %s39 = sphi 0, %s41
      %s42 = sphi 0, %s39
      %s43 = sphi 0, %s42
      %s59 = sphi 0, %s43
      %s65 = sphi 0, %s67
      %s68 = sphi 0, %s65
      %s69 = sphi 0, %s68
      %s85 = sphi 0, %s69
      %s89 = sphi 0, %s89
      %s91 = sphi 0, %s89
      %s92 = sphi 0, %s91
      %s106 = sphi 0, %s92
      %s110 = sphi 0, %s110
      %s112 = sphi 0, %s110
      %s113 = sphi 0, %s112
      %s127 = sphi 0, %s113
      %s131 = sphi 0, %s131
      %s133 = sphi 0, %s131
      %s134 = sphi 0, %s133
      %s148 = sphi 0, %s134
      %s152 = sphi 0, %s152
      %s154 = sphi 0, %s152
      %s155 = sphi 0, %s154
      %s169 = sphi 0, %s155
      %s173 = sphi 0, %s173
      %s175 = sphi 0, %s173
      %s176 = sphi 0, %s175
      %s190 = sphi 0, %s176
      %s194 = sphi 0, %s194
      %s196 = sphi 0, %s194
      %s197 = sphi 0, %s196
      %s211 = sphi 0, %s197
      %s215 = sphi 0, %s215
      %s217 = sphi 0, %s215
      %s218 = sphi 0, %s217
      %s232 = sphi 0, %s218
      %s236 = sphi 0, %s236
      %s238 = sphi 0, %s236
      %s239 = sphi 0, %s238
      %s253 = sphi 0, %s239
      %s259 = sphi 0, %s261
      %s262 = sphi 0, %s259
      %s263 = sphi 0, %s262
      %s279 = sphi 0, %s263
    $region4: #{tpu_custom_call.1} parent=1 // loop_header_branch
      %32 = sbr.rel (%p30) target = $region8
    $region5: #{tpu_custom_call.1} parent=1 // loop_body
      %s34 = ssub.s32 %s29, 1
      %s35 = ssub.s32 %s29, 2
      %s36 = sadd.s32 %s29, 1
      %s37 = ssub.s32 %s29, %s36
      %p38 = scmp.eq.s32.totalorder %s37, 0
      %s40 = sadd.s32 %s39, 1
      %s41 = scalar_select %p38, %s39, %s40
      %p44 = pneg %p38
      %p45 = scmp.eq.s32.totalorder %s29, 1
      %p46 = por %p44, %p45
      %p47 = scmp.ne.s32.totalorder %s39, %s42
      %p48 = scmp.eq.s32.totalorder %s29, 0
      %p49 = por %p47, %p48
      %p50 = scmp.ne.s32.totalorder %s39, %s42
      %p51 = scmp.eq.s32.totalorder %s34, 1
      %p52 = por %p50, %p51
      %p53 = scmp.ne.s32.totalorder %s42, %s43
      %p54 = scmp.eq.s32.totalorder %s34, 0
      %p55 = por %p53, %p54
      %p56 = scmp.ne.s32.totalorder %s42, %s43
      %p57 = scmp.eq.s32.totalorder %s35, 1
      %p58 = por %p56, %p57
      %p60 = scmp.ne.s32.totalorder %s43, %s59
      %p61 = scmp.eq.s32.totalorder %s35, 0
      %p62 = por %p60, %p61
      %s63 = ssub.s32 %s29, %s36
      %p64 = scmp.eq.s32.totalorder %s63, 0
      %s66 = sadd.s32 %s65, 1
      %s67 = scalar_select %p64, %s65, %s66
      %p70 = pneg %p64
      %p71 = scmp.eq.s32.totalorder %s29, 1
      %p72 = por %p70, %p71
      %p73 = scmp.ne.s32.totalorder %s65, %s68
      %p74 = scmp.eq.s32.totalorder %s29, 0
      %p75 = por %p73, %p74
      %p76 = scmp.ne.s32.totalorder %s65, %s68
      %p77 = scmp.eq.s32.totalorder %s34, 1
      %p78 = por %p76, %p77
      %p79 = scmp.ne.s32.totalorder %s68, %s69
      %p80 = scmp.eq.s32.totalorder %s34, 0
      %p81 = por %p79, %p80
      %p82 = scmp.ne.s32.totalorder %s68, %s69
      %p83 = scmp.eq.s32.totalorder %s35, 1
      %p84 = por %p82, %p83
      %p86 = scmp.ne.s32.totalorder %s69, %s85
      %p87 = scmp.eq.s32.totalorder %s35, 0
      %p88 = por %p86, %p87
      %s90 = sadd.s32 %s89, 1
      %p93 = scmp.eq.s32.totalorder %s29, 1
      %p94 = scmp.ne.s32.totalorder %s89, %s91
      %p95 = scmp.eq.s32.totalorder %s29, 0
      %p96 = por %p94, %p95
      %p97 = scmp.ne.s32.totalorder %s89, %s91
      %p98 = scmp.eq.s32.totalorder %s34, 1
      %p99 = por %p97, %p98
      %p100 = scmp.ne.s32.totalorder %s91, %s92
      %p101 = scmp.eq.s32.totalorder %s34, 0
      %p102 = por %p100, %p101
      %p103 = scmp.ne.s32.totalorder %s91, %s92
      %p104 = scmp.eq.s32.totalorder %s35, 1
      %p105 = por %p103, %p104
      %p107 = scmp.ne.s32.totalorder %s92, %s106
      %p108 = scmp.eq.s32.totalorder %s35, 0
      %p109 = por %p107, %p108
      %s111 = sadd.s32 %s110, 1
      %p114 = scmp.eq.s32.totalorder %s29, 1
      %p115 = scmp.ne.s32.totalorder %s110, %s112
      %p116 = scmp.eq.s32.totalorder %s29, 0
      %p117 = por %p115, %p116
      %p118 = scmp.ne.s32.totalorder %s110, %s112
      %p119 = scmp.eq.s32.totalorder %s34, 1
      %p120 = por %p118, %p119
      %p121 = scmp.ne.s32.totalorder %s112, %s113
      %p122 = scmp.eq.s32.totalorder %s34, 0
      %p123 = por %p121, %p122
      %p124 = scmp.ne.s32.totalorder %s112, %s113
      %p125 = scmp.eq.s32.totalorder %s35, 1
      %p126 = por %p124, %p125
      %p128 = scmp.ne.s32.totalorder %s113, %s127
      %p129 = scmp.eq.s32.totalorder %s35, 0
      %p130 = por %p128, %p129
      %s132 = sadd.s32 %s131, 1
      %p135 = scmp.eq.s32.totalorder %s29, 1
      %p136 = scmp.ne.s32.totalorder %s131, %s133
      %p137 = scmp.eq.s32.totalorder %s29, 0
      %p138 = por %p136, %p137
      %p139 = scmp.ne.s32.totalorder %s131, %s133
      %p140 = scmp.eq.s32.totalorder %s34, 1
      %p141 = por %p139, %p140
      %p142 = scmp.ne.s32.totalorder %s133, %s134
      %p143 = scmp.eq.s32.totalorder %s34, 0
      %p144 = por %p142, %p143
      %p145 = scmp.ne.s32.totalorder %s133, %s134
      %p146 = scmp.eq.s32.totalorder %s35, 1
      %p147 = por %p145, %p146
      %p149 = scmp.ne.s32.totalorder %s134, %s148
      %p150 = scmp.eq.s32.totalorder %s35, 0
      %p151 = por %p149, %p150
      %s153 = sadd.s32 %s152, 1
      %p156 = scmp.eq.s32.totalorder %s29, 1
      %p157 = scmp.ne.s32.totalorder %s152, %s154
      %p158 = scmp.eq.s32.totalorder %s29, 0
      %p159 = por %p157, %p158
      %p160 = scmp.ne.s32.totalorder %s152, %s154
      %p161 = scmp.eq.s32.totalorder %s34, 1
      %p162 = por %p160, %p161
      %p163 = scmp.ne.s32.totalorder %s154, %s155
      %p164 = scmp.eq.s32.totalorder %s34, 0
      %p165 = por %p163, %p164
      %p166 = scmp.ne.s32.totalorder %s154, %s155
      %p167 = scmp.eq.s32.totalorder %s35, 1
      %p168 = por %p166, %p167
      %p170 = scmp.ne.s32.totalorder %s155, %s169
      %p171 = scmp.eq.s32.totalorder %s35, 0
      %p172 = por %p170, %p171
      %s174 = sadd.s32 %s173, 1
      %p177 = scmp.eq.s32.totalorder %s29, 1
      %p178 = scmp.ne.s32.totalorder %s173, %s175
      %p179 = scmp.eq.s32.totalorder %s29, 0
      %p180 = por %p178, %p179
      %p181 = scmp.ne.s32.totalorder %s173, %s175
      %p182 = scmp.eq.s32.totalorder %s34, 1
      %p183 = por %p181, %p182
      %p184 = scmp.ne.s32.totalorder %s175, %s176
      %p185 = scmp.eq.s32.totalorder %s34, 0
      %p186 = por %p184, %p185
      %p187 = scmp.ne.s32.totalorder %s175, %s176
      %p188 = scmp.eq.s32.totalorder %s35, 1
      %p189 = por %p187, %p188
      %p191 = scmp.ne.s32.totalorder %s176, %s190
      %p192 = scmp.eq.s32.totalorder %s35, 0
      %p193 = por %p191, %p192
      %s195 = sadd.s32 %s194, 1
      %p198 = scmp.eq.s32.totalorder %s29, 1
      %p199 = scmp.ne.s32.totalorder %s194, %s196
      %p200 = scmp.eq.s32.totalorder %s29, 0
      %p201 = por %p199, %p200
      %p202 = scmp.ne.s32.totalorder %s194, %s196
      %p203 = scmp.eq.s32.totalorder %s34, 1
      %p204 = por %p202, %p203
      %p205 = scmp.ne.s32.totalorder %s196, %s197
      %p206 = scmp.eq.s32.totalorder %s34, 0
      %p207 = por %p205, %p206
      %p208 = scmp.ne.s32.totalorder %s196, %s197
      %p209 = scmp.eq.s32.totalorder %s35, 1
      %p210 = por %p208, %p209
      %p212 = scmp.ne.s32.totalorder %s197, %s211
      %p213 = scmp.eq.s32.totalorder %s35, 0
      %p214 = por %p212, %p213
      %s216 = sadd.s32 %s215, 1
      %p219 = scmp.eq.s32.totalorder %s29, 1
      %p220 = scmp.ne.s32.totalorder %s215, %s217
      %p221 = scmp.eq.s32.totalorder %s29, 0
      %p222 = por %p220, %p221
      %p223 = scmp.ne.s32.totalorder %s215, %s217
      %p224 = scmp.eq.s32.totalorder %s34, 1
      %p225 = por %p223, %p224
      %p226 = scmp.ne.s32.totalorder %s217, %s218
      %p227 = scmp.eq.s32.totalorder %s34, 0
      %p228 = por %p226, %p227
      %p229 = scmp.ne.s32.totalorder %s217, %s218
      %p230 = scmp.eq.s32.totalorder %s35, 1
      %p231 = por %p229, %p230
      %p233 = scmp.ne.s32.totalorder %s218, %s232
      %p234 = scmp.eq.s32.totalorder %s35, 0
      %p235 = por %p233, %p234
      %s237 = sadd.s32 %s236, 1
      %p240 = scmp.eq.s32.totalorder %s29, 1
      %p241 = scmp.ne.s32.totalorder %s236, %s238
      %p242 = scmp.eq.s32.totalorder %s29, 0
      %p243 = por %p241, %p242
      %p244 = scmp.ne.s32.totalorder %s236, %s238
      %p245 = scmp.eq.s32.totalorder %s34, 1
      %p246 = por %p244, %p245
      %p247 = scmp.ne.s32.totalorder %s238, %s239
      %p248 = scmp.eq.s32.totalorder %s34, 0
      %p249 = por %p247, %p248
      %p250 = scmp.ne.s32.totalorder %s238, %s239
      %p251 = scmp.eq.s32.totalorder %s35, 1
      %p252 = por %p250, %p251
      %p254 = scmp.ne.s32.totalorder %s239, %s253
      %p255 = scmp.eq.s32.totalorder %s35, 0
      %p256 = por %p254, %p255
      %s257 = ssub.s32 %s29, %s36
      %p258 = scmp.eq.s32.totalorder %s257, 0
      %s260 = sadd.s32 %s259, 1
      %s261 = scalar_select %p258, %s259, %s260
      %p264 = pneg %p258
      %p265 = scmp.eq.s32.totalorder %s29, 1
      %p266 = por %p264, %p265
      %p267 = scmp.ne.s32.totalorder %s259, %s262
      %p268 = scmp.eq.s32.totalorder %s29, 0
      %p269 = por %p267, %p268
      %p270 = scmp.ne.s32.totalorder %s259, %s262
      %p271 = scmp.eq.s32.totalorder %s34, 1
      %p272 = por %p270, %p271
      %p273 = scmp.ne.s32.totalorder %s262, %s263
      %p274 = scmp.eq.s32.totalorder %s34, 0
      %p275 = por %p273, %p274
      %p276 = scmp.ne.s32.totalorder %s262, %s263
      %p277 = scmp.eq.s32.totalorder %s35, 1
      %p278 = por %p276, %p277
      %p280 = scmp.ne.s32.totalorder %s263, %s279
      %p281 = scmp.eq.s32.totalorder %s35, 0
      %p282 = por %p280, %p281
      %p283 = scmp.le.s32.totalorder 1, %s29
      %p284 = scmp.lt.s32.totalorder %s29, 3
      %p285 = pnand %p283, %p284
      %p286 = pneg %p285
      // Predicated region
      $region9: #{tpu_custom_call.1} parent=5 // pred_check
        _
      $region10: #{tpu_custom_call.1} parent=5 // pred_check_branch
        %288 = sbr.rel (%p285) target = $region12
      $region11: #{tpu_custom_call.1} parent=5 // pred_region
        %s289 = ssub.s32 %s29, 1
        // Predicated region
        $region13: #{tpu_custom_call.1} parent=11 // pred_check
          %p290 = pneg %p102
        $region14: #{tpu_custom_call.1} parent=11 // pred_check_branch
          %292 = sbr.rel (%p290) target = $region16
        $region15: #{tpu_custom_call.1} parent=11 // pred_region
          %s294 = ssub.s32 4096, 4096
          %295 = vsyncadd [#allocation6], %s294
          %s296 = sshll.u32 [#allocation7], 4
          %s297 = int_to_ptr.vmem [resolvable:$true] %s296
          %302 = dma.hbm_to_vmem [thread:$0]  %s2, 4096, %s297, [#allocation6], 64, 64, 4
        $region16: #{tpu_custom_call.1} parent=11 // pred_fallthru
          _
        // Predicated region
        $region17: #{tpu_custom_call.1} parent=11 // pred_check
          %p303 = pneg %p123
        $region18: #{tpu_custom_call.1} parent=11 // pred_check_branch
          %305 = sbr.rel (%p303) target = $region20
        $region19: #{tpu_custom_call.1} parent=11 // pred_region
          %s307 = ssub.s32 64, 64
          %308 = vsyncadd [#allocation9], %s307
          %s309 = sshll.u32 [#allocation8], 4
          %s310 = int_to_ptr.vmem [resolvable:$true] %s309
          %315 = dma.hbm_to_vmem [thread:$0]  %s3, 64, %s310, [#allocation9], 16, 16, 1
        $region20: #{tpu_custom_call.1} parent=11 // pred_fallthru
          _
        // Predicated region
        $region21: #{tpu_custom_call.1} parent=11 // pred_check
          %p316 = pneg %p144
        $region22: #{tpu_custom_call.1} parent=11 // pred_check_branch
          %318 = sbr.rel (%p316) target = $region24
        $region23: #{tpu_custom_call.1} parent=11 // pred_region
          %s320 = ssub.s32 8192, 8192
          %321 = vsyncadd [#allocation9], %s320
          %s322 = sshll.u32 [#allocation10], 4
          %s323 = int_to_ptr.vmem [resolvable:$true] %s322
          %328 = dma.hbm_to_vmem [thread:$0]  %s4, 8192, %s323, [#allocation9], 64, 64, 4
        $region24: #{tpu_custom_call.1} parent=11 // pred_fallthru
          _
        // Predicated region
        $region25: #{tpu_custom_call.1} parent=11 // pred_check
          %p329 = pneg %p165
        $region26: #{tpu_custom_call.1} parent=11 // pred_check_branch
          %331 = sbr.rel (%p329) target = $region28
        $region27: #{tpu_custom_call.1} parent=11 // pred_region
          %s333 = ssub.s32 128, 128
          %334 = vsyncadd [#allocation12], %s333
          %s335 = sshll.u32 [#allocation11], 4
          %s336 = int_to_ptr.vmem [resolvable:$true] %s335
          %341 = dma.hbm_to_vmem [thread:$0]  %s5, 128, %s336, [#allocation12], 16, 16, 1
        $region28: #{tpu_custom_call.1} parent=11 // pred_fallthru
          _
        // Predicated region
        $region29: #{tpu_custom_call.1} parent=11 // pred_check
          %p342 = pneg %p186
        $region30: #{tpu_custom_call.1} parent=11 // pred_check_branch
          %344 = sbr.rel (%p342) target = $region32
        $region31: #{tpu_custom_call.1} parent=11 // pred_region
          %s346 = ssub.s32 4096, 4096
          %347 = vsyncadd [#allocation12], %s346
          %s348 = sshll.u32 [#allocation13], 4
          %s349 = int_to_ptr.vmem [resolvable:$true] %s348
          %354 = dma.hbm_to_vmem [thread:$0]  %s6, 4096, %s349, [#allocation12], 64, 64, 4
        $region32: #{tpu_custom_call.1} parent=11 // pred_fallthru
          _
        // Predicated region
        $region33: #{tpu_custom_call.1} parent=11 // pred_check
          %p355 = pneg %p207
        $region34: #{tpu_custom_call.1} parent=11 // pred_check_branch
          %357 = sbr.rel (%p355) target = $region36
        $region35: #{tpu_custom_call.1} parent=11 // pred_region
          %s359 = ssub.s32 64, 64
          %360 = vsyncadd [#allocation15], %s359
          %s361 = sshll.u32 [#allocation14], 4
          %s362 = int_to_ptr.vmem [resolvable:$true] %s361
          %367 = dma.hbm_to_vmem [thread:$0]  %s7, 64, %s362, [#allocation15], 16, 16, 1
        $region36: #{tpu_custom_call.1} parent=11 // pred_fallthru
          _
        // Predicated region
        $region37: #{tpu_custom_call.1} parent=11 // pred_check
          %p368 = pneg %p228
        $region38: #{tpu_custom_call.1} parent=11 // pred_check_branch
          %370 = sbr.rel (%p368) target = $region40
        $region39: #{tpu_custom_call.1} parent=11 // pred_region
          %s372 = ssub.s32 16, 16
          %373 = vsyncadd [#allocation15], %s372
          %s375 = sshll.u32 [#allocation16], 4
          %s376 = int_to_ptr.vmem [resolvable:$true] %s375
          %378 = dma.hbm_to_vmem [thread:$0]  %s8, 16, %s376, [#allocation15]
        $region40: #{tpu_custom_call.1} parent=11 // pred_fallthru
          _
        // Predicated region
        $region41: #{tpu_custom_call.1} parent=11 // pred_check
          %p379 = pneg %p249
        $region42: #{tpu_custom_call.1} parent=11 // pred_check_branch
          %381 = sbr.rel (%p379) target = $region44
        $region43: #{tpu_custom_call.1} parent=11 // pred_region
          %s383 = ssub.s32 16, 16
          %384 = vsyncadd [#allocation18], %s383
          %s386 = sshll.u32 [#allocation17], 4
          %s387 = int_to_ptr.vmem [resolvable:$true] %s386
          %389 = dma.hbm_to_vmem [thread:$0]  %s9, 16, %s387, [#allocation18]
        $region44: #{tpu_custom_call.1} parent=11 // pred_fallthru
          _
      $region12: #{tpu_custom_call.1} parent=5 // pred_fallthru
        _
      %p390 = scmp.lt.s32.totalorder %s29, 2
      // Predicated region
      $region45: #{tpu_custom_call.1} parent=5 // pred_check
        %p391 = pneg %p390
      $region46: #{tpu_custom_call.1} parent=5 // pred_check_branch
        %393 = sbr.rel (%p391) target = $region48
      $region47: #{tpu_custom_call.1} parent=5 // pred_region
        // Predicated region
        $region49: #{tpu_custom_call.1} parent=47 // pred_check
          %p394 = pneg %p49
        $region50: #{tpu_custom_call.1} parent=47 // pred_check_branch
          %396 = sbr.rel (%p394) target = $region52
        $region51: #{tpu_custom_call.1} parent=47 // pred_region
          %s397 = sand.u32 %s39, 1
          %s398 = scalar_lea.sflag [#allocation3], %s397
          %s399 = sand.u32 %s39, 1
          %s400 = smul.addr %s399, 128
          %s401 = scalar_lea.vmem [#allocation2], %s400
          %s402 = smul.u32 16, %s29
          %s404 = ssub.s32 2048, 2048
          %405 = vsyncadd %s398, %s404
          %s406 = smul.addr %s402, 128
          %s407 = scalar_lea.hbm %s0, %s406
          %s408 = sshll.u32 %s401, 4
          %s409 = int_to_ptr.vmem [resolvable:$true] %s408
          %414 = dma.hbm_to_vmem [thread:$0]  %s407, 2048, %s409, %s398, 128, 128, 8
        $region52: #{tpu_custom_call.1} parent=47 // pred_fallthru
          _
        // Predicated region
        $region53: #{tpu_custom_call.1} parent=47 // pred_check
          %p415 = pneg %p75
        $region54: #{tpu_custom_call.1} parent=47 // pred_check_branch
          %417 = sbr.rel (%p415) target = $region56
        $region55: #{tpu_custom_call.1} parent=47 // pred_region
          %s418 = sand.u32 %s29, 1
          %s419 = scalar_lea.sflag [#allocation6], %s418
          %s420 = sand.u32 %s65, 1
          %s421 = smul.addr %s420, 128
          %s422 = scalar_lea.vmem [#allocation5], %s421
          %s423 = smul.u32 16, %s29
          %s425 = ssub.s32 2048, 2048
          %426 = vsyncadd %s419, %s425
          %s427 = smul.addr %s423, 128
          %s428 = scalar_lea.hbm %s1, %s427
          %s429 = sshll.u32 %s422, 4
          %s430 = int_to_ptr.vmem [resolvable:$true] %s429
          %435 = dma.hbm_to_vmem [thread:$0]  %s428, 2048, %s430, %s419, 128, 128, 8
        $region56: #{tpu_custom_call.1} parent=47 // pred_fallthru
          _
      $region48: #{tpu_custom_call.1} parent=5 // pred_fallthru
        _
      %p436 = scmp.le.s32.totalorder 1, %s29
      %p437 = scmp.lt.s32.totalorder %s29, 3
      %p438 = pnand %p436, %p437
      %p439 = pneg %p438
      // Predicated region
      $region57: #{tpu_custom_call.1} parent=5 // pred_check
        _
      $region58: #{tpu_custom_call.1} parent=5 // pred_check_branch
        %441 = sbr.rel (%p438) target = $region60
      $region59: #{tpu_custom_call.1} parent=5 // pred_region
        %s442 = ssub.s32 %s29, 1
        %s443 = sand.u32 %s42, 1
        %s444 = scalar_lea.sflag [#allocation3], %s443
        %s445 = sand.u32 %s42, 1
        %s446 = smul.addr %s445, 128
        %s447 = scalar_lea.vmem [#allocation2], %s446
        // Predicated region
        $region61: #{tpu_custom_call.1} parent=59 // pred_check
          %p448 = pneg %p55
        $region62: #{tpu_custom_call.1} parent=59 // pred_check_branch
          %450 = sbr.rel (%p448) target = $region64
        $region63: #{tpu_custom_call.1} parent=59 // pred_region
          %451 = dma.done %s444, 2048
        $region64: #{tpu_custom_call.1} parent=59 // pred_fallthru
          _
        %s452 = sand.u32 %s34, 1
        %s453 = scalar_lea.sflag [#allocation6], %s452
        %s454 = sand.u32 %s68, 1
        %s455 = smul.addr %s454, 128
        %s456 = scalar_lea.vmem [#allocation5], %s455
        // Predicated region
        $region65: #{tpu_custom_call.1} parent=59 // pred_check
          %p457 = pneg %p81
        $region66: #{tpu_custom_call.1} parent=59 // pred_check_branch
          %459 = sbr.rel (%p457) target = $region68
        $region67: #{tpu_custom_call.1} parent=59 // pred_region
          %460 = dma.done %s453, 2048
        $region68: #{tpu_custom_call.1} parent=59 // pred_fallthru
          _
        // Predicated region
        $region69: #{tpu_custom_call.1} parent=59 // pred_check
          %p461 = pneg %p102
        $region70: #{tpu_custom_call.1} parent=59 // pred_check_branch
          %463 = sbr.rel (%p461) target = $region72
        $region71: #{tpu_custom_call.1} parent=59 // pred_region
          %464 = dma.done [#allocation6], 4096
        $region72: #{tpu_custom_call.1} parent=59 // pred_fallthru
          _
        // Predicated region
        $region73: #{tpu_custom_call.1} parent=59 // pred_check
          %p465 = pneg %p123
        $region74: #{tpu_custom_call.1} parent=59 // pred_check_branch
          %467 = sbr.rel (%p465) target = $region76
        $region75: #{tpu_custom_call.1} parent=59 // pred_region
          %468 = dma.done [#allocation9], 64
        $region76: #{tpu_custom_call.1} parent=59 // pred_fallthru
          _
        // Predicated region
        $region77: #{tpu_custom_call.1} parent=59 // pred_check
          %p469 = pneg %p144
        $region78: #{tpu_custom_call.1} parent=59 // pred_check_branch
          %471 = sbr.rel (%p469) target = $region80
        $region79: #{tpu_custom_call.1} parent=59 // pred_region
          %472 = dma.done [#allocation9], 8192
        $region80: #{tpu_custom_call.1} parent=59 // pred_fallthru
          _
        // Predicated region
        $region81: #{tpu_custom_call.1} parent=59 // pred_check
          %p473 = pneg %p165
        $region82: #{tpu_custom_call.1} parent=59 // pred_check_branch
          %475 = sbr.rel (%p473) target = $region84
        $region83: #{tpu_custom_call.1} parent=59 // pred_region
          %476 = dma.done [#allocation12], 128
        $region84: #{tpu_custom_call.1} parent=59 // pred_fallthru
          _
        // Predicated region
        $region85: #{tpu_custom_call.1} parent=59 // pred_check
          %p477 = pneg %p186
        $region86: #{tpu_custom_call.1} parent=59 // pred_check_branch
          %479 = sbr.rel (%p477) target = $region88
        $region87: #{tpu_custom_call.1} parent=59 // pred_region
          %480 = dma.done [#allocation12], 4096
        $region88: #{tpu_custom_call.1} parent=59 // pred_fallthru
          _
        // Predicated region
        $region89: #{tpu_custom_call.1} parent=59 // pred_check
          %p481 = pneg %p207
        $region90: #{tpu_custom_call.1} parent=59 // pred_check_branch
          %483 = sbr.rel (%p481) target = $region92
        $region91: #{tpu_custom_call.1} parent=59 // pred_region
          %484 = dma.done [#allocation15], 64
        $region92: #{tpu_custom_call.1} parent=59 // pred_fallthru
          _
        // Predicated region
        $region93: #{tpu_custom_call.1} parent=59 // pred_check
          %p485 = pneg %p228
        $region94: #{tpu_custom_call.1} parent=59 // pred_check_branch
          %487 = sbr.rel (%p485) target = $region96
        $region95: #{tpu_custom_call.1} parent=59 // pred_region
          %488 = dma.done [#allocation15], 16
        $region96: #{tpu_custom_call.1} parent=59 // pred_fallthru
          _
        // Predicated region
        $region97: #{tpu_custom_call.1} parent=59 // pred_check
          %p489 = pneg %p249
        $region98: #{tpu_custom_call.1} parent=59 // pred_check_branch
          %491 = sbr.rel (%p489) target = $region100
        $region99: #{tpu_custom_call.1} parent=59 // pred_region
          %492 = dma.done [#allocation18], 16
        $region100: #{tpu_custom_call.1} parent=59 // pred_fallthru
          _
        %s493 = sand.u32 %s42, 1
        %s494 = scalar_lea.sflag [#allocation3], %s493
        %s495 = sand.u32 %s42, 1
        %s496 = smul.addr %s495, 128
        %s497 = scalar_lea.vmem [#allocation2], %s496
        %p498 = pneg %p55
        %p499 = pneg %p52
        %s500 = sand.u32 %s34, 1
        %s501 = scalar_lea.sflag [#allocation6], %s500
        %s502 = sand.u32 %s68, 1
        %s503 = smul.addr %s502, 128
        %s504 = scalar_lea.vmem [#allocation5], %s503
        %p505 = pneg %p81
        %p506 = pneg %p78
        %p507 = pneg %p102
        %p508 = pneg %p99
        %p509 = pneg %p123
        %p510 = pneg %p120
        %p511 = pneg %p144
        %p512 = pneg %p141
        %p513 = pneg %p165
        %p514 = pneg %p162
        %p515 = pneg %p186
        %p516 = pneg %p183
        %p517 = pneg %p207
        %p518 = pneg %p204
        %p519 = pneg %p228
        %p520 = pneg %p225
        %p521 = pneg %p249
        %p522 = pneg %p246
        %p523 = pneg %p275
        %p524 = pneg %p272
        %s525 = sand.u32 %s262, 1
        %s526 = scalar_lea.sflag [#allocation4], %s525
        %s527 = sand.u32 %s262, 1
        %s528 = smul.addr %s527, 128
        %s529 = scalar_lea.vmem [#allocation19], %s528
        %s530 = smul.u32 16, %s34
        %s531 = smul.u32 16, %s34
        %s532 = smul.u32 16, %s34
        %v534 = vld [vmem:[%s447] sm:$0xff]
        %v535 = vld [vmem:[%s447 + $0x8] sm:$0xff]
        %v536 = vld [vmem:[%s447 + $0x10] sm:$0xff]
        %v537 = vld [vmem:[%s447 + $0x18] sm:$0xff]
        %v538 = vld [vmem:[%s447 + $0x20] sm:$0xff]
        %v539 = vld [vmem:[%s447 + $0x28] sm:$0xff]
        %v540 = vld [vmem:[%s447 + $0x30] sm:$0xff]
        %v541 = vld [vmem:[%s447 + $0x38] sm:$0xff]
        %v542 = vld [vmem:[%s447 + $0x40] sm:$0xff]
        %v543 = vld [vmem:[%s447 + $0x48] sm:$0xff]
        %v544 = vld [vmem:[%s447 + $0x50] sm:$0xff]
        %v545 = vld [vmem:[%s447 + $0x58] sm:$0xff]
        %v546 = vld [vmem:[%s447 + $0x60] sm:$0xff]
        %v547 = vld [vmem:[%s447 + $0x68] sm:$0xff]
        %v548 = vld [vmem:[%s447 + $0x70] sm:$0xff]
        %v549 = vld [vmem:[%s447 + $0x78] sm:$0xff]
        %v550 = vld [vmem:[%s456] sm:$0xff]
        %v551 = vld [vmem:[%s456 + $0x8] sm:$0xff]
        %v552 = vld [vmem:[%s456 + $0x10] sm:$0xff]
        %v553 = vld [vmem:[%s456 + $0x18] sm:$0xff]
        %v554 = vld [vmem:[%s456 + $0x20] sm:$0xff]
        %v555 = vld [vmem:[%s456 + $0x28] sm:$0xff]
        %v556 = vld [vmem:[%s456 + $0x30] sm:$0xff]
        %v557 = vld [vmem:[%s456 + $0x38] sm:$0xff]
        %v558 = vld [vmem:[%s456 + $0x40] sm:$0xff]
        %v559 = vld [vmem:[%s456 + $0x48] sm:$0xff]
        %v560 = vld [vmem:[%s456 + $0x50] sm:$0xff]
        %v561 = vld [vmem:[%s456 + $0x58] sm:$0xff]
        %v562 = vld [vmem:[%s456 + $0x60] sm:$0xff]
        %v563 = vld [vmem:[%s456 + $0x68] sm:$0xff]
        %v564 = vld [vmem:[%s456 + $0x70] sm:$0xff]
        %v565 = vld [vmem:[%s456 + $0x78] sm:$0xff]
        %v566 = vpack.c.bf16 %v551, %v550
        %v567 = vpack.c.bf16 %v553, %v552
        %v568 = vpack.c.bf16 %v555, %v554
        %v569 = vpack.c.bf16 %v557, %v556
        %v570 = vpack.c.bf16 %v559, %v558
        %v571 = vpack.c.bf16 %v561, %v560
        %v572 = vpack.c.bf16 %v563, %v562
        %v573 = vpack.c.bf16 %v565, %v564
        %v574 = vld [vmem:[#allocation7] sm:$0xf]
        %v575 = vld [vmem:[#allocation7 + $0x4] sm:$0xf]
        %v576 = vld [vmem:[#allocation7 + $0x8] sm:$0xf]
        %v577 = vld [vmem:[#allocation7 + $0xc] sm:$0xf]
        %v578 = vld [vmem:[#allocation7 + $0x10] sm:$0xf]
        %v579 = vld [vmem:[#allocation7 + $0x14] sm:$0xf]
        %v580 = vld [vmem:[#allocation7 + $0x18] sm:$0xf]
        %v581 = vld [vmem:[#allocation7 + $0x1c] sm:$0xf]
        %v582 = vld [vmem:[#allocation7 + $0x20] sm:$0xf]
        %v583 = vld [vmem:[#allocation7 + $0x24] sm:$0xf]
        %v584 = vld [vmem:[#allocation7 + $0x28] sm:$0xf]
        %v585 = vld [vmem:[#allocation7 + $0x2c] sm:$0xf]
        %v586 = vld [vmem:[#allocation7 + $0x30] sm:$0xf]
        %v587 = vld [vmem:[#allocation7 + $0x34] sm:$0xf]
        %v588 = vld [vmem:[#allocation7 + $0x38] sm:$0xf]
        %v589 = vld [vmem:[#allocation7 + $0x3c] sm:$0xf]
        %v590 = vld [vmem:[#allocation8] sm:$0x1]
        %v592 = vlaneseq
        %v593 = vshrl.u32 %v592, 7
        %v594 = vsub.s32 0, %v593
        %v595 = vrot.slane %v590, %v594
        %v613 = vunpack.c.l.b16 %v574
        %v614 = vunpack.c.l.b16 %v575
        %v615 = vunpack.c.l.b16 %v576
        %v616 = vunpack.c.l.b16 %v577
        %v617 = vunpack.c.l.b16 %v578
        %v618 = vunpack.c.l.b16 %v579
        %v619 = vunpack.c.l.b16 %v580
        %v620 = vunpack.c.l.b16 %v581
        %v621 = vunpack.c.l.b16 %v582
        %v622 = vunpack.c.l.b16 %v583
        %v623 = vunpack.c.l.b16 %v584
        %v624 = vunpack.c.l.b16 %v585
        %v625 = vunpack.c.l.b16 %v586
        %v626 = vunpack.c.l.b16 %v587
        %v627 = vunpack.c.l.b16 %v588
        %v628 = vunpack.c.l.b16 %v589
        %v629 = vpack.c.b16 %v614, %v613
        %v630 = vpack.c.b16 %v616, %v615
        %v631 = vpack.c.b16 %v618, %v617
        %v632 = vpack.c.b16 %v620, %v619
        %v633 = vpack.c.b16 %v622, %v621
        %v634 = vpack.c.b16 %v624, %v623
        %v635 = vpack.c.b16 %v626, %v625
        %v636 = vpack.c.b16 %v628, %v627
        %645 = vmatprep.subr.bf16.mxu0 0
        %646 = vmatpush1.bf16.msra.mxu0 %v629
        %647 = vmatprep.subr.bf16.mxu0 0
        %648 = vmatpush1.bf16.msra.mxu0 %v630
        %649 = vmatprep.subr.bf16.mxu0 0
        %650 = vmatpush1.bf16.msra.mxu0 %v631
        %651 = vmatprep.subr.bf16.mxu0 0
        %652 = vmatpush1.bf16.msra.mxu0 %v632
        %653 = vmatprep.subr.bf16.mxu0 0
        %654 = vmatpush1.bf16.msra.mxu0 %v633
        %655 = vmatprep.subr.bf16.mxu0 0
        %656 = vmatpush1.bf16.msra.mxu0 %v634
        %657 = vmatprep.subr.bf16.mxu0 0
        %658 = vmatpush1.bf16.msra.mxu0 %v635
        %659 = vmatprep.subr.bf16.mxu0 0
        %660 = vmatpush1.bf16.msra.mxu0 %v636
        %661 = vmatprep.subr.bf16.mxu0 0
        %662 = vmatpush1.bf16.msra.mxu0 0
        %663 = vmatprep.subr.bf16.mxu0 0
        %664 = vmatpush1.bf16.msra.mxu0 0
        %665 = vmatprep.subr.bf16.mxu0 0
        %666 = vmatpush1.bf16.msra.mxu0 0
        %667 = vmatprep.subr.bf16.mxu0 0
        %668 = vmatpush1.bf16.msra.mxu0 0
        %669 = vmatprep.subr.bf16.mxu0 0
        %670 = vmatpush1.bf16.msra.mxu0 0
        %671 = vmatprep.subr.bf16.mxu0 0
        %672 = vmatpush1.bf16.msra.mxu0 0
        %673 = vmatprep.subr.bf16.mxu0 0
        %674 = vmatpush1.bf16.msra.mxu0 0
        %675 = vmatprep.subr.bf16.mxu0 0
        %676 = vmatpush1.bf16.msra.mxu0 0
        %677 = vmatprep.mubr.bf16.mxu0 0
        %678 = vmatmul.mubr.bf16.gmra.mrb[0].mxu0 %v566
        %v679 = vpop.f32.mrb[0].mxu0
        %v680 = vadd.f32 %v595, %v679
        %v681 = vpop.f32.mrb[0].mxu0
        %v682 = vpop.f32.mrb[0].mxu0
        %v683 = vadd.f32 %v595, %v682
        %v684 = vpop.f32.mrb[0].mxu0
        %685 = vmatprep.mubr.bf16.mxu0 0
        %686 = vmatmul.mubr.bf16.gmra.mrb[0].mxu0 %v567
        %v687 = vpop.f32.mrb[0].mxu0
        %v688 = vadd.f32 %v595, %v687
        %v689 = vpop.f32.mrb[0].mxu0
        %v690 = vpop.f32.mrb[0].mxu0
        %v691 = vadd.f32 %v595, %v690
        %v692 = vpop.f32.mrb[0].mxu0
        %693 = vmatprep.mubr.bf16.mxu0 0
        %694 = vmatmul.mubr.bf16.gmra.mrb[0].mxu0 %v568
        %v695 = vpop.f32.mrb[0].mxu0
        %v696 = vadd.f32 %v595, %v695
        %v697 = vpop.f32.mrb[0].mxu0
        %v698 = vpop.f32.mrb[0].mxu0
        %v699 = vadd.f32 %v595, %v698
        %v700 = vpop.f32.mrb[0].mxu0
        %701 = vmatprep.mubr.bf16.mxu0 0
        %702 = vmatmul.mubr.bf16.gmra.mrb[0].mxu0 %v569
        %v703 = vpop.f32.mrb[0].mxu0
        %v704 = vadd.f32 %v595, %v703
        %v705 = vpop.f32.mrb[0].mxu0
        %v706 = vpop.f32.mrb[0].mxu0
        %v707 = vadd.f32 %v595, %v706
        %v708 = vpop.f32.mrb[0].mxu0
        %709 = vmatprep.mubr.bf16.mxu0 0
        %710 = vmatmul.mubr.bf16.gmra.mrb[0].mxu0 %v570
        %v711 = vpop.f32.mrb[0].mxu0
        %v712 = vadd.f32 %v595, %v711
        %v713 = vpop.f32.mrb[0].mxu0
        %v714 = vpop.f32.mrb[0].mxu0
        %v715 = vadd.f32 %v595, %v714
        %v716 = vpop.f32.mrb[0].mxu0
        %717 = vmatprep.mubr.bf16.mxu0 0
        %718 = vmatmul.mubr.bf16.gmra.mrb[0].mxu0 %v571
        %v719 = vpop.f32.mrb[0].mxu0
        %v720 = vadd.f32 %v595, %v719
        %v721 = vpop.f32.mrb[0].mxu0
        %v722 = vpop.f32.mrb[0].mxu0
        %v723 = vadd.f32 %v595, %v722
        %v724 = vpop.f32.mrb[0].mxu0
        %725 = vmatprep.mubr.bf16.mxu0 0
        %726 = vmatmul.mubr.bf16.gmra.mrb[0].mxu0 %v572
        %v727 = vpop.f32.mrb[0].mxu0
        %v728 = vadd.f32 %v595, %v727
        %v729 = vpop.f32.mrb[0].mxu0
        %v730 = vpop.f32.mrb[0].mxu0
        %v731 = vadd.f32 %v595, %v730
        %v732 = vpop.f32.mrb[0].mxu0
        %733 = vmatprep.mubr.bf16.mxu0 0
        %734 = vmatmul.mubr.bf16.gmra.mrb[0].mxu0 %v573
        %v735 = vpop.f32.mrb[0].mxu0
        %v736 = vadd.f32 %v595, %v735
        %v737 = vpop.f32.mrb[0].mxu0
        %v738 = vpop.f32.mrb[0].mxu0
        %v739 = vadd.f32 %v595, %v738
        %v740 = vpop.f32.mrb[0].mxu0
        %741 = vdwg.mxu0
        %v742 = vmax.f32 %v680, 0.0
        %v743 = vmax.f32 %v683, 0.0
        %v744 = vmax.f32 %v688, 0.0
        %v745 = vmax.f32 %v691, 0.0
        %v746 = vmax.f32 %v696, 0.0
        %v747 = vmax.f32 %v699, 0.0
        %v748 = vmax.f32 %v704, 0.0
        %v749 = vmax.f32 %v707, 0.0
        %v750 = vmax.f32 %v712, 0.0
        %v751 = vmax.f32 %v715, 0.0
        %v752 = vmax.f32 %v720, 0.0
        %v753 = vmax.f32 %v723, 0.0
        %v754 = vmax.f32 %v728, 0.0
        %v755 = vmax.f32 %v731, 0.0
        %v756 = vmax.f32 %v736, 0.0
        %v757 = vmax.f32 %v739, 0.0
        %v758 = vpack.c.bf16 %v743, %v742
        %v759 = vpack.c.bf16 %v745, %v744
        %v760 = vpack.c.bf16 %v747, %v746
        %v761 = vpack.c.bf16 %v749, %v748
        %v762 = vpack.c.bf16 %v751, %v750
        %v763 = vpack.c.bf16 %v753, %v752
        %v764 = vpack.c.bf16 %v755, %v754
        %v765 = vpack.c.bf16 %v757, %v756
        %v766 = vld [vmem:[#allocation10] sm:$0xf]
        %v767 = vld [vmem:[#allocation10 + $0x4] sm:$0xf]
        %v768 = vld [vmem:[#allocation10 + $0x8] sm:$0xf]
        %v769 = vld [vmem:[#allocation10 + $0xc] sm:$0xf]
        %v770 = vld [vmem:[#allocation10 + $0x10] sm:$0xf]
        %v771 = vld [vmem:[#allocation10 + $0x14] sm:$0xf]
        %v772 = vld [vmem:[#allocation10 + $0x18] sm:$0xf]
        %v773 = vld [vmem:[#allocation10 + $0x1c] sm:$0xf]
        %v774 = vld [vmem:[#allocation10 + $0x20] sm:$0xf]
        %v775 = vld [vmem:[#allocation10 + $0x24] sm:$0xf]
        %v776 = vld [vmem:[#allocation10 + $0x28] sm:$0xf]
        %v777 = vld [vmem:[#allocation10 + $0x2c] sm:$0xf]
        %v778 = vld [vmem:[#allocation10 + $0x30] sm:$0xf]
        %v779 = vld [vmem:[#allocation10 + $0x34] sm:$0xf]
        %v780 = vld [vmem:[#allocation10 + $0x38] sm:$0xf]
        %v781 = vld [vmem:[#allocation10 + $0x3c] sm:$0xf]
        %v782 = vld [vmem:[#allocation11] sm:$0x1]
        %v784 = vlaneseq
        %v785 = vshrl.u32 %v784, 7
        %v786 = vsub.s32 0, %v785
        %v787 = vrot.slane %v782, %v786
        %v805 = vunpack.c.l.b16 %v766
        %v806 = vunpack.c.l.b16 %v767
        %v807 = vunpack.c.l.b16 %v768
        %v808 = vunpack.c.l.b16 %v769
        %v809 = vunpack.c.l.b16 %v770
        %v810 = vunpack.c.l.b16 %v771
        %v811 = vunpack.c.l.b16 %v772
        %v812 = vunpack.c.l.b16 %v773
        %v813 = vunpack.c.l.b16 %v774
        %v814 = vunpack.c.l.b16 %v775
        %v815 = vunpack.c.l.b16 %v776
        %v816 = vunpack.c.l.b16 %v777
        %v817 = vunpack.c.l.b16 %v778
        %v818 = vunpack.c.l.b16 %v779
        %v819 = vunpack.c.l.b16 %v780
        %v820 = vunpack.c.l.b16 %v781
        %v821 = vpack.c.b16 %v806, %v805
        %v822 = vpack.c.b16 %v808, %v807
        %v823 = vpack.c.b16 %v810, %v809
        %v824 = vpack.c.b16 %v812, %v811
        %v825 = vpack.c.b16 %v814, %v813
        %v826 = vpack.c.b16 %v816, %v815
        %v827 = vpack.c.b16 %v818, %v817
        %v828 = vpack.c.b16 %v820, %v819
        %837 = vmatprep.subr.bf16.mxu0 0
        %838 = vmatpush1.bf16.msra.mxu0 %v821
        %839 = vmatprep.subr.bf16.mxu0 0
        %840 = vmatpush1.bf16.msra.mxu0 %v822
        %841 = vmatprep.subr.bf16.mxu0 0
        %842 = vmatpush1.bf16.msra.mxu0 %v823
        %843 = vmatprep.subr.bf16.mxu0 0
        %844 = vmatpush1.bf16.msra.mxu0 %v824
        %845 = vmatprep.subr.bf16.mxu0 0
        %846 = vmatpush1.bf16.msra.mxu0 %v825
        %847 = vmatprep.subr.bf16.mxu0 0
        %848 = vmatpush1.bf16.msra.mxu0 %v826
        %849 = vmatprep.subr.bf16.mxu0 0
        %850 = vmatpush1.bf16.msra.mxu0 %v827
        %851 = vmatprep.subr.bf16.mxu0 0
        %852 = vmatpush1.bf16.msra.mxu0 %v828
        %853 = vmatprep.subr.bf16.mxu0 0
        %854 = vmatpush1.bf16.msra.mxu0 0
        %855 = vmatprep.subr.bf16.mxu0 0
        %856 = vmatpush1.bf16.msra.mxu0 0
        %857 = vmatprep.subr.bf16.mxu0 0
        %858 = vmatpush1.bf16.msra.mxu0 0
        %859 = vmatprep.subr.bf16.mxu0 0
        %860 = vmatpush1.bf16.msra.mxu0 0
        %861 = vmatprep.subr.bf16.mxu0 0
        %862 = vmatpush1.bf16.msra.mxu0 0
        %863 = vmatprep.subr.bf16.mxu0 0
        %864 = vmatpush1.bf16.msra.mxu0 0
        %865 = vmatprep.subr.bf16.mxu0 0
        %866 = vmatpush1.bf16.msra.mxu0 0
        %867 = vmatprep.subr.bf16.mxu0 0
        %868 = vmatpush1.bf16.msra.mxu0 0
        %869 = vmatprep.mubr.bf16.mxu0 0
        %870 = vmatmul.mubr.bf16.gmra.mrb[0].mxu0 %v758
        %v871 = vpop.f32.mrb[0].mxu0
        %v872 = vadd.f32 %v787, %v871
        %v873 = vpop.f32.mrb[0].mxu0
        %v874 = vpop.f32.mrb[0].mxu0
        %v875 = vadd.f32 %v787, %v874
        %v876 = vpop.f32.mrb[0].mxu0
        %877 = vmatprep.mubr.bf16.mxu0 0
        %878 = vmatmul.mubr.bf16.gmra.mrb[0].mxu0 %v759
        %v879 = vpop.f32.mrb[0].mxu0
        %v880 = vadd.f32 %v787, %v879
        %v881 = vpop.f32.mrb[0].mxu0
        %v882 = vpop.f32.mrb[0].mxu0
        %v883 = vadd.f32 %v787, %v882
        %v884 = vpop.f32.mrb[0].mxu0
        %885 = vmatprep.mubr.bf16.mxu0 0
        %886 = vmatmul.mubr.bf16.gmra.mrb[0].mxu0 %v760
        %v887 = vpop.f32.mrb[0].mxu0
        %v888 = vadd.f32 %v787, %v887
        %v889 = vpop.f32.mrb[0].mxu0
        %v890 = vpop.f32.mrb[0].mxu0
        %v891 = vadd.f32 %v787, %v890
        %v892 = vpop.f32.mrb[0].mxu0
        %893 = vmatprep.mubr.bf16.mxu0 0
        %894 = vmatmul.mubr.bf16.gmra.mrb[0].mxu0 %v761
        %v895 = vpop.f32.mrb[0].mxu0
        %v896 = vadd.f32 %v787, %v895
        %v897 = vpop.f32.mrb[0].mxu0
        %v898 = vpop.f32.mrb[0].mxu0
        %v899 = vadd.f32 %v787, %v898
        %v900 = vpop.f32.mrb[0].mxu0
        %901 = vmatprep.mubr.bf16.mxu0 0
        %902 = vmatmul.mubr.bf16.gmra.mrb[0].mxu0 %v762
        %v903 = vpop.f32.mrb[0].mxu0
        %v904 = vadd.f32 %v787, %v903
        %v905 = vpop.f32.mrb[0].mxu0
        %v906 = vpop.f32.mrb[0].mxu0
        %v907 = vadd.f32 %v787, %v906
        %v908 = vpop.f32.mrb[0].mxu0
        %909 = vmatprep.mubr.bf16.mxu0 0
        %910 = vmatmul.mubr.bf16.gmra.mrb[0].mxu0 %v763
        %v911 = vpop.f32.mrb[0].mxu0
        %v912 = vadd.f32 %v787, %v911
        %v913 = vpop.f32.mrb[0].mxu0
        %v914 = vpop.f32.mrb[0].mxu0
        %v915 = vadd.f32 %v787, %v914
        %v916 = vpop.f32.mrb[0].mxu0
        %917 = vmatprep.mubr.bf16.mxu0 0
        %918 = vmatmul.mubr.bf16.gmra.mrb[0].mxu0 %v764
        %v919 = vpop.f32.mrb[0].mxu0
        %v920 = vadd.f32 %v787, %v919
        %v921 = vpop.f32.mrb[0].mxu0
        %v922 = vpop.f32.mrb[0].mxu0
        %v923 = vadd.f32 %v787, %v922
        %v924 = vpop.f32.mrb[0].mxu0
        %925 = vmatprep.mubr.bf16.mxu0 0
        %926 = vmatmul.mubr.bf16.gmra.mrb[0].mxu0 %v765
        %v927 = vpop.f32.mrb[0].mxu0
        %v928 = vadd.f32 %v787, %v927
        %v929 = vpop.f32.mrb[0].mxu0
        %v930 = vpop.f32.mrb[0].mxu0
        %v931 = vadd.f32 %v787, %v930
        %v932 = vpop.f32.mrb[0].mxu0
        %933 = vdwg.mxu0
        %v934 = vmax.f32 %v872, 0.0
        %v935 = vmax.f32 %v875, 0.0
        %v936 = vmax.f32 %v880, 0.0
        %v937 = vmax.f32 %v883, 0.0
        %v938 = vmax.f32 %v888, 0.0
        %v939 = vmax.f32 %v891, 0.0
        %v940 = vmax.f32 %v896, 0.0
        %v941 = vmax.f32 %v899, 0.0
        %v942 = vmax.f32 %v904, 0.0
        %v943 = vmax.f32 %v907, 0.0
        %v944 = vmax.f32 %v912, 0.0
        %v945 = vmax.f32 %v915, 0.0
        %v946 = vmax.f32 %v920, 0.0
        %v947 = vmax.f32 %v923, 0.0
        %v948 = vmax.f32 %v928, 0.0
        %v949 = vmax.f32 %v931, 0.0
        %v950 = vpack.c.bf16 %v935, %v934
        %v951 = vpack.c.bf16 %v937, %v936
        %v952 = vpack.c.bf16 %v939, %v938
        %v953 = vpack.c.bf16 %v941, %v940
        %v954 = vpack.c.bf16 %v943, %v942
        %v955 = vpack.c.bf16 %v945, %v944
        %v956 = vpack.c.bf16 %v947, %v946
        %v957 = vpack.c.bf16 %v949, %v948
        %s958 = scalar_lea.vmem [#allocation10], 64
        %v959 = vld [vmem:[%s958] sm:$0xf]
        %v960 = vld [vmem:[%s958 + $0x4] sm:$0xf]
        %v961 = vld [vmem:[%s958 + $0x8] sm:$0xf]
        %v962 = vld [vmem:[%s958 + $0xc] sm:$0xf]
        %v963 = vld [vmem:[%s958 + $0x10] sm:$0xf]
        %v964 = vld [vmem:[%s958 + $0x14] sm:$0xf]
        %v965 = vld [vmem:[%s958 + $0x18] sm:$0xf]
        %v966 = vld [vmem:[%s958 + $0x1c] sm:$0xf]
        %v967 = vld [vmem:[%s958 + $0x20] sm:$0xf]
        %v968 = vld [vmem:[%s958 + $0x24] sm:$0xf]
        %v969 = vld [vmem:[%s958 + $0x28] sm:$0xf]
        %v970 = vld [vmem:[%s958 + $0x2c] sm:$0xf]
        %v971 = vld [vmem:[%s958 + $0x30] sm:$0xf]
        %v972 = vld [vmem:[%s958 + $0x34] sm:$0xf]
        %v973 = vld [vmem:[%s958 + $0x38] sm:$0xf]
        %v974 = vld [vmem:[%s958 + $0x3c] sm:$0xf]
        %s975 = scalar_lea.vmem [#allocation11], 1
        %v976 = vld [vmem:[%s975] sm:$0x1]
        %v978 = vlaneseq
        %v979 = vshrl.u32 %v978, 7
        %v980 = vsub.s32 0, %v979
        %v981 = vrot.slane %v976, %v980
        %v999 = vunpack.c.l.b16 %v959
        %v1000 = vunpack.c.l.b16 %v960
        %v1001 = vunpack.c.l.b16 %v961
        %v1002 = vunpack.c.l.b16 %v962
        %v1003 = vunpack.c.l.b16 %v963
        %v1004 = vunpack.c.l.b16 %v964
        %v1005 = vunpack.c.l.b16 %v965
        %v1006 = vunpack.c.l.b16 %v966
        %v1007 = vunpack.c.l.b16 %v967
        %v1008 = vunpack.c.l.b16 %v968
        %v1009 = vunpack.c.l.b16 %v969
        %v1010 = vunpack.c.l.b16 %v970
        %v1011 = vunpack.c.l.b16 %v971
        %v1012 = vunpack.c.l.b16 %v972
        %v1013 = vunpack.c.l.b16 %v973
        %v1014 = vunpack.c.l.b16 %v974
        %v1015 = vpack.c.b16 %v1000, %v999
        %v1016 = vpack.c.b16 %v1002, %v1001
        %v1017 = vpack.c.b16 %v1004, %v1003
        %v1018 = vpack.c.b16 %v1006, %v1005
        %v1019 = vpack.c.b16 %v1008, %v1007
        %v1020 = vpack.c.b16 %v1010, %v1009
        %v1021 = vpack.c.b16 %v1012, %v1011
        %v1022 = vpack.c.b16 %v1014, %v1013
        %1031 = vmatprep.subr.bf16.mxu0 0
        %1032 = vmatpush1.bf16.msra.mxu0 %v1015
        %1033 = vmatprep.subr.bf16.mxu0 0
        %1034 = vmatpush1.bf16.msra.mxu0 %v1016
        %1035 = vmatprep.subr.bf16.mxu0 0
        %1036 = vmatpush1.bf16.msra.mxu0 %v1017
        %1037 = vmatprep.subr.bf16.mxu0 0
        %1038 = vmatpush1.bf16.msra.mxu0 %v1018
        %1039 = vmatprep.subr.bf16.mxu0 0
        %1040 = vmatpush1.bf16.msra.mxu0 %v1019
        %1041 = vmatprep.subr.bf16.mxu0 0
        %1042 = vmatpush1.bf16.msra.mxu0 %v1020
        %1043 = vmatprep.subr.bf16.mxu0 0
        %1044 = vmatpush1.bf16.msra.mxu0 %v1021
        %1045 = vmatprep.subr.bf16.mxu0 0
        %1046 = vmatpush1.bf16.msra.mxu0 %v1022
        %1047 = vmatprep.subr.bf16.mxu0 0
        %1048 = vmatpush1.bf16.msra.mxu0 0
        %1049 = vmatprep.subr.bf16.mxu0 0
        %1050 = vmatpush1.bf16.msra.mxu0 0
        %1051 = vmatprep.subr.bf16.mxu0 0
        %1052 = vmatpush1.bf16.msra.mxu0 0
        %1053 = vmatprep.subr.bf16.mxu0 0
        %1054 = vmatpush1.bf16.msra.mxu0 0
        %1055 = vmatprep.subr.bf16.mxu0 0
        %1056 = vmatpush1.bf16.msra.mxu0 0
        %1057 = vmatprep.subr.bf16.mxu0 0
        %1058 = vmatpush1.bf16.msra.mxu0 0
        %1059 = vmatprep.subr.bf16.mxu0 0
        %1060 = vmatpush1.bf16.msra.mxu0 0
        %1061 = vmatprep.subr.bf16.mxu0 0
        %1062 = vmatpush1.bf16.msra.mxu0 0
        %1063 = vmatprep.mubr.bf16.mxu0 0
        %1064 = vmatmul.mubr.bf16.gmra.mrb[0].mxu0 %v950
        %v1065 = vpop.f32.mrb[0].mxu0
        %v1066 = vadd.f32 %v981, %v1065
        %v1067 = vpop.f32.mrb[0].mxu0
        %v1068 = vpop.f32.mrb[0].mxu0
        %v1069 = vadd.f32 %v981, %v1068
        %v1070 = vpop.f32.mrb[0].mxu0
        %1071 = vmatprep.mubr.bf16.mxu0 0
        %1072 = vmatmul.mubr.bf16.gmra.mrb[0].mxu0 %v951
        %v1073 = vpop.f32.mrb[0].mxu0
        %v1074 = vadd.f32 %v981, %v1073
        %v1075 = vpop.f32.mrb[0].mxu0
        %v1076 = vpop.f32.mrb[0].mxu0
        %v1077 = vadd.f32 %v981, %v1076
        %v1078 = vpop.f32.mrb[0].mxu0
        %1079 = vmatprep.mubr.bf16.mxu0 0
        %1080 = vmatmul.mubr.bf16.gmra.mrb[0].mxu0 %v952
        %v1081 = vpop.f32.mrb[0].mxu0
        %v1082 = vadd.f32 %v981, %v1081
        %v1083 = vpop.f32.mrb[0].mxu0
        %v1084 = vpop.f32.mrb[0].mxu0
        %v1085 = vadd.f32 %v981, %v1084
        %v1086 = vpop.f32.mrb[0].mxu0
        %1087 = vmatprep.mubr.bf16.mxu0 0
        %1088 = vmatmul.mubr.bf16.gmra.mrb[0].mxu0 %v953
        %v1089 = vpop.f32.mrb[0].mxu0
        %v1090 = vadd.f32 %v981, %v1089
        %v1091 = vpop.f32.mrb[0].mxu0
        %v1092 = vpop.f32.mrb[0].mxu0
        %v1093 = vadd.f32 %v981, %v1092
        %v1094 = vpop.f32.mrb[0].mxu0
        %1095 = vmatprep.mubr.bf16.mxu0 0
        %1096 = vmatmul.mubr.bf16.gmra.mrb[0].mxu0 %v954
        %v1097 = vpop.f32.mrb[0].mxu0
        %v1098 = vadd.f32 %v981, %v1097
        %v1099 = vpop.f32.mrb[0].mxu0
        %v1100 = vpop.f32.mrb[0].mxu0
        %v1101 = vadd.f32 %v981, %v1100
        %v1102 = vpop.f32.mrb[0].mxu0
        %1103 = vmatprep.mubr.bf16.mxu0 0
        %1104 = vmatmul.mubr.bf16.gmra.mrb[0].mxu0 %v955
        %v1105 = vpop.f32.mrb[0].mxu0
        %v1106 = vadd.f32 %v981, %v1105
        %v1107 = vpop.f32.mrb[0].mxu0
        %v1108 = vpop.f32.mrb[0].mxu0
        %v1109 = vadd.f32 %v981, %v1108
        %v1110 = vpop.f32.mrb[0].mxu0
        %1111 = vmatprep.mubr.bf16.mxu0 0
        %1112 = vmatmul.mubr.bf16.gmra.mrb[0].mxu0 %v956
        %v1113 = vpop.f32.mrb[0].mxu0
        %v1114 = vadd.f32 %v981, %v1113
        %v1115 = vpop.f32.mrb[0].mxu0
        %v1116 = vpop.f32.mrb[0].mxu0
        %v1117 = vadd.f32 %v981, %v1116
        %v1118 = vpop.f32.mrb[0].mxu0
        %1119 = vmatprep.mubr.bf16.mxu0 0
        %1120 = vmatmul.mubr.bf16.gmra.mrb[0].mxu0 %v957
        %v1121 = vpop.f32.mrb[0].mxu0
        %v1122 = vadd.f32 %v981, %v1121
        %v1123 = vpop.f32.mrb[0].mxu0
        %v1124 = vpop.f32.mrb[0].mxu0
        %v1125 = vadd.f32 %v981, %v1124
        %v1126 = vpop.f32.mrb[0].mxu0
        %1127 = vdwg.mxu0
        %v1128 = vmax.f32 %v1066, 0.0
        %v1129 = vmax.f32 %v1069, 0.0
        %v1130 = vmax.f32 %v1074, 0.0
        %v1131 = vmax.f32 %v1077, 0.0
        %v1132 = vmax.f32 %v1082, 0.0
        %v1133 = vmax.f32 %v1085, 0.0
        %v1134 = vmax.f32 %v1090, 0.0
        %v1135 = vmax.f32 %v1093, 0.0
        %v1136 = vmax.f32 %v1098, 0.0
        %v1137 = vmax.f32 %v1101, 0.0
        %v1138 = vmax.f32 %v1106, 0.0
        %v1139 = vmax.f32 %v1109, 0.0
        %v1140 = vmax.f32 %v1114, 0.0
        %v1141 = vmax.f32 %v1117, 0.0
        %v1142 = vmax.f32 %v1122, 0.0
        %v1143 = vmax.f32 %v1125, 0.0
        %v1144 = vpack.c.bf16 %v1129, %v1128
        %v1145 = vpack.c.bf16 %v1131, %v1130
        %v1146 = vpack.c.bf16 %v1133, %v1132
        %v1147 = vpack.c.bf16 %v1135, %v1134
        %v1148 = vpack.c.bf16 %v1137, %v1136
        %v1149 = vpack.c.bf16 %v1139, %v1138
        %v1150 = vpack.c.bf16 %v1141, %v1140
        %v1151 = vpack.c.bf16 %v1143, %v1142
        %v1152 = vld [vmem:[#allocation13] sm:$0xf]
        %v1153 = vld [vmem:[#allocation13 + $0x4] sm:$0xf]
        %v1154 = vld [vmem:[#allocation13 + $0x8] sm:$0xf]
        %v1155 = vld [vmem:[#allocation13 + $0xc] sm:$0xf]
        %v1156 = vld [vmem:[#allocation13 + $0x10] sm:$0xf]
        %v1157 = vld [vmem:[#allocation13 + $0x14] sm:$0xf]
        %v1158 = vld [vmem:[#allocation13 + $0x18] sm:$0xf]
        %v1159 = vld [vmem:[#allocation13 + $0x1c] sm:$0xf]
        %v1160 = vld [vmem:[#allocation13 + $0x20] sm:$0xf]
        %v1161 = vld [vmem:[#allocation13 + $0x24] sm:$0xf]
        %v1162 = vld [vmem:[#allocation13 + $0x28] sm:$0xf]
        %v1163 = vld [vmem:[#allocation13 + $0x2c] sm:$0xf]
        %v1164 = vld [vmem:[#allocation13 + $0x30] sm:$0xf]
        %v1165 = vld [vmem:[#allocation13 + $0x34] sm:$0xf]
        %v1166 = vld [vmem:[#allocation13 + $0x38] sm:$0xf]
        %v1167 = vld [vmem:[#allocation13 + $0x3c] sm:$0xf]
        %v1168 = vld [vmem:[#allocation14] sm:$0x1]
        %v1170 = vlaneseq
        %v1171 = vshrl.u32 %v1170, 7
        %v1172 = vsub.s32 0, %v1171
        %v1173 = vrot.slane %v1168, %v1172
        %v1191 = vunpack.c.l.b16 %v1152
        %v1192 = vunpack.c.l.b16 %v1153
        %v1193 = vunpack.c.l.b16 %v1154
        %v1194 = vunpack.c.l.b16 %v1155
        %v1195 = vunpack.c.l.b16 %v1156
        %v1196 = vunpack.c.l.b16 %v1157
        %v1197 = vunpack.c.l.b16 %v1158
        %v1198 = vunpack.c.l.b16 %v1159
        %v1199 = vunpack.c.l.b16 %v1160
        %v1200 = vunpack.c.l.b16 %v1161
        %v1201 = vunpack.c.l.b16 %v1162
        %v1202 = vunpack.c.l.b16 %v1163
        %v1203 = vunpack.c.l.b16 %v1164
        %v1204 = vunpack.c.l.b16 %v1165
        %v1205 = vunpack.c.l.b16 %v1166
        %v1206 = vunpack.c.l.b16 %v1167
        %v1207 = vpack.c.b16 %v1192, %v1191
        %v1208 = vpack.c.b16 %v1194, %v1193
        %v1209 = vpack.c.b16 %v1196, %v1195
        %v1210 = vpack.c.b16 %v1198, %v1197
        %v1211 = vpack.c.b16 %v1200, %v1199
        %v1212 = vpack.c.b16 %v1202, %v1201
        %v1213 = vpack.c.b16 %v1204, %v1203
        %v1214 = vpack.c.b16 %v1206, %v1205
        %1223 = vmatprep.subr.bf16.mxu0 0
        %1224 = vmatpush1.bf16.msra.mxu0 %v1207
        %1225 = vmatprep.subr.bf16.mxu0 0
        %1226 = vmatpush1.bf16.msra.mxu0 %v1208
        %1227 = vmatprep.subr.bf16.mxu0 0
        %1228 = vmatpush1.bf16.msra.mxu0 %v1209
        %1229 = vmatprep.subr.bf16.mxu0 0
        %1230 = vmatpush1.bf16.msra.mxu0 %v1210
        %1231 = vmatprep.subr.bf16.mxu0 0
        %1232 = vmatpush1.bf16.msra.mxu0 %v1211
        %1233 = vmatprep.subr.bf16.mxu0 0
        %1234 = vmatpush1.bf16.msra.mxu0 %v1212
        %1235 = vmatprep.subr.bf16.mxu0 0
        %1236 = vmatpush1.bf16.msra.mxu0 %v1213
        %1237 = vmatprep.subr.bf16.mxu0 0
        %1238 = vmatpush1.bf16.msra.mxu0 %v1214
        %1239 = vmatprep.subr.bf16.mxu0 0
        %1240 = vmatpush1.bf16.msra.mxu0 0
        %1241 = vmatprep.subr.bf16.mxu0 0
        %1242 = vmatpush1.bf16.msra.mxu0 0
        %1243 = vmatprep.subr.bf16.mxu0 0
        %1244 = vmatpush1.bf16.msra.mxu0 0
        %1245 = vmatprep.subr.bf16.mxu0 0
        %1246 = vmatpush1.bf16.msra.mxu0 0
        %1247 = vmatprep.subr.bf16.mxu0 0
        %1248 = vmatpush1.bf16.msra.mxu0 0
        %1249 = vmatprep.subr.bf16.mxu0 0
        %1250 = vmatpush1.bf16.msra.mxu0 0
        %1251 = vmatprep.subr.bf16.mxu0 0
        %1252 = vmatpush1.bf16.msra.mxu0 0
        %1253 = vmatprep.subr.bf16.mxu0 0
        %1254 = vmatpush1.bf16.msra.mxu0 0
        %1255 = vmatprep.mubr.bf16.mxu0 0
        %1256 = vmatmul.mubr.bf16.gmra.mrb[0].mxu0 %v1144
        %v1257 = vpop.f32.mrb[0].mxu0
        %v1258 = vadd.f32 %v1173, %v1257
        %v1259 = vpop.f32.mrb[0].mxu0
        %v1260 = vpop.f32.mrb[0].mxu0
        %v1261 = vadd.f32 %v1173, %v1260
        %v1262 = vpop.f32.mrb[0].mxu0
        %1263 = vmatprep.mubr.bf16.mxu0 0
        %1264 = vmatmul.mubr.bf16.gmra.mrb[0].mxu0 %v1145
        %v1265 = vpop.f32.mrb[0].mxu0
        %v1266 = vadd.f32 %v1173, %v1265
        %v1267 = vpop.f32.mrb[0].mxu0
        %v1268 = vpop.f32.mrb[0].mxu0
        %v1269 = vadd.f32 %v1173, %v1268
        %v1270 = vpop.f32.mrb[0].mxu0
        %1271 = vmatprep.mubr.bf16.mxu0 0
        %1272 = vmatmul.mubr.bf16.gmra.mrb[0].mxu0 %v1146
        %v1273 = vpop.f32.mrb[0].mxu0
        %v1274 = vadd.f32 %v1173, %v1273
        %v1275 = vpop.f32.mrb[0].mxu0
        %v1276 = vpop.f32.mrb[0].mxu0
        %v1277 = vadd.f32 %v1173, %v1276
        %v1278 = vpop.f32.mrb[0].mxu0
        %1279 = vmatprep.mubr.bf16.mxu0 0
        %1280 = vmatmul.mubr.bf16.gmra.mrb[0].mxu0 %v1147
        %v1281 = vpop.f32.mrb[0].mxu0
        %v1282 = vadd.f32 %v1173, %v1281
        %v1283 = vpop.f32.mrb[0].mxu0
        %v1284 = vpop.f32.mrb[0].mxu0
        %v1285 = vadd.f32 %v1173, %v1284
        %v1286 = vpop.f32.mrb[0].mxu0
        %1287 = vmatprep.mubr.bf16.mxu0 0
        %1288 = vmatmul.mubr.bf16.gmra.mrb[0].mxu0 %v1148
        %v1289 = vpop.f32.mrb[0].mxu0
        %v1290 = vadd.f32 %v1173, %v1289
        %v1291 = vpop.f32.mrb[0].mxu0
        %v1292 = vpop.f32.mrb[0].mxu0
        %v1293 = vadd.f32 %v1173, %v1292
        %v1294 = vpop.f32.mrb[0].mxu0
        %1295 = vmatprep.mubr.bf16.mxu0 0
        %1296 = vmatmul.mubr.bf16.gmra.mrb[0].mxu0 %v1149
        %v1297 = vpop.f32.mrb[0].mxu0
        %v1298 = vadd.f32 %v1173, %v1297
        %v1299 = vpop.f32.mrb[0].mxu0
        %v1300 = vpop.f32.mrb[0].mxu0
        %v1301 = vadd.f32 %v1173, %v1300
        %v1302 = vpop.f32.mrb[0].mxu0
        %1303 = vmatprep.mubr.bf16.mxu0 0
        %1304 = vmatmul.mubr.bf16.gmra.mrb[0].mxu0 %v1150
        %v1305 = vpop.f32.mrb[0].mxu0
        %v1306 = vadd.f32 %v1173, %v1305
        %v1307 = vpop.f32.mrb[0].mxu0
        %v1308 = vpop.f32.mrb[0].mxu0
        %v1309 = vadd.f32 %v1173, %v1308
        %v1310 = vpop.f32.mrb[0].mxu0
        %1311 = vmatprep.mubr.bf16.mxu0 0
        %1312 = vmatmul.mubr.bf16.gmra.mrb[0].mxu0 %v1151
        %v1313 = vpop.f32.mrb[0].mxu0
        %v1314 = vadd.f32 %v1173, %v1313
        %v1315 = vpop.f32.mrb[0].mxu0
        %v1316 = vpop.f32.mrb[0].mxu0
        %v1317 = vadd.f32 %v1173, %v1316
        %v1318 = vpop.f32.mrb[0].mxu0
        %1319 = vdwg.mxu0
        %v1320 = vadd.f32 %v534, %v1258
        %v1321 = vadd.f32 %v535, %v1261
        %v1322 = vadd.f32 %v536, %v1266
        %v1323 = vadd.f32 %v537, %v1269
        %v1324 = vadd.f32 %v538, %v1274
        %v1325 = vadd.f32 %v539, %v1277
        %v1326 = vadd.f32 %v540, %v1282
        %v1327 = vadd.f32 %v541, %v1285
        %v1328 = vadd.f32 %v542, %v1290
        %v1329 = vadd.f32 %v543, %v1293
        %v1330 = vadd.f32 %v544, %v1298
        %v1331 = vadd.f32 %v545, %v1301
        %v1332 = vadd.f32 %v546, %v1306
        %v1333 = vadd.f32 %v547, %v1309
        %v1334 = vadd.f32 %v548, %v1314
        %v1335 = vadd.f32 %v549, %v1317
        %v1336 = vpack.c.bf16 %v1321, %v1320
        %v1337 = vpack.c.bf16 %v1323, %v1322
        %v1338 = vpack.c.bf16 %v1325, %v1324
        %v1339 = vpack.c.bf16 %v1327, %v1326
        %v1340 = vpack.c.bf16 %v1329, %v1328
        %v1341 = vpack.c.bf16 %v1331, %v1330
        %v1342 = vpack.c.bf16 %v1333, %v1332
        %v1343 = vpack.c.bf16 %v1335, %v1334
        %s1344 = scalar_lea.vmem [#allocation7], 64
        %v1345 = vld [vmem:[%s1344] sm:$0xf]
        %v1346 = vld [vmem:[%s1344 + $0x4] sm:$0xf]
        %v1347 = vld [vmem:[%s1344 + $0x8] sm:$0xf]
        %v1348 = vld [vmem:[%s1344 + $0xc] sm:$0xf]
        %v1349 = vld [vmem:[%s1344 + $0x10] sm:$0xf]
        %v1350 = vld [vmem:[%s1344 + $0x14] sm:$0xf]
        %v1351 = vld [vmem:[%s1344 + $0x18] sm:$0xf]
        %v1352 = vld [vmem:[%s1344 + $0x1c] sm:$0xf]
        %v1353 = vld [vmem:[%s1344 + $0x20] sm:$0xf]
        %v1354 = vld [vmem:[%s1344 + $0x24] sm:$0xf]
        %v1355 = vld [vmem:[%s1344 + $0x28] sm:$0xf]
        %v1356 = vld [vmem:[%s1344 + $0x2c] sm:$0xf]
        %v1357 = vld [vmem:[%s1344 + $0x30] sm:$0xf]
        %v1358 = vld [vmem:[%s1344 + $0x34] sm:$0xf]
        %v1359 = vld [vmem:[%s1344 + $0x38] sm:$0xf]
        %v1360 = vld [vmem:[%s1344 + $0x3c] sm:$0xf]
        %s1361 = scalar_lea.vmem [#allocation8], 1
        %v1362 = vld [vmem:[%s1361] sm:$0x1]
        %v1364 = vlaneseq
        %v1365 = vshrl.u32 %v1364, 7
        %v1366 = vsub.s32 0, %v1365
        %v1367 = vrot.slane %v1362, %v1366
        %v1385 = vunpack.c.l.b16 %v1345
        %v1386 = vunpack.c.l.b16 %v1346
        %v1387 = vunpack.c.l.b16 %v1347
        %v1388 = vunpack.c.l.b16 %v1348
        %v1389 = vunpack.c.l.b16 %v1349
        %v1390 = vunpack.c.l.b16 %v1350
        %v1391 = vunpack.c.l.b16 %v1351
        %v1392 = vunpack.c.l.b16 %v1352
        %v1393 = vunpack.c.l.b16 %v1353
        %v1394 = vunpack.c.l.b16 %v1354
        %v1395 = vunpack.c.l.b16 %v1355
        %v1396 = vunpack.c.l.b16 %v1356
        %v1397 = vunpack.c.l.b16 %v1357
        %v1398 = vunpack.c.l.b16 %v1358
        %v1399 = vunpack.c.l.b16 %v1359
        %v1400 = vunpack.c.l.b16 %v1360
        %v1401 = vpack.c.b16 %v1386, %v1385
        %v1402 = vpack.c.b16 %v1388, %v1387
        %v1403 = vpack.c.b16 %v1390, %v1389
        %v1404 = vpack.c.b16 %v1392, %v1391
        %v1405 = vpack.c.b16 %v1394, %v1393
        %v1406 = vpack.c.b16 %v1396, %v1395
        %v1407 = vpack.c.b16 %v1398, %v1397
        %v1408 = vpack.c.b16 %v1400, %v1399
        %1417 = vmatprep.subr.bf16.mxu0 0
        %1418 = vmatpush1.bf16.msra.mxu0 %v1401
        %1419 = vmatprep.subr.bf16.mxu0 0
        %1420 = vmatpush1.bf16.msra.mxu0 %v1402
        %1421 = vmatprep.subr.bf16.mxu0 0
        %1422 = vmatpush1.bf16.msra.mxu0 %v1403
        %1423 = vmatprep.subr.bf16.mxu0 0
        %1424 = vmatpush1.bf16.msra.mxu0 %v1404
        %1425 = vmatprep.subr.bf16.mxu0 0
        %1426 = vmatpush1.bf16.msra.mxu0 %v1405
        %1427 = vmatprep.subr.bf16.mxu0 0
        %1428 = vmatpush1.bf16.msra.mxu0 %v1406
        %1429 = vmatprep.subr.bf16.mxu0 0
        %1430 = vmatpush1.bf16.msra.mxu0 %v1407
        %1431 = vmatprep.subr.bf16.mxu0 0
        %1432 = vmatpush1.bf16.msra.mxu0 %v1408
        %1433 = vmatprep.subr.bf16.mxu0 0
        %1434 = vmatpush1.bf16.msra.mxu0 0
        %1435 = vmatprep.subr.bf16.mxu0 0
        %1436 = vmatpush1.bf16.msra.mxu0 0
        %1437 = vmatprep.subr.bf16.mxu0 0
        %1438 = vmatpush1.bf16.msra.mxu0 0
        %1439 = vmatprep.subr.bf16.mxu0 0
        %1440 = vmatpush1.bf16.msra.mxu0 0
        %1441 = vmatprep.subr.bf16.mxu0 0
        %1442 = vmatpush1.bf16.msra.mxu0 0
        %1443 = vmatprep.subr.bf16.mxu0 0
        %1444 = vmatpush1.bf16.msra.mxu0 0
        %1445 = vmatprep.subr.bf16.mxu0 0
        %1446 = vmatpush1.bf16.msra.mxu0 0
        %1447 = vmatprep.subr.bf16.mxu0 0
        %1448 = vmatpush1.bf16.msra.mxu0 0
        %1449 = vmatprep.mubr.bf16.mxu0 0
        %1450 = vmatmul.mubr.bf16.gmra.mrb[0].mxu0 %v1336
        %v1451 = vpop.f32.mrb[0].mxu0
        %v1452 = vadd.f32 %v1367, %v1451
        %v1453 = vpop.f32.mrb[0].mxu0
        %v1454 = vpop.f32.mrb[0].mxu0
        %v1455 = vadd.f32 %v1367, %v1454
        %v1456 = vpop.f32.mrb[0].mxu0
        %1457 = vmatprep.mubr.bf16.mxu0 0
        %1458 = vmatmul.mubr.bf16.gmra.mrb[0].mxu0 %v1337
        %v1459 = vpop.f32.mrb[0].mxu0
        %v1460 = vadd.f32 %v1367, %v1459
        %v1461 = vpop.f32.mrb[0].mxu0
        %v1462 = vpop.f32.mrb[0].mxu0
        %v1463 = vadd.f32 %v1367, %v1462
        %v1464 = vpop.f32.mrb[0].mxu0
        %1465 = vmatprep.mubr.bf16.mxu0 0
        %1466 = vmatmul.mubr.bf16.gmra.mrb[0].mxu0 %v1338
        %v1467 = vpop.f32.mrb[0].mxu0
        %v1468 = vadd.f32 %v1367, %v1467
        %v1469 = vpop.f32.mrb[0].mxu0
        %v1470 = vpop.f32.mrb[0].mxu0
        %v1471 = vadd.f32 %v1367, %v1470
        %v1472 = vpop.f32.mrb[0].mxu0
        %1473 = vmatprep.mubr.bf16.mxu0 0
        %1474 = vmatmul.mubr.bf16.gmra.mrb[0].mxu0 %v1339
        %v1475 = vpop.f32.mrb[0].mxu0
        %v1476 = vadd.f32 %v1367, %v1475
        %v1477 = vpop.f32.mrb[0].mxu0
        %v1478 = vpop.f32.mrb[0].mxu0
        %v1479 = vadd.f32 %v1367, %v1478
        %v1480 = vpop.f32.mrb[0].mxu0
        %1481 = vmatprep.mubr.bf16.mxu0 0
        %1482 = vmatmul.mubr.bf16.gmra.mrb[0].mxu0 %v1340
        %v1483 = vpop.f32.mrb[0].mxu0
        %v1484 = vadd.f32 %v1367, %v1483
        %v1485 = vpop.f32.mrb[0].mxu0
        %v1486 = vpop.f32.mrb[0].mxu0
        %v1487 = vadd.f32 %v1367, %v1486
        %v1488 = vpop.f32.mrb[0].mxu0
        %1489 = vmatprep.mubr.bf16.mxu0 0
        %1490 = vmatmul.mubr.bf16.gmra.mrb[0].mxu0 %v1341
        %v1491 = vpop.f32.mrb[0].mxu0
        %v1492 = vadd.f32 %v1367, %v1491
        %v1493 = vpop.f32.mrb[0].mxu0
        %v1494 = vpop.f32.mrb[0].mxu0
        %v1495 = vadd.f32 %v1367, %v1494
        %v1496 = vpop.f32.mrb[0].mxu0
        %1497 = vmatprep.mubr.bf16.mxu0 0
        %1498 = vmatmul.mubr.bf16.gmra.mrb[0].mxu0 %v1342
        %v1499 = vpop.f32.mrb[0].mxu0
        %v1500 = vadd.f32 %v1367, %v1499
        %v1501 = vpop.f32.mrb[0].mxu0
        %v1502 = vpop.f32.mrb[0].mxu0
        %v1503 = vadd.f32 %v1367, %v1502
        %v1504 = vpop.f32.mrb[0].mxu0
        %1505 = vmatprep.mubr.bf16.mxu0 0
        %1506 = vmatmul.mubr.bf16.gmra.mrb[0].mxu0 %v1343
        %v1507 = vpop.f32.mrb[0].mxu0
        %v1508 = vadd.f32 %v1367, %v1507
        %v1509 = vpop.f32.mrb[0].mxu0
        %v1510 = vpop.f32.mrb[0].mxu0
        %v1511 = vadd.f32 %v1367, %v1510
        %v1512 = vpop.f32.mrb[0].mxu0
        %1513 = vdwg.mxu0
        %v1514 = vmax.f32 %v1452, 0.0
        %v1515 = vmax.f32 %v1455, 0.0
        %v1516 = vmax.f32 %v1460, 0.0
        %v1517 = vmax.f32 %v1463, 0.0
        %v1518 = vmax.f32 %v1468, 0.0
        %v1519 = vmax.f32 %v1471, 0.0
        %v1520 = vmax.f32 %v1476, 0.0
        %v1521 = vmax.f32 %v1479, 0.0
        %v1522 = vmax.f32 %v1484, 0.0
        %v1523 = vmax.f32 %v1487, 0.0
        %v1524 = vmax.f32 %v1492, 0.0
        %v1525 = vmax.f32 %v1495, 0.0
        %v1526 = vmax.f32 %v1500, 0.0
        %v1527 = vmax.f32 %v1503, 0.0
        %v1528 = vmax.f32 %v1508, 0.0
        %v1529 = vmax.f32 %v1511, 0.0
        %v1530 = vpack.c.bf16 %v1515, %v1514
        %v1531 = vpack.c.bf16 %v1517, %v1516
        %v1532 = vpack.c.bf16 %v1519, %v1518
        %v1533 = vpack.c.bf16 %v1521, %v1520
        %v1534 = vpack.c.bf16 %v1523, %v1522
        %v1535 = vpack.c.bf16 %v1525, %v1524
        %v1536 = vpack.c.bf16 %v1527, %v1526
        %v1537 = vpack.c.bf16 %v1529, %v1528
        %s1538 = scalar_lea.vmem [#allocation10], 128
        %v1539 = vld [vmem:[%s1538] sm:$0xf]
        %v1540 = vld [vmem:[%s1538 + $0x4] sm:$0xf]
        %v1541 = vld [vmem:[%s1538 + $0x8] sm:$0xf]
        %v1542 = vld [vmem:[%s1538 + $0xc] sm:$0xf]
        %v1543 = vld [vmem:[%s1538 + $0x10] sm:$0xf]
        %v1544 = vld [vmem:[%s1538 + $0x14] sm:$0xf]
        %v1545 = vld [vmem:[%s1538 + $0x18] sm:$0xf]
        %v1546 = vld [vmem:[%s1538 + $0x1c] sm:$0xf]
        %v1547 = vld [vmem:[%s1538 + $0x20] sm:$0xf]
        %v1548 = vld [vmem:[%s1538 + $0x24] sm:$0xf]
        %v1549 = vld [vmem:[%s1538 + $0x28] sm:$0xf]
        %v1550 = vld [vmem:[%s1538 + $0x2c] sm:$0xf]
        %v1551 = vld [vmem:[%s1538 + $0x30] sm:$0xf]
        %v1552 = vld [vmem:[%s1538 + $0x34] sm:$0xf]
        %v1553 = vld [vmem:[%s1538 + $0x38] sm:$0xf]
        %v1554 = vld [vmem:[%s1538 + $0x3c] sm:$0xf]
        %s1555 = scalar_lea.vmem [#allocation11], 2
        %v1556 = vld [vmem:[%s1555] sm:$0x1]
        %v1558 = vlaneseq
        %v1559 = vshrl.u32 %v1558, 7
        %v1560 = vsub.s32 0, %v1559
        %v1561 = vrot.slane %v1556, %v1560
        %v1579 = vunpack.c.l.b16 %v1539
        %v1580 = vunpack.c.l.b16 %v1540
        %v1581 = vunpack.c.l.b16 %v1541
        %v1582 = vunpack.c.l.b16 %v1542
        %v1583 = vunpack.c.l.b16 %v1543
        %v1584 = vunpack.c.l.b16 %v1544
        %v1585 = vunpack.c.l.b16 %v1545
        %v1586 = vunpack.c.l.b16 %v1546
        %v1587 = vunpack.c.l.b16 %v1547
        %v1588 = vunpack.c.l.b16 %v1548
        %v1589 = vunpack.c.l.b16 %v1549
        %v1590 = vunpack.c.l.b16 %v1550
        %v1591 = vunpack.c.l.b16 %v1551
        %v1592 = vunpack.c.l.b16 %v1552
        %v1593 = vunpack.c.l.b16 %v1553
        %v1594 = vunpack.c.l.b16 %v1554
        %v1595 = vpack.c.b16 %v1580, %v1579
        %v1596 = vpack.c.b16 %v1582, %v1581
        %v1597 = vpack.c.b16 %v1584, %v1583
        %v1598 = vpack.c.b16 %v1586, %v1585
        %v1599 = vpack.c.b16 %v1588, %v1587
        %v1600 = vpack.c.b16 %v1590, %v1589
        %v1601 = vpack.c.b16 %v1592, %v1591
        %v1602 = vpack.c.b16 %v1594, %v1593
        %1611 = vmatprep.subr.bf16.mxu0 0
        %1612 = vmatpush1.bf16.msra.mxu0 %v1595
        %1613 = vmatprep.subr.bf16.mxu0 0
        %1614 = vmatpush1.bf16.msra.mxu0 %v1596
        %1615 = vmatprep.subr.bf16.mxu0 0
        %1616 = vmatpush1.bf16.msra.mxu0 %v1597
        %1617 = vmatprep.subr.bf16.mxu0 0
        %1618 = vmatpush1.bf16.msra.mxu0 %v1598
        %1619 = vmatprep.subr.bf16.mxu0 0
        %1620 = vmatpush1.bf16.msra.mxu0 %v1599
        %1621 = vmatprep.subr.bf16.mxu0 0
        %1622 = vmatpush1.bf16.msra.mxu0 %v1600
        %1623 = vmatprep.subr.bf16.mxu0 0
        %1624 = vmatpush1.bf16.msra.mxu0 %v1601
        %1625 = vmatprep.subr.bf16.mxu0 0
        %1626 = vmatpush1.bf16.msra.mxu0 %v1602
        %1627 = vmatprep.subr.bf16.mxu0 0
        %1628 = vmatpush1.bf16.msra.mxu0 0
        %1629 = vmatprep.subr.bf16.mxu0 0
        %1630 = vmatpush1.bf16.msra.mxu0 0
        %1631 = vmatprep.subr.bf16.mxu0 0
        %1632 = vmatpush1.bf16.msra.mxu0 0
        %1633 = vmatprep.subr.bf16.mxu0 0
        %1634 = vmatpush1.bf16.msra.mxu0 0
        %1635 = vmatprep.subr.bf16.mxu0 0
        %1636 = vmatpush1.bf16.msra.mxu0 0
        %1637 = vmatprep.subr.bf16.mxu0 0
        %1638 = vmatpush1.bf16.msra.mxu0 0
        %1639 = vmatprep.subr.bf16.mxu0 0
        %1640 = vmatpush1.bf16.msra.mxu0 0
        %1641 = vmatprep.subr.bf16.mxu0 0
        %1642 = vmatpush1.bf16.msra.mxu0 0
        %1643 = vmatprep.mubr.bf16.mxu0 0
        %1644 = vmatmul.mubr.bf16.gmra.mrb[0].mxu0 %v1530
        %v1645 = vpop.f32.mrb[0].mxu0
        %v1646 = vadd.f32 %v1561, %v1645
        %v1647 = vpop.f32.mrb[0].mxu0
        %v1648 = vpop.f32.mrb[0].mxu0
        %v1649 = vadd.f32 %v1561, %v1648
        %v1650 = vpop.f32.mrb[0].mxu0
        %1651 = vmatprep.mubr.bf16.mxu0 0
        %1652 = vmatmul.mubr.bf16.gmra.mrb[0].mxu0 %v1531
        %v1653 = vpop.f32.mrb[0].mxu0
        %v1654 = vadd.f32 %v1561, %v1653
        %v1655 = vpop.f32.mrb[0].mxu0
        %v1656 = vpop.f32.mrb[0].mxu0
        %v1657 = vadd.f32 %v1561, %v1656
        %v1658 = vpop.f32.mrb[0].mxu0
        %1659 = vmatprep.mubr.bf16.mxu0 0
        %1660 = vmatmul.mubr.bf16.gmra.mrb[0].mxu0 %v1532
        %v1661 = vpop.f32.mrb[0].mxu0
        %v1662 = vadd.f32 %v1561, %v1661
        %v1663 = vpop.f32.mrb[0].mxu0
        %v1664 = vpop.f32.mrb[0].mxu0
        %v1665 = vadd.f32 %v1561, %v1664
        %v1666 = vpop.f32.mrb[0].mxu0
        %1667 = vmatprep.mubr.bf16.mxu0 0
        %1668 = vmatmul.mubr.bf16.gmra.mrb[0].mxu0 %v1533
        %v1669 = vpop.f32.mrb[0].mxu0
        %v1670 = vadd.f32 %v1561, %v1669
        %v1671 = vpop.f32.mrb[0].mxu0
        %v1672 = vpop.f32.mrb[0].mxu0
        %v1673 = vadd.f32 %v1561, %v1672
        %v1674 = vpop.f32.mrb[0].mxu0
        %1675 = vmatprep.mubr.bf16.mxu0 0
        %1676 = vmatmul.mubr.bf16.gmra.mrb[0].mxu0 %v1534
        %v1677 = vpop.f32.mrb[0].mxu0
        %v1678 = vadd.f32 %v1561, %v1677
        %v1679 = vpop.f32.mrb[0].mxu0
        %v1680 = vpop.f32.mrb[0].mxu0
        %v1681 = vadd.f32 %v1561, %v1680
        %v1682 = vpop.f32.mrb[0].mxu0
        %1683 = vmatprep.mubr.bf16.mxu0 0
        %1684 = vmatmul.mubr.bf16.gmra.mrb[0].mxu0 %v1535
        %v1685 = vpop.f32.mrb[0].mxu0
        %v1686 = vadd.f32 %v1561, %v1685
        %v1687 = vpop.f32.mrb[0].mxu0
        %v1688 = vpop.f32.mrb[0].mxu0
        %v1689 = vadd.f32 %v1561, %v1688
        %v1690 = vpop.f32.mrb[0].mxu0
        %1691 = vmatprep.mubr.bf16.mxu0 0
        %1692 = vmatmul.mubr.bf16.gmra.mrb[0].mxu0 %v1536
        %v1693 = vpop.f32.mrb[0].mxu0
        %v1694 = vadd.f32 %v1561, %v1693
        %v1695 = vpop.f32.mrb[0].mxu0
        %v1696 = vpop.f32.mrb[0].mxu0
        %v1697 = vadd.f32 %v1561, %v1696
        %v1698 = vpop.f32.mrb[0].mxu0
        %1699 = vmatprep.mubr.bf16.mxu0 0
        %1700 = vmatmul.mubr.bf16.gmra.mrb[0].mxu0 %v1537
        %v1701 = vpop.f32.mrb[0].mxu0
        %v1702 = vadd.f32 %v1561, %v1701
        %v1703 = vpop.f32.mrb[0].mxu0
        %v1704 = vpop.f32.mrb[0].mxu0
        %v1705 = vadd.f32 %v1561, %v1704
        %v1706 = vpop.f32.mrb[0].mxu0
        %1707 = vdwg.mxu0
        %v1708 = vmax.f32 %v1646, 0.0
        %v1709 = vmax.f32 %v1649, 0.0
        %v1710 = vmax.f32 %v1654, 0.0
        %v1711 = vmax.f32 %v1657, 0.0
        %v1712 = vmax.f32 %v1662, 0.0
        %v1713 = vmax.f32 %v1665, 0.0
        %v1714 = vmax.f32 %v1670, 0.0
        %v1715 = vmax.f32 %v1673, 0.0
        %v1716 = vmax.f32 %v1678, 0.0
        %v1717 = vmax.f32 %v1681, 0.0
        %v1718 = vmax.f32 %v1686, 0.0
        %v1719 = vmax.f32 %v1689, 0.0
        %v1720 = vmax.f32 %v1694, 0.0
        %v1721 = vmax.f32 %v1697, 0.0
        %v1722 = vmax.f32 %v1702, 0.0
        %v1723 = vmax.f32 %v1705, 0.0
        %v1724 = vpack.c.bf16 %v1709, %v1708
        %v1725 = vpack.c.bf16 %v1711, %v1710
        %v1726 = vpack.c.bf16 %v1713, %v1712
        %v1727 = vpack.c.bf16 %v1715, %v1714
        %v1728 = vpack.c.bf16 %v1717, %v1716
        %v1729 = vpack.c.bf16 %v1719, %v1718
        %v1730 = vpack.c.bf16 %v1721, %v1720
        %v1731 = vpack.c.bf16 %v1723, %v1722
        %s1732 = scalar_lea.vmem [#allocation10], 192
        %v1733 = vld [vmem:[%s1732] sm:$0xf]
        %v1734 = vld [vmem:[%s1732 + $0x4] sm:$0xf]
        %v1735 = vld [vmem:[%s1732 + $0x8] sm:$0xf]
        %v1736 = vld [vmem:[%s1732 + $0xc] sm:$0xf]
        %v1737 = vld [vmem:[%s1732 + $0x10] sm:$0xf]
        %v1738 = vld [vmem:[%s1732 + $0x14] sm:$0xf]
        %v1739 = vld [vmem:[%s1732 + $0x18] sm:$0xf]
        %v1740 = vld [vmem:[%s1732 + $0x1c] sm:$0xf]
        %v1741 = vld [vmem:[%s1732 + $0x20] sm:$0xf]
        %v1742 = vld [vmem:[%s1732 + $0x24] sm:$0xf]
        %v1743 = vld [vmem:[%s1732 + $0x28] sm:$0xf]
        %v1744 = vld [vmem:[%s1732 + $0x2c] sm:$0xf]
        %v1745 = vld [vmem:[%s1732 + $0x30] sm:$0xf]
        %v1746 = vld [vmem:[%s1732 + $0x34] sm:$0xf]
        %v1747 = vld [vmem:[%s1732 + $0x38] sm:$0xf]
        %v1748 = vld [vmem:[%s1732 + $0x3c] sm:$0xf]
        %s1749 = scalar_lea.vmem [#allocation11], 3
        %v1750 = vld [vmem:[%s1749] sm:$0x1]
        %v1752 = vlaneseq
        %v1753 = vshrl.u32 %v1752, 7
        %v1754 = vsub.s32 0, %v1753
        %v1755 = vrot.slane %v1750, %v1754
        %v1773 = vunpack.c.l.b16 %v1733
        %v1774 = vunpack.c.l.b16 %v1734
        %v1775 = vunpack.c.l.b16 %v1735
        %v1776 = vunpack.c.l.b16 %v1736
        %v1777 = vunpack.c.l.b16 %v1737
        %v1778 = vunpack.c.l.b16 %v1738
        %v1779 = vunpack.c.l.b16 %v1739
        %v1780 = vunpack.c.l.b16 %v1740
        %v1781 = vunpack.c.l.b16 %v1741
        %v1782 = vunpack.c.l.b16 %v1742
        %v1783 = vunpack.c.l.b16 %v1743
        %v1784 = vunpack.c.l.b16 %v1744
        %v1785 = vunpack.c.l.b16 %v1745
        %v1786 = vunpack.c.l.b16 %v1746
        %v1787 = vunpack.c.l.b16 %v1747
        %v1788 = vunpack.c.l.b16 %v1748
        %v1789 = vpack.c.b16 %v1774, %v1773
        %v1790 = vpack.c.b16 %v1776, %v1775
        %v1791 = vpack.c.b16 %v1778, %v1777
        %v1792 = vpack.c.b16 %v1780, %v1779
        %v1793 = vpack.c.b16 %v1782, %v1781
        %v1794 = vpack.c.b16 %v1784, %v1783
        %v1795 = vpack.c.b16 %v1786, %v1785
        %v1796 = vpack.c.b16 %v1788, %v1787
        %1805 = vmatprep.subr.bf16.mxu0 0
        %1806 = vmatpush1.bf16.msra.mxu0 %v1789
        %1807 = vmatprep.subr.bf16.mxu0 0
        %1808 = vmatpush1.bf16.msra.mxu0 %v1790
        %1809 = vmatprep.subr.bf16.mxu0 0
        %1810 = vmatpush1.bf16.msra.mxu0 %v1791
        %1811 = vmatprep.subr.bf16.mxu0 0
        %1812 = vmatpush1.bf16.msra.mxu0 %v1792
        %1813 = vmatprep.subr.bf16.mxu0 0
        %1814 = vmatpush1.bf16.msra.mxu0 %v1793
        %1815 = vmatprep.subr.bf16.mxu0 0
        %1816 = vmatpush1.bf16.msra.mxu0 %v1794
        %1817 = vmatprep.subr.bf16.mxu0 0
        %1818 = vmatpush1.bf16.msra.mxu0 %v1795
        %1819 = vmatprep.subr.bf16.mxu0 0
        %1820 = vmatpush1.bf16.msra.mxu0 %v1796
        %1821 = vmatprep.subr.bf16.mxu0 0
        %1822 = vmatpush1.bf16.msra.mxu0 0
        %1823 = vmatprep.subr.bf16.mxu0 0
        %1824 = vmatpush1.bf16.msra.mxu0 0
        %1825 = vmatprep.subr.bf16.mxu0 0
        %1826 = vmatpush1.bf16.msra.mxu0 0
        %1827 = vmatprep.subr.bf16.mxu0 0
        %1828 = vmatpush1.bf16.msra.mxu0 0
        %1829 = vmatprep.subr.bf16.mxu0 0
        %1830 = vmatpush1.bf16.msra.mxu0 0
        %1831 = vmatprep.subr.bf16.mxu0 0
        %1832 = vmatpush1.bf16.msra.mxu0 0
        %1833 = vmatprep.subr.bf16.mxu0 0
        %1834 = vmatpush1.bf16.msra.mxu0 0
        %1835 = vmatprep.subr.bf16.mxu0 0
        %1836 = vmatpush1.bf16.msra.mxu0 0
        %1837 = vmatprep.mubr.bf16.mxu0 0
        %1838 = vmatmul.mubr.bf16.gmra.mrb[0].mxu0 %v1724
        %v1839 = vpop.f32.mrb[0].mxu0
        %v1840 = vadd.f32 %v1755, %v1839
        %v1841 = vpop.f32.mrb[0].mxu0
        %v1842 = vpop.f32.mrb[0].mxu0
        %v1843 = vadd.f32 %v1755, %v1842
        %v1844 = vpop.f32.mrb[0].mxu0
        %1845 = vmatprep.mubr.bf16.mxu0 0
        %1846 = vmatmul.mubr.bf16.gmra.mrb[0].mxu0 %v1725
        %v1847 = vpop.f32.mrb[0].mxu0
        %v1848 = vadd.f32 %v1755, %v1847
        %v1849 = vpop.f32.mrb[0].mxu0
        %v1850 = vpop.f32.mrb[0].mxu0
        %v1851 = vadd.f32 %v1755, %v1850
        %v1852 = vpop.f32.mrb[0].mxu0
        %1853 = vmatprep.mubr.bf16.mxu0 0
        %1854 = vmatmul.mubr.bf16.gmra.mrb[0].mxu0 %v1726
        %v1855 = vpop.f32.mrb[0].mxu0
        %v1856 = vadd.f32 %v1755, %v1855
        %v1857 = vpop.f32.mrb[0].mxu0
        %v1858 = vpop.f32.mrb[0].mxu0
        %v1859 = vadd.f32 %v1755, %v1858
        %v1860 = vpop.f32.mrb[0].mxu0
        %1861 = vmatprep.mubr.bf16.mxu0 0
        %1862 = vmatmul.mubr.bf16.gmra.mrb[0].mxu0 %v1727
        %v1863 = vpop.f32.mrb[0].mxu0
        %v1864 = vadd.f32 %v1755, %v1863
        %v1865 = vpop.f32.mrb[0].mxu0
        %v1866 = vpop.f32.mrb[0].mxu0
        %v1867 = vadd.f32 %v1755, %v1866
        %v1868 = vpop.f32.mrb[0].mxu0
        %1869 = vmatprep.mubr.bf16.mxu0 0
        %1870 = vmatmul.mubr.bf16.gmra.mrb[0].mxu0 %v1728
        %v1871 = vpop.f32.mrb[0].mxu0
        %v1872 = vadd.f32 %v1755, %v1871
        %v1873 = vpop.f32.mrb[0].mxu0
        %v1874 = vpop.f32.mrb[0].mxu0
        %v1875 = vadd.f32 %v1755, %v1874
        %v1876 = vpop.f32.mrb[0].mxu0
        %1877 = vmatprep.mubr.bf16.mxu0 0
        %1878 = vmatmul.mubr.bf16.gmra.mrb[0].mxu0 %v1729
        %v1879 = vpop.f32.mrb[0].mxu0
        %v1880 = vadd.f32 %v1755, %v1879
        %v1881 = vpop.f32.mrb[0].mxu0
        %v1882 = vpop.f32.mrb[0].mxu0
        %v1883 = vadd.f32 %v1755, %v1882
        %v1884 = vpop.f32.mrb[0].mxu0
        %1885 = vmatprep.mubr.bf16.mxu0 0
        %1886 = vmatmul.mubr.bf16.gmra.mrb[0].mxu0 %v1730
        %v1887 = vpop.f32.mrb[0].mxu0
        %v1888 = vadd.f32 %v1755, %v1887
        %v1889 = vpop.f32.mrb[0].mxu0
        %v1890 = vpop.f32.mrb[0].mxu0
        %v1891 = vadd.f32 %v1755, %v1890
        %v1892 = vpop.f32.mrb[0].mxu0
        %1893 = vmatprep.mubr.bf16.mxu0 0
        %1894 = vmatmul.mubr.bf16.gmra.mrb[0].mxu0 %v1731
        %v1895 = vpop.f32.mrb[0].mxu0
        %v1896 = vadd.f32 %v1755, %v1895
        %v1897 = vpop.f32.mrb[0].mxu0
        %v1898 = vpop.f32.mrb[0].mxu0
        %v1899 = vadd.f32 %v1755, %v1898
        %v1900 = vpop.f32.mrb[0].mxu0
        %1901 = vdwg.mxu0
        %v1902 = vmax.f32 %v1840, 0.0
        %v1903 = vmax.f32 %v1843, 0.0
        %v1904 = vmax.f32 %v1848, 0.0
        %v1905 = vmax.f32 %v1851, 0.0
        %v1906 = vmax.f32 %v1856, 0.0
        %v1907 = vmax.f32 %v1859, 0.0
        %v1908 = vmax.f32 %v1864, 0.0
        %v1909 = vmax.f32 %v1867, 0.0
        %v1910 = vmax.f32 %v1872, 0.0
        %v1911 = vmax.f32 %v1875, 0.0
        %v1912 = vmax.f32 %v1880, 0.0
        %v1913 = vmax.f32 %v1883, 0.0
        %v1914 = vmax.f32 %v1888, 0.0
        %v1915 = vmax.f32 %v1891, 0.0
        %v1916 = vmax.f32 %v1896, 0.0
        %v1917 = vmax.f32 %v1899, 0.0
        %v1918 = vpack.c.bf16 %v1903, %v1902
        %v1919 = vpack.c.bf16 %v1905, %v1904
        %v1920 = vpack.c.bf16 %v1907, %v1906
        %v1921 = vpack.c.bf16 %v1909, %v1908
        %v1922 = vpack.c.bf16 %v1911, %v1910
        %v1923 = vpack.c.bf16 %v1913, %v1912
        %v1924 = vpack.c.bf16 %v1915, %v1914
        %v1925 = vpack.c.bf16 %v1917, %v1916
        %s1926 = scalar_lea.vmem [#allocation13], 64
        %v1927 = vld [vmem:[%s1926] sm:$0xf]
        %v1928 = vld [vmem:[%s1926 + $0x4] sm:$0xf]
        %v1929 = vld [vmem:[%s1926 + $0x8] sm:$0xf]
        %v1930 = vld [vmem:[%s1926 + $0xc] sm:$0xf]
        %v1931 = vld [vmem:[%s1926 + $0x10] sm:$0xf]
        %v1932 = vld [vmem:[%s1926 + $0x14] sm:$0xf]
        %v1933 = vld [vmem:[%s1926 + $0x18] sm:$0xf]
        %v1934 = vld [vmem:[%s1926 + $0x1c] sm:$0xf]
        %v1935 = vld [vmem:[%s1926 + $0x20] sm:$0xf]
        %v1936 = vld [vmem:[%s1926 + $0x24] sm:$0xf]
        %v1937 = vld [vmem:[%s1926 + $0x28] sm:$0xf]
        %v1938 = vld [vmem:[%s1926 + $0x2c] sm:$0xf]
        %v1939 = vld [vmem:[%s1926 + $0x30] sm:$0xf]
        %v1940 = vld [vmem:[%s1926 + $0x34] sm:$0xf]
        %v1941 = vld [vmem:[%s1926 + $0x38] sm:$0xf]
        %v1942 = vld [vmem:[%s1926 + $0x3c] sm:$0xf]
        %s1943 = scalar_lea.vmem [#allocation14], 1
        %v1944 = vld [vmem:[%s1943] sm:$0x1]
        %v1946 = vlaneseq
        %v1947 = vshrl.u32 %v1946, 7
        %v1948 = vsub.s32 0, %v1947
        %v1949 = vrot.slane %v1944, %v1948
        %v1967 = vunpack.c.l.b16 %v1927
        %v1968 = vunpack.c.l.b16 %v1928
        %v1969 = vunpack.c.l.b16 %v1929
        %v1970 = vunpack.c.l.b16 %v1930
        %v1971 = vunpack.c.l.b16 %v1931
        %v1972 = vunpack.c.l.b16 %v1932
        %v1973 = vunpack.c.l.b16 %v1933
        %v1974 = vunpack.c.l.b16 %v1934
        %v1975 = vunpack.c.l.b16 %v1935
        %v1976 = vunpack.c.l.b16 %v1936
        %v1977 = vunpack.c.l.b16 %v1937
        %v1978 = vunpack.c.l.b16 %v1938
        %v1979 = vunpack.c.l.b16 %v1939
        %v1980 = vunpack.c.l.b16 %v1940
        %v1981 = vunpack.c.l.b16 %v1941
        %v1982 = vunpack.c.l.b16 %v1942
        %v1983 = vpack.c.b16 %v1968, %v1967
        %v1984 = vpack.c.b16 %v1970, %v1969
        %v1985 = vpack.c.b16 %v1972, %v1971
        %v1986 = vpack.c.b16 %v1974, %v1973
        %v1987 = vpack.c.b16 %v1976, %v1975
        %v1988 = vpack.c.b16 %v1978, %v1977
        %v1989 = vpack.c.b16 %v1980, %v1979
        %v1990 = vpack.c.b16 %v1982, %v1981
        %1999 = vmatprep.subr.bf16.mxu0 0
        %2000 = vmatpush1.bf16.msra.mxu0 %v1983
        %2001 = vmatprep.subr.bf16.mxu0 0
        %2002 = vmatpush1.bf16.msra.mxu0 %v1984
        %2003 = vmatprep.subr.bf16.mxu0 0
        %2004 = vmatpush1.bf16.msra.mxu0 %v1985
        %2005 = vmatprep.subr.bf16.mxu0 0
        %2006 = vmatpush1.bf16.msra.mxu0 %v1986
        %2007 = vmatprep.subr.bf16.mxu0 0
        %2008 = vmatpush1.bf16.msra.mxu0 %v1987
        %2009 = vmatprep.subr.bf16.mxu0 0
        %2010 = vmatpush1.bf16.msra.mxu0 %v1988
        %2011 = vmatprep.subr.bf16.mxu0 0
        %2012 = vmatpush1.bf16.msra.mxu0 %v1989
        %2013 = vmatprep.subr.bf16.mxu0 0
        %2014 = vmatpush1.bf16.msra.mxu0 %v1990
        %2015 = vmatprep.subr.bf16.mxu0 0
        %2016 = vmatpush1.bf16.msra.mxu0 0
        %2017 = vmatprep.subr.bf16.mxu0 0
        %2018 = vmatpush1.bf16.msra.mxu0 0
        %2019 = vmatprep.subr.bf16.mxu0 0
        %2020 = vmatpush1.bf16.msra.mxu0 0
        %2021 = vmatprep.subr.bf16.mxu0 0
        %2022 = vmatpush1.bf16.msra.mxu0 0
        %2023 = vmatprep.subr.bf16.mxu0 0
        %2024 = vmatpush1.bf16.msra.mxu0 0
        %2025 = vmatprep.subr.bf16.mxu0 0
        %2026 = vmatpush1.bf16.msra.mxu0 0
        %2027 = vmatprep.subr.bf16.mxu0 0
        %2028 = vmatpush1.bf16.msra.mxu0 0
        %2029 = vmatprep.subr.bf16.mxu0 0
        %2030 = vmatpush1.bf16.msra.mxu0 0
        %2031 = vmatprep.mubr.bf16.mxu0 0
        %2032 = vmatmul.mubr.bf16.gmra.mrb[0].mxu0 %v1918
        %v2033 = vpop.f32.mrb[0].mxu0
        %v2034 = vadd.f32 %v1949, %v2033
        %v2035 = vpop.f32.mrb[0].mxu0
        %v2036 = vpop.f32.mrb[0].mxu0
        %v2037 = vadd.f32 %v1949, %v2036
        %v2038 = vpop.f32.mrb[0].mxu0
        %2039 = vmatprep.mubr.bf16.mxu0 0
        %2040 = vmatmul.mubr.bf16.gmra.mrb[0].mxu0 %v1919
        %v2041 = vpop.f32.mrb[0].mxu0
        %v2042 = vadd.f32 %v1949, %v2041
        %v2043 = vpop.f32.mrb[0].mxu0
        %v2044 = vpop.f32.mrb[0].mxu0
        %v2045 = vadd.f32 %v1949, %v2044
        %v2046 = vpop.f32.mrb[0].mxu0
        %2047 = vmatprep.mubr.bf16.mxu0 0
        %2048 = vmatmul.mubr.bf16.gmra.mrb[0].mxu0 %v1920
        %v2049 = vpop.f32.mrb[0].mxu0
        %v2050 = vadd.f32 %v1949, %v2049
        %v2051 = vpop.f32.mrb[0].mxu0
        %v2052 = vpop.f32.mrb[0].mxu0
        %v2053 = vadd.f32 %v1949, %v2052
        %v2054 = vpop.f32.mrb[0].mxu0
        %2055 = vmatprep.mubr.bf16.mxu0 0
        %2056 = vmatmul.mubr.bf16.gmra.mrb[0].mxu0 %v1921
        %v2057 = vpop.f32.mrb[0].mxu0
        %v2058 = vadd.f32 %v1949, %v2057
        %v2059 = vpop.f32.mrb[0].mxu0
        %v2060 = vpop.f32.mrb[0].mxu0
        %v2061 = vadd.f32 %v1949, %v2060
        %v2062 = vpop.f32.mrb[0].mxu0
        %2063 = vmatprep.mubr.bf16.mxu0 0
        %2064 = vmatmul.mubr.bf16.gmra.mrb[0].mxu0 %v1922
        %v2065 = vpop.f32.mrb[0].mxu0
        %v2066 = vadd.f32 %v1949, %v2065
        %v2067 = vpop.f32.mrb[0].mxu0
        %v2068 = vpop.f32.mrb[0].mxu0
        %v2069 = vadd.f32 %v1949, %v2068
        %v2070 = vpop.f32.mrb[0].mxu0
        %2071 = vmatprep.mubr.bf16.mxu0 0
        %2072 = vmatmul.mubr.bf16.gmra.mrb[0].mxu0 %v1923
        %v2073 = vpop.f32.mrb[0].mxu0
        %v2074 = vadd.f32 %v1949, %v2073
        %v2075 = vpop.f32.mrb[0].mxu0
        %v2076 = vpop.f32.mrb[0].mxu0
        %v2077 = vadd.f32 %v1949, %v2076
        %v2078 = vpop.f32.mrb[0].mxu0
        %2079 = vmatprep.mubr.bf16.mxu0 0
        %2080 = vmatmul.mubr.bf16.gmra.mrb[0].mxu0 %v1924
        %v2081 = vpop.f32.mrb[0].mxu0
        %v2082 = vadd.f32 %v1949, %v2081
        %v2083 = vpop.f32.mrb[0].mxu0
        %v2084 = vpop.f32.mrb[0].mxu0
        %v2085 = vadd.f32 %v1949, %v2084
        %v2086 = vpop.f32.mrb[0].mxu0
        %2087 = vmatprep.mubr.bf16.mxu0 0
        %2088 = vmatmul.mubr.bf16.gmra.mrb[0].mxu0 %v1925
        %v2089 = vpop.f32.mrb[0].mxu0
        %v2090 = vadd.f32 %v1949, %v2089
        %v2091 = vpop.f32.mrb[0].mxu0
        %v2092 = vpop.f32.mrb[0].mxu0
        %v2093 = vadd.f32 %v1949, %v2092
        %v2094 = vpop.f32.mrb[0].mxu0
        %2095 = vdwg.mxu0
        %v2096 = vadd.f32 %v550, %v2034
        %v2097 = vadd.f32 %v551, %v2037
        %v2098 = vadd.f32 %v552, %v2042
        %v2099 = vadd.f32 %v553, %v2045
        %v2100 = vadd.f32 %v554, %v2050
        %v2101 = vadd.f32 %v555, %v2053
        %v2102 = vadd.f32 %v556, %v2058
        %v2103 = vadd.f32 %v557, %v2061
        %v2104 = vadd.f32 %v558, %v2066
        %v2105 = vadd.f32 %v559, %v2069
        %v2106 = vadd.f32 %v560, %v2074
        %v2107 = vadd.f32 %v561, %v2077
        %v2108 = vadd.f32 %v562, %v2082
        %v2109 = vadd.f32 %v563, %v2085
        %v2110 = vadd.f32 %v564, %v2090
        %v2111 = vadd.f32 %v565, %v2093
        %v2112 = vpack.c.bf16 %v2097, %v2096
        %v2113 = vpack.c.bf16 %v2099, %v2098
        %v2114 = vpack.c.bf16 %v2101, %v2100
        %v2115 = vpack.c.bf16 %v2103, %v2102
        %v2116 = vpack.c.bf16 %v2105, %v2104
        %v2117 = vpack.c.bf16 %v2107, %v2106
        %v2118 = vpack.c.bf16 %v2109, %v2108
        %v2119 = vpack.c.bf16 %v2111, %v2110
        %s2120 = scalar_lea.vmem [#allocation7], 128
        %v2121 = vld [vmem:[%s2120] sm:$0xf]
        %v2122 = vld [vmem:[%s2120 + $0x4] sm:$0xf]
        %v2123 = vld [vmem:[%s2120 + $0x8] sm:$0xf]
        %v2124 = vld [vmem:[%s2120 + $0xc] sm:$0xf]
        %v2125 = vld [vmem:[%s2120 + $0x10] sm:$0xf]
        %v2126 = vld [vmem:[%s2120 + $0x14] sm:$0xf]
        %v2127 = vld [vmem:[%s2120 + $0x18] sm:$0xf]
        %v2128 = vld [vmem:[%s2120 + $0x1c] sm:$0xf]
        %v2129 = vld [vmem:[%s2120 + $0x20] sm:$0xf]
        %v2130 = vld [vmem:[%s2120 + $0x24] sm:$0xf]
        %v2131 = vld [vmem:[%s2120 + $0x28] sm:$0xf]
        %v2132 = vld [vmem:[%s2120 + $0x2c] sm:$0xf]
        %v2133 = vld [vmem:[%s2120 + $0x30] sm:$0xf]
        %v2134 = vld [vmem:[%s2120 + $0x34] sm:$0xf]
        %v2135 = vld [vmem:[%s2120 + $0x38] sm:$0xf]
        %v2136 = vld [vmem:[%s2120 + $0x3c] sm:$0xf]
        %s2137 = scalar_lea.vmem [#allocation8], 2
        %v2138 = vld [vmem:[%s2137] sm:$0x1]
        %v2140 = vlaneseq
        %v2141 = vshrl.u32 %v2140, 7
        %v2142 = vsub.s32 0, %v2141
        %v2143 = vrot.slane %v2138, %v2142
        %v2161 = vunpack.c.l.b16 %v2121
        %v2162 = vunpack.c.l.b16 %v2122
        %v2163 = vunpack.c.l.b16 %v2123
        %v2164 = vunpack.c.l.b16 %v2124
        %v2165 = vunpack.c.l.b16 %v2125
        %v2166 = vunpack.c.l.b16 %v2126
        %v2167 = vunpack.c.l.b16 %v2127
        %v2168 = vunpack.c.l.b16 %v2128
        %v2169 = vunpack.c.l.b16 %v2129
        %v2170 = vunpack.c.l.b16 %v2130
        %v2171 = vunpack.c.l.b16 %v2131
        %v2172 = vunpack.c.l.b16 %v2132
        %v2173 = vunpack.c.l.b16 %v2133
        %v2174 = vunpack.c.l.b16 %v2134
        %v2175 = vunpack.c.l.b16 %v2135
        %v2176 = vunpack.c.l.b16 %v2136
        %v2177 = vpack.c.b16 %v2162, %v2161
        %v2178 = vpack.c.b16 %v2164, %v2163
        %v2179 = vpack.c.b16 %v2166, %v2165
        %v2180 = vpack.c.b16 %v2168, %v2167
        %v2181 = vpack.c.b16 %v2170, %v2169
        %v2182 = vpack.c.b16 %v2172, %v2171
        %v2183 = vpack.c.b16 %v2174, %v2173
        %v2184 = vpack.c.b16 %v2176, %v2175
        %2193 = vmatprep.subr.bf16.mxu0 0
        %2194 = vmatpush1.bf16.msra.mxu0 %v2177
        %2195 = vmatprep.subr.bf16.mxu0 0
        %2196 = vmatpush1.bf16.msra.mxu0 %v2178
        %2197 = vmatprep.subr.bf16.mxu0 0
        %2198 = vmatpush1.bf16.msra.mxu0 %v2179
        %2199 = vmatprep.subr.bf16.mxu0 0
        %2200 = vmatpush1.bf16.msra.mxu0 %v2180
        %2201 = vmatprep.subr.bf16.mxu0 0
        %2202 = vmatpush1.bf16.msra.mxu0 %v2181
        %2203 = vmatprep.subr.bf16.mxu0 0
        %2204 = vmatpush1.bf16.msra.mxu0 %v2182
        %2205 = vmatprep.subr.bf16.mxu0 0
        %2206 = vmatpush1.bf16.msra.mxu0 %v2183
        %2207 = vmatprep.subr.bf16.mxu0 0
        %2208 = vmatpush1.bf16.msra.mxu0 %v2184
        %2209 = vmatprep.subr.bf16.mxu0 0
        %2210 = vmatpush1.bf16.msra.mxu0 0
        %2211 = vmatprep.subr.bf16.mxu0 0
        %2212 = vmatpush1.bf16.msra.mxu0 0
        %2213 = vmatprep.subr.bf16.mxu0 0
        %2214 = vmatpush1.bf16.msra.mxu0 0
        %2215 = vmatprep.subr.bf16.mxu0 0
        %2216 = vmatpush1.bf16.msra.mxu0 0
        %2217 = vmatprep.subr.bf16.mxu0 0
        %2218 = vmatpush1.bf16.msra.mxu0 0
        %2219 = vmatprep.subr.bf16.mxu0 0
        %2220 = vmatpush1.bf16.msra.mxu0 0
        %2221 = vmatprep.subr.bf16.mxu0 0
        %2222 = vmatpush1.bf16.msra.mxu0 0
        %2223 = vmatprep.subr.bf16.mxu0 0
        %2224 = vmatpush1.bf16.msra.mxu0 0
        %2225 = vmatprep.mubr.bf16.mxu0 0
        %2226 = vmatmul.mubr.bf16.gmra.mrb[0].mxu0 %v2112
        %v2227 = vpop.f32.mrb[0].mxu0
        %v2228 = vadd.f32 %v2143, %v2227
        %v2229 = vpop.f32.mrb[0].mxu0
        %v2230 = vpop.f32.mrb[0].mxu0
        %v2231 = vadd.f32 %v2143, %v2230
        %v2232 = vpop.f32.mrb[0].mxu0
        %2233 = vmatprep.mubr.bf16.mxu0 0
        %2234 = vmatmul.mubr.bf16.gmra.mrb[0].mxu0 %v2113
        %v2235 = vpop.f32.mrb[0].mxu0
        %v2236 = vadd.f32 %v2143, %v2235
        %v2237 = vpop.f32.mrb[0].mxu0
        %v2238 = vpop.f32.mrb[0].mxu0
        %v2239 = vadd.f32 %v2143, %v2238
        %v2240 = vpop.f32.mrb[0].mxu0
        %2241 = vmatprep.mubr.bf16.mxu0 0
        %2242 = vmatmul.mubr.bf16.gmra.mrb[0].mxu0 %v2114
        %v2243 = vpop.f32.mrb[0].mxu0
        %v2244 = vadd.f32 %v2143, %v2243
        %v2245 = vpop.f32.mrb[0].mxu0
        %v2246 = vpop.f32.mrb[0].mxu0
        %v2247 = vadd.f32 %v2143, %v2246
        %v2248 = vpop.f32.mrb[0].mxu0
        %2249 = vmatprep.mubr.bf16.mxu0 0
        %2250 = vmatmul.mubr.bf16.gmra.mrb[0].mxu0 %v2115
        %v2251 = vpop.f32.mrb[0].mxu0
        %v2252 = vadd.f32 %v2143, %v2251
        %v2253 = vpop.f32.mrb[0].mxu0
        %v2254 = vpop.f32.mrb[0].mxu0
        %v2255 = vadd.f32 %v2143, %v2254
        %v2256 = vpop.f32.mrb[0].mxu0
        %2257 = vmatprep.mubr.bf16.mxu0 0
        %2258 = vmatmul.mubr.bf16.gmra.mrb[0].mxu0 %v2116
        %v2259 = vpop.f32.mrb[0].mxu0
        %v2260 = vadd.f32 %v2143, %v2259
        %v2261 = vpop.f32.mrb[0].mxu0
        %v2262 = vpop.f32.mrb[0].mxu0
        %v2263 = vadd.f32 %v2143, %v2262
        %v2264 = vpop.f32.mrb[0].mxu0
        %2265 = vmatprep.mubr.bf16.mxu0 0
        %2266 = vmatmul.mubr.bf16.gmra.mrb[0].mxu0 %v2117
        %v2267 = vpop.f32.mrb[0].mxu0
        %v2268 = vadd.f32 %v2143, %v2267
        %v2269 = vpop.f32.mrb[0].mxu0
        %v2270 = vpop.f32.mrb[0].mxu0
        %v2271 = vadd.f32 %v2143, %v2270
        %v2272 = vpop.f32.mrb[0].mxu0
        %2273 = vmatprep.mubr.bf16.mxu0 0
        %2274 = vmatmul.mubr.bf16.gmra.mrb[0].mxu0 %v2118
        %v2275 = vpop.f32.mrb[0].mxu0
        %v2276 = vadd.f32 %v2143, %v2275
        %v2277 = vpop.f32.mrb[0].mxu0
        %v2278 = vpop.f32.mrb[0].mxu0
        %v2279 = vadd.f32 %v2143, %v2278
        %v2280 = vpop.f32.mrb[0].mxu0
        %2281 = vmatprep.mubr.bf16.mxu0 0
        %2282 = vmatmul.mubr.bf16.gmra.mrb[0].mxu0 %v2119
        %v2283 = vpop.f32.mrb[0].mxu0
        %v2284 = vadd.f32 %v2143, %v2283
        %v2285 = vpop.f32.mrb[0].mxu0
        %v2286 = vpop.f32.mrb[0].mxu0
        %v2287 = vadd.f32 %v2143, %v2286
        %v2288 = vpop.f32.mrb[0].mxu0
        %2289 = vdwg.mxu0
        %v2290 = vmax.f32 %v2228, 0.0
        %v2291 = vmax.f32 %v2231, 0.0
        %v2292 = vmax.f32 %v2236, 0.0
        %v2293 = vmax.f32 %v2239, 0.0
        %v2294 = vmax.f32 %v2244, 0.0
        %v2295 = vmax.f32 %v2247, 0.0
        %v2296 = vmax.f32 %v2252, 0.0
        %v2297 = vmax.f32 %v2255, 0.0
        %v2298 = vmax.f32 %v2260, 0.0
        %v2299 = vmax.f32 %v2263, 0.0
        %v2300 = vmax.f32 %v2268, 0.0
        %v2301 = vmax.f32 %v2271, 0.0
        %v2302 = vmax.f32 %v2276, 0.0
        %v2303 = vmax.f32 %v2279, 0.0
        %v2304 = vmax.f32 %v2284, 0.0
        %v2305 = vmax.f32 %v2287, 0.0
        %v2306 = vpack.c.bf16 %v2291, %v2290
        %v2307 = vpack.c.bf16 %v2293, %v2292
        %v2308 = vpack.c.bf16 %v2295, %v2294
        %v2309 = vpack.c.bf16 %v2297, %v2296
        %v2310 = vpack.c.bf16 %v2299, %v2298
        %v2311 = vpack.c.bf16 %v2301, %v2300
        %v2312 = vpack.c.bf16 %v2303, %v2302
        %v2313 = vpack.c.bf16 %v2305, %v2304
        %s2314 = scalar_lea.vmem [#allocation10], 256
        %v2315 = vld [vmem:[%s2314] sm:$0xf]
        %v2316 = vld [vmem:[%s2314 + $0x4] sm:$0xf]
        %v2317 = vld [vmem:[%s2314 + $0x8] sm:$0xf]
        %v2318 = vld [vmem:[%s2314 + $0xc] sm:$0xf]
        %v2319 = vld [vmem:[%s2314 + $0x10] sm:$0xf]
        %v2320 = vld [vmem:[%s2314 + $0x14] sm:$0xf]
        %v2321 = vld [vmem:[%s2314 + $0x18] sm:$0xf]
        %v2322 = vld [vmem:[%s2314 + $0x1c] sm:$0xf]
        %v2323 = vld [vmem:[%s2314 + $0x20] sm:$0xf]
        %v2324 = vld [vmem:[%s2314 + $0x24] sm:$0xf]
        %v2325 = vld [vmem:[%s2314 + $0x28] sm:$0xf]
        %v2326 = vld [vmem:[%s2314 + $0x2c] sm:$0xf]
        %v2327 = vld [vmem:[%s2314 + $0x30] sm:$0xf]
        %v2328 = vld [vmem:[%s2314 + $0x34] sm:$0xf]
        %v2329 = vld [vmem:[%s2314 + $0x38] sm:$0xf]
        %v2330 = vld [vmem:[%s2314 + $0x3c] sm:$0xf]
        %s2331 = scalar_lea.vmem [#allocation11], 4
        %v2332 = vld [vmem:[%s2331] sm:$0x1]
        %v2334 = vlaneseq
        %v2335 = vshrl.u32 %v2334, 7
        %v2336 = vsub.s32 0, %v2335
        %v2337 = vrot.slane %v2332, %v2336
        %v2355 = vunpack.c.l.b16 %v2315
        %v2356 = vunpack.c.l.b16 %v2316
        %v2357 = vunpack.c.l.b16 %v2317
        %v2358 = vunpack.c.l.b16 %v2318
        %v2359 = vunpack.c.l.b16 %v2319
        %v2360 = vunpack.c.l.b16 %v2320
        %v2361 = vunpack.c.l.b16 %v2321
        %v2362 = vunpack.c.l.b16 %v2322
        %v2363 = vunpack.c.l.b16 %v2323
        %v2364 = vunpack.c.l.b16 %v2324
        %v2365 = vunpack.c.l.b16 %v2325
        %v2366 = vunpack.c.l.b16 %v2326
        %v2367 = vunpack.c.l.b16 %v2327
        %v2368 = vunpack.c.l.b16 %v2328
        %v2369 = vunpack.c.l.b16 %v2329
        %v2370 = vunpack.c.l.b16 %v2330
        %v2371 = vpack.c.b16 %v2356, %v2355
        %v2372 = vpack.c.b16 %v2358, %v2357
        %v2373 = vpack.c.b16 %v2360, %v2359
        %v2374 = vpack.c.b16 %v2362, %v2361
        %v2375 = vpack.c.b16 %v2364, %v2363
        %v2376 = vpack.c.b16 %v2366, %v2365
        %v2377 = vpack.c.b16 %v2368, %v2367
        %v2378 = vpack.c.b16 %v2370, %v2369
        %2387 = vmatprep.subr.bf16.mxu0 0
        %2388 = vmatpush1.bf16.msra.mxu0 %v2371
        %2389 = vmatprep.subr.bf16.mxu0 0
        %2390 = vmatpush1.bf16.msra.mxu0 %v2372
        %2391 = vmatprep.subr.bf16.mxu0 0
        %2392 = vmatpush1.bf16.msra.mxu0 %v2373
        %2393 = vmatprep.subr.bf16.mxu0 0
        %2394 = vmatpush1.bf16.msra.mxu0 %v2374
        %2395 = vmatprep.subr.bf16.mxu0 0
        %2396 = vmatpush1.bf16.msra.mxu0 %v2375
        %2397 = vmatprep.subr.bf16.mxu0 0
        %2398 = vmatpush1.bf16.msra.mxu0 %v2376
        %2399 = vmatprep.subr.bf16.mxu0 0
        %2400 = vmatpush1.bf16.msra.mxu0 %v2377
        %2401 = vmatprep.subr.bf16.mxu0 0
        %2402 = vmatpush1.bf16.msra.mxu0 %v2378
        %2403 = vmatprep.subr.bf16.mxu0 0
        %2404 = vmatpush1.bf16.msra.mxu0 0
        %2405 = vmatprep.subr.bf16.mxu0 0
        %2406 = vmatpush1.bf16.msra.mxu0 0
        %2407 = vmatprep.subr.bf16.mxu0 0
        %2408 = vmatpush1.bf16.msra.mxu0 0
        %2409 = vmatprep.subr.bf16.mxu0 0
        %2410 = vmatpush1.bf16.msra.mxu0 0
        %2411 = vmatprep.subr.bf16.mxu0 0
        %2412 = vmatpush1.bf16.msra.mxu0 0
        %2413 = vmatprep.subr.bf16.mxu0 0
        %2414 = vmatpush1.bf16.msra.mxu0 0
        %2415 = vmatprep.subr.bf16.mxu0 0
        %2416 = vmatpush1.bf16.msra.mxu0 0
        %2417 = vmatprep.subr.bf16.mxu0 0
        %2418 = vmatpush1.bf16.msra.mxu0 0
        %2419 = vmatprep.mubr.bf16.mxu0 0
        %2420 = vmatmul.mubr.bf16.gmra.mrb[0].mxu0 %v2306
        %v2421 = vpop.f32.mrb[0].mxu0
        %v2422 = vadd.f32 %v2337, %v2421
        %v2423 = vpop.f32.mrb[0].mxu0
        %v2424 = vpop.f32.mrb[0].mxu0
        %v2425 = vadd.f32 %v2337, %v2424
        %v2426 = vpop.f32.mrb[0].mxu0
        %2427 = vmatprep.mubr.bf16.mxu0 0
        %2428 = vmatmul.mubr.bf16.gmra.mrb[0].mxu0 %v2307
        %v2429 = vpop.f32.mrb[0].mxu0
        %v2430 = vadd.f32 %v2337, %v2429
        %v2431 = vpop.f32.mrb[0].mxu0
        %v2432 = vpop.f32.mrb[0].mxu0
        %v2433 = vadd.f32 %v2337, %v2432
        %v2434 = vpop.f32.mrb[0].mxu0
        %2435 = vmatprep.mubr.bf16.mxu0 0
        %2436 = vmatmul.mubr.bf16.gmra.mrb[0].mxu0 %v2308
        %v2437 = vpop.f32.mrb[0].mxu0
        %v2438 = vadd.f32 %v2337, %v2437
        %v2439 = vpop.f32.mrb[0].mxu0
        %v2440 = vpop.f32.mrb[0].mxu0
        %v2441 = vadd.f32 %v2337, %v2440
        %v2442 = vpop.f32.mrb[0].mxu0
        %2443 = vmatprep.mubr.bf16.mxu0 0
        %2444 = vmatmul.mubr.bf16.gmra.mrb[0].mxu0 %v2309
        %v2445 = vpop.f32.mrb[0].mxu0
        %v2446 = vadd.f32 %v2337, %v2445
        %v2447 = vpop.f32.mrb[0].mxu0
        %v2448 = vpop.f32.mrb[0].mxu0
        %v2449 = vadd.f32 %v2337, %v2448
        %v2450 = vpop.f32.mrb[0].mxu0
        %2451 = vmatprep.mubr.bf16.mxu0 0
        %2452 = vmatmul.mubr.bf16.gmra.mrb[0].mxu0 %v2310
        %v2453 = vpop.f32.mrb[0].mxu0
        %v2454 = vadd.f32 %v2337, %v2453
        %v2455 = vpop.f32.mrb[0].mxu0
        %v2456 = vpop.f32.mrb[0].mxu0
        %v2457 = vadd.f32 %v2337, %v2456
        %v2458 = vpop.f32.mrb[0].mxu0
        %2459 = vmatprep.mubr.bf16.mxu0 0
        %2460 = vmatmul.mubr.bf16.gmra.mrb[0].mxu0 %v2311
        %v2461 = vpop.f32.mrb[0].mxu0
        %v2462 = vadd.f32 %v2337, %v2461
        %v2463 = vpop.f32.mrb[0].mxu0
        %v2464 = vpop.f32.mrb[0].mxu0
        %v2465 = vadd.f32 %v2337, %v2464
        %v2466 = vpop.f32.mrb[0].mxu0
        %2467 = vmatprep.mubr.bf16.mxu0 0
        %2468 = vmatmul.mubr.bf16.gmra.mrb[0].mxu0 %v2312
        %v2469 = vpop.f32.mrb[0].mxu0
        %v2470 = vadd.f32 %v2337, %v2469
        %v2471 = vpop.f32.mrb[0].mxu0
        %v2472 = vpop.f32.mrb[0].mxu0
        %v2473 = vadd.f32 %v2337, %v2472
        %v2474 = vpop.f32.mrb[0].mxu0
        %2475 = vmatprep.mubr.bf16.mxu0 0
        %2476 = vmatmul.mubr.bf16.gmra.mrb[0].mxu0 %v2313
        %v2477 = vpop.f32.mrb[0].mxu0
        %v2478 = vadd.f32 %v2337, %v2477
        %v2479 = vpop.f32.mrb[0].mxu0
        %v2480 = vpop.f32.mrb[0].mxu0
        %v2481 = vadd.f32 %v2337, %v2480
        %v2482 = vpop.f32.mrb[0].mxu0
        %2483 = vdwg.mxu0
        %v2484 = vmax.f32 %v2422, 0.0
        %v2485 = vmax.f32 %v2425, 0.0
        %v2486 = vmax.f32 %v2430, 0.0
        %v2487 = vmax.f32 %v2433, 0.0
        %v2488 = vmax.f32 %v2438, 0.0
        %v2489 = vmax.f32 %v2441, 0.0
        %v2490 = vmax.f32 %v2446, 0.0
        %v2491 = vmax.f32 %v2449, 0.0
        %v2492 = vmax.f32 %v2454, 0.0
        %v2493 = vmax.f32 %v2457, 0.0
        %v2494 = vmax.f32 %v2462, 0.0
        %v2495 = vmax.f32 %v2465, 0.0
        %v2496 = vmax.f32 %v2470, 0.0
        %v2497 = vmax.f32 %v2473, 0.0
        %v2498 = vmax.f32 %v2478, 0.0
        %v2499 = vmax.f32 %v2481, 0.0
        %v2500 = vpack.c.bf16 %v2485, %v2484
        %v2501 = vpack.c.bf16 %v2487, %v2486
        %v2502 = vpack.c.bf16 %v2489, %v2488
        %v2503 = vpack.c.bf16 %v2491, %v2490
        %v2504 = vpack.c.bf16 %v2493, %v2492
        %v2505 = vpack.c.bf16 %v2495, %v2494
        %v2506 = vpack.c.bf16 %v2497, %v2496
        %v2507 = vpack.c.bf16 %v2499, %v2498
        %s2508 = scalar_lea.vmem [#allocation10], 320
        %v2509 = vld [vmem:[%s2508] sm:$0xf]
        %v2510 = vld [vmem:[%s2508 + $0x4] sm:$0xf]
        %v2511 = vld [vmem:[%s2508 + $0x8] sm:$0xf]
        %v2512 = vld [vmem:[%s2508 + $0xc] sm:$0xf]
        %v2513 = vld [vmem:[%s2508 + $0x10] sm:$0xf]
        %v2514 = vld [vmem:[%s2508 + $0x14] sm:$0xf]
        %v2515 = vld [vmem:[%s2508 + $0x18] sm:$0xf]
        %v2516 = vld [vmem:[%s2508 + $0x1c] sm:$0xf]
        %v2517 = vld [vmem:[%s2508 + $0x20] sm:$0xf]
        %v2518 = vld [vmem:[%s2508 + $0x24] sm:$0xf]
        %v2519 = vld [vmem:[%s2508 + $0x28] sm:$0xf]
        %v2520 = vld [vmem:[%s2508 + $0x2c] sm:$0xf]
        %v2521 = vld [vmem:[%s2508 + $0x30] sm:$0xf]
        %v2522 = vld [vmem:[%s2508 + $0x34] sm:$0xf]
        %v2523 = vld [vmem:[%s2508 + $0x38] sm:$0xf]
        %v2524 = vld [vmem:[%s2508 + $0x3c] sm:$0xf]
        %s2525 = scalar_lea.vmem [#allocation11], 5
        %v2526 = vld [vmem:[%s2525] sm:$0x1]
        %v2528 = vlaneseq
        %v2529 = vshrl.u32 %v2528, 7
        %v2530 = vsub.s32 0, %v2529
        %v2531 = vrot.slane %v2526, %v2530
        %v2549 = vunpack.c.l.b16 %v2509
        %v2550 = vunpack.c.l.b16 %v2510
        %v2551 = vunpack.c.l.b16 %v2511
        %v2552 = vunpack.c.l.b16 %v2512
        %v2553 = vunpack.c.l.b16 %v2513
        %v2554 = vunpack.c.l.b16 %v2514
        %v2555 = vunpack.c.l.b16 %v2515
        %v2556 = vunpack.c.l.b16 %v2516
        %v2557 = vunpack.c.l.b16 %v2517
        %v2558 = vunpack.c.l.b16 %v2518
        %v2559 = vunpack.c.l.b16 %v2519
        %v2560 = vunpack.c.l.b16 %v2520
        %v2561 = vunpack.c.l.b16 %v2521
        %v2562 = vunpack.c.l.b16 %v2522
        %v2563 = vunpack.c.l.b16 %v2523
        %v2564 = vunpack.c.l.b16 %v2524
        %v2565 = vpack.c.b16 %v2550, %v2549
        %v2566 = vpack.c.b16 %v2552, %v2551
        %v2567 = vpack.c.b16 %v2554, %v2553
        %v2568 = vpack.c.b16 %v2556, %v2555
        %v2569 = vpack.c.b16 %v2558, %v2557
        %v2570 = vpack.c.b16 %v2560, %v2559
        %v2571 = vpack.c.b16 %v2562, %v2561
        %v2572 = vpack.c.b16 %v2564, %v2563
        %2581 = vmatprep.subr.bf16.mxu0 0
        %2582 = vmatpush1.bf16.msra.mxu0 %v2565
        %2583 = vmatprep.subr.bf16.mxu0 0
        %2584 = vmatpush1.bf16.msra.mxu0 %v2566
        %2585 = vmatprep.subr.bf16.mxu0 0
        %2586 = vmatpush1.bf16.msra.mxu0 %v2567
        %2587 = vmatprep.subr.bf16.mxu0 0
        %2588 = vmatpush1.bf16.msra.mxu0 %v2568
        %2589 = vmatprep.subr.bf16.mxu0 0
        %2590 = vmatpush1.bf16.msra.mxu0 %v2569
        %2591 = vmatprep.subr.bf16.mxu0 0
        %2592 = vmatpush1.bf16.msra.mxu0 %v2570
        %2593 = vmatprep.subr.bf16.mxu0 0
        %2594 = vmatpush1.bf16.msra.mxu0 %v2571
        %2595 = vmatprep.subr.bf16.mxu0 0
        %2596 = vmatpush1.bf16.msra.mxu0 %v2572
        %2597 = vmatprep.subr.bf16.mxu0 0
        %2598 = vmatpush1.bf16.msra.mxu0 0
        %2599 = vmatprep.subr.bf16.mxu0 0
        %2600 = vmatpush1.bf16.msra.mxu0 0
        %2601 = vmatprep.subr.bf16.mxu0 0
        %2602 = vmatpush1.bf16.msra.mxu0 0
        %2603 = vmatprep.subr.bf16.mxu0 0
        %2604 = vmatpush1.bf16.msra.mxu0 0
        %2605 = vmatprep.subr.bf16.mxu0 0
        %2606 = vmatpush1.bf16.msra.mxu0 0
        %2607 = vmatprep.subr.bf16.mxu0 0
        %2608 = vmatpush1.bf16.msra.mxu0 0
        %2609 = vmatprep.subr.bf16.mxu0 0
        %2610 = vmatpush1.bf16.msra.mxu0 0
        %2611 = vmatprep.subr.bf16.mxu0 0
        %2612 = vmatpush1.bf16.msra.mxu0 0
        %2613 = vmatprep.mubr.bf16.mxu0 0
        %2614 = vmatmul.mubr.bf16.gmra.mrb[0].mxu0 %v2500
        %v2615 = vpop.f32.mrb[0].mxu0
        %v2616 = vadd.f32 %v2531, %v2615
        %v2617 = vpop.f32.mrb[0].mxu0
        %v2618 = vpop.f32.mrb[0].mxu0
        %v2619 = vadd.f32 %v2531, %v2618
        %v2620 = vpop.f32.mrb[0].mxu0
        %2621 = vmatprep.mubr.bf16.mxu0 0
        %2622 = vmatmul.mubr.bf16.gmra.mrb[0].mxu0 %v2501
        %v2623 = vpop.f32.mrb[0].mxu0
        %v2624 = vadd.f32 %v2531, %v2623
        %v2625 = vpop.f32.mrb[0].mxu0
        %v2626 = vpop.f32.mrb[0].mxu0
        %v2627 = vadd.f32 %v2531, %v2626
        %v2628 = vpop.f32.mrb[0].mxu0
        %2629 = vmatprep.mubr.bf16.mxu0 0
        %2630 = vmatmul.mubr.bf16.gmra.mrb[0].mxu0 %v2502
        %v2631 = vpop.f32.mrb[0].mxu0
        %v2632 = vadd.f32 %v2531, %v2631
        %v2633 = vpop.f32.mrb[0].mxu0
        %v2634 = vpop.f32.mrb[0].mxu0
        %v2635 = vadd.f32 %v2531, %v2634
        %v2636 = vpop.f32.mrb[0].mxu0
        %2637 = vmatprep.mubr.bf16.mxu0 0
        %2638 = vmatmul.mubr.bf16.gmra.mrb[0].mxu0 %v2503
        %v2639 = vpop.f32.mrb[0].mxu0
        %v2640 = vadd.f32 %v2531, %v2639
        %v2641 = vpop.f32.mrb[0].mxu0
        %v2642 = vpop.f32.mrb[0].mxu0
        %v2643 = vadd.f32 %v2531, %v2642
        %v2644 = vpop.f32.mrb[0].mxu0
        %2645 = vmatprep.mubr.bf16.mxu0 0
        %2646 = vmatmul.mubr.bf16.gmra.mrb[0].mxu0 %v2504
        %v2647 = vpop.f32.mrb[0].mxu0
        %v2648 = vadd.f32 %v2531, %v2647
        %v2649 = vpop.f32.mrb[0].mxu0
        %v2650 = vpop.f32.mrb[0].mxu0
        %v2651 = vadd.f32 %v2531, %v2650
        %v2652 = vpop.f32.mrb[0].mxu0
        %2653 = vmatprep.mubr.bf16.mxu0 0
        %2654 = vmatmul.mubr.bf16.gmra.mrb[0].mxu0 %v2505
        %v2655 = vpop.f32.mrb[0].mxu0
        %v2656 = vadd.f32 %v2531, %v2655
        %v2657 = vpop.f32.mrb[0].mxu0
        %v2658 = vpop.f32.mrb[0].mxu0
        %v2659 = vadd.f32 %v2531, %v2658
        %v2660 = vpop.f32.mrb[0].mxu0
        %2661 = vmatprep.mubr.bf16.mxu0 0
        %2662 = vmatmul.mubr.bf16.gmra.mrb[0].mxu0 %v2506
        %v2663 = vpop.f32.mrb[0].mxu0
        %v2664 = vadd.f32 %v2531, %v2663
        %v2665 = vpop.f32.mrb[0].mxu0
        %v2666 = vpop.f32.mrb[0].mxu0
        %v2667 = vadd.f32 %v2531, %v2666
        %v2668 = vpop.f32.mrb[0].mxu0
        %2669 = vmatprep.mubr.bf16.mxu0 0
        %2670 = vmatmul.mubr.bf16.gmra.mrb[0].mxu0 %v2507
        %v2671 = vpop.f32.mrb[0].mxu0
        %v2672 = vadd.f32 %v2531, %v2671
        %v2673 = vpop.f32.mrb[0].mxu0
        %v2674 = vpop.f32.mrb[0].mxu0
        %v2675 = vadd.f32 %v2531, %v2674
        %v2676 = vpop.f32.mrb[0].mxu0
        %2677 = vdwg.mxu0
        %v2678 = vmax.f32 %v2616, 0.0
        %v2679 = vmax.f32 %v2619, 0.0
        %v2680 = vmax.f32 %v2624, 0.0
        %v2681 = vmax.f32 %v2627, 0.0
        %v2682 = vmax.f32 %v2632, 0.0
        %v2683 = vmax.f32 %v2635, 0.0
        %v2684 = vmax.f32 %v2640, 0.0
        %v2685 = vmax.f32 %v2643, 0.0
        %v2686 = vmax.f32 %v2648, 0.0
        %v2687 = vmax.f32 %v2651, 0.0
        %v2688 = vmax.f32 %v2656, 0.0
        %v2689 = vmax.f32 %v2659, 0.0
        %v2690 = vmax.f32 %v2664, 0.0
        %v2691 = vmax.f32 %v2667, 0.0
        %v2692 = vmax.f32 %v2672, 0.0
        %v2693 = vmax.f32 %v2675, 0.0
        %v2694 = vpack.c.bf16 %v2679, %v2678
        %v2695 = vpack.c.bf16 %v2681, %v2680
        %v2696 = vpack.c.bf16 %v2683, %v2682
        %v2697 = vpack.c.bf16 %v2685, %v2684
        %v2698 = vpack.c.bf16 %v2687, %v2686
        %v2699 = vpack.c.bf16 %v2689, %v2688
        %v2700 = vpack.c.bf16 %v2691, %v2690
        %v2701 = vpack.c.bf16 %v2693, %v2692
        %s2702 = scalar_lea.vmem [#allocation13], 128
        %v2703 = vld [vmem:[%s2702] sm:$0xf]
        %v2704 = vld [vmem:[%s2702 + $0x4] sm:$0xf]
        %v2705 = vld [vmem:[%s2702 + $0x8] sm:$0xf]
        %v2706 = vld [vmem:[%s2702 + $0xc] sm:$0xf]
        %v2707 = vld [vmem:[%s2702 + $0x10] sm:$0xf]
        %v2708 = vld [vmem:[%s2702 + $0x14] sm:$0xf]
        %v2709 = vld [vmem:[%s2702 + $0x18] sm:$0xf]
        %v2710 = vld [vmem:[%s2702 + $0x1c] sm:$0xf]
        %v2711 = vld [vmem:[%s2702 + $0x20] sm:$0xf]
        %v2712 = vld [vmem:[%s2702 + $0x24] sm:$0xf]
        %v2713 = vld [vmem:[%s2702 + $0x28] sm:$0xf]
        %v2714 = vld [vmem:[%s2702 + $0x2c] sm:$0xf]
        %v2715 = vld [vmem:[%s2702 + $0x30] sm:$0xf]
        %v2716 = vld [vmem:[%s2702 + $0x34] sm:$0xf]
        %v2717 = vld [vmem:[%s2702 + $0x38] sm:$0xf]
        %v2718 = vld [vmem:[%s2702 + $0x3c] sm:$0xf]
        %s2719 = scalar_lea.vmem [#allocation14], 2
        %v2720 = vld [vmem:[%s2719] sm:$0x1]
        %v2722 = vlaneseq
        %v2723 = vshrl.u32 %v2722, 7
        %v2724 = vsub.s32 0, %v2723
        %v2725 = vrot.slane %v2720, %v2724
        %v2743 = vunpack.c.l.b16 %v2703
        %v2744 = vunpack.c.l.b16 %v2704
        %v2745 = vunpack.c.l.b16 %v2705
        %v2746 = vunpack.c.l.b16 %v2706
        %v2747 = vunpack.c.l.b16 %v2707
        %v2748 = vunpack.c.l.b16 %v2708
        %v2749 = vunpack.c.l.b16 %v2709
        %v2750 = vunpack.c.l.b16 %v2710
        %v2751 = vunpack.c.l.b16 %v2711
        %v2752 = vunpack.c.l.b16 %v2712
        %v2753 = vunpack.c.l.b16 %v2713
        %v2754 = vunpack.c.l.b16 %v2714
        %v2755 = vunpack.c.l.b16 %v2715
        %v2756 = vunpack.c.l.b16 %v2716
        %v2757 = vunpack.c.l.b16 %v2717
        %v2758 = vunpack.c.l.b16 %v2718
        %v2759 = vpack.c.b16 %v2744, %v2743
        %v2760 = vpack.c.b16 %v2746, %v2745
        %v2761 = vpack.c.b16 %v2748, %v2747
        %v2762 = vpack.c.b16 %v2750, %v2749
        %v2763 = vpack.c.b16 %v2752, %v2751
        %v2764 = vpack.c.b16 %v2754, %v2753
        %v2765 = vpack.c.b16 %v2756, %v2755
        %v2766 = vpack.c.b16 %v2758, %v2757
        %2775 = vmatprep.subr.bf16.mxu0 0
        %2776 = vmatpush1.bf16.msra.mxu0 %v2759
        %2777 = vmatprep.subr.bf16.mxu0 0
        %2778 = vmatpush1.bf16.msra.mxu0 %v2760
        %2779 = vmatprep.subr.bf16.mxu0 0
        %2780 = vmatpush1.bf16.msra.mxu0 %v2761
        %2781 = vmatprep.subr.bf16.mxu0 0
        %2782 = vmatpush1.bf16.msra.mxu0 %v2762
        %2783 = vmatprep.subr.bf16.mxu0 0
        %2784 = vmatpush1.bf16.msra.mxu0 %v2763
        %2785 = vmatprep.subr.bf16.mxu0 0
        %2786 = vmatpush1.bf16.msra.mxu0 %v2764
        %2787 = vmatprep.subr.bf16.mxu0 0
        %2788 = vmatpush1.bf16.msra.mxu0 %v2765
        %2789 = vmatprep.subr.bf16.mxu0 0
        %2790 = vmatpush1.bf16.msra.mxu0 %v2766
        %2791 = vmatprep.subr.bf16.mxu0 0
        %2792 = vmatpush1.bf16.msra.mxu0 0
        %2793 = vmatprep.subr.bf16.mxu0 0
        %2794 = vmatpush1.bf16.msra.mxu0 0
        %2795 = vmatprep.subr.bf16.mxu0 0
        %2796 = vmatpush1.bf16.msra.mxu0 0
        %2797 = vmatprep.subr.bf16.mxu0 0
        %2798 = vmatpush1.bf16.msra.mxu0 0
        %2799 = vmatprep.subr.bf16.mxu0 0
        %2800 = vmatpush1.bf16.msra.mxu0 0
        %2801 = vmatprep.subr.bf16.mxu0 0
        %2802 = vmatpush1.bf16.msra.mxu0 0
        %2803 = vmatprep.subr.bf16.mxu0 0
        %2804 = vmatpush1.bf16.msra.mxu0 0
        %2805 = vmatprep.subr.bf16.mxu0 0
        %2806 = vmatpush1.bf16.msra.mxu0 0
        %2807 = vmatprep.mubr.bf16.mxu0 0
        %2808 = vmatmul.mubr.bf16.gmra.mrb[0].mxu0 %v2694
        %v2809 = vpop.f32.mrb[0].mxu0
        %v2810 = vadd.f32 %v2725, %v2809
        %v2811 = vpop.f32.mrb[0].mxu0
        %v2812 = vpop.f32.mrb[0].mxu0
        %v2813 = vadd.f32 %v2725, %v2812
        %v2814 = vpop.f32.mrb[0].mxu0
        %2815 = vmatprep.mubr.bf16.mxu0 0
        %2816 = vmatmul.mubr.bf16.gmra.mrb[0].mxu0 %v2695
        %v2817 = vpop.f32.mrb[0].mxu0
        %v2818 = vadd.f32 %v2725, %v2817
        %v2819 = vpop.f32.mrb[0].mxu0
        %v2820 = vpop.f32.mrb[0].mxu0
        %v2821 = vadd.f32 %v2725, %v2820
        %v2822 = vpop.f32.mrb[0].mxu0
        %2823 = vmatprep.mubr.bf16.mxu0 0
        %2824 = vmatmul.mubr.bf16.gmra.mrb[0].mxu0 %v2696
        %v2825 = vpop.f32.mrb[0].mxu0
        %v2826 = vadd.f32 %v2725, %v2825
        %v2827 = vpop.f32.mrb[0].mxu0
        %v2828 = vpop.f32.mrb[0].mxu0
        %v2829 = vadd.f32 %v2725, %v2828
        %v2830 = vpop.f32.mrb[0].mxu0
        %2831 = vmatprep.mubr.bf16.mxu0 0
        %2832 = vmatmul.mubr.bf16.gmra.mrb[0].mxu0 %v2697
        %v2833 = vpop.f32.mrb[0].mxu0
        %v2834 = vadd.f32 %v2725, %v2833
        %v2835 = vpop.f32.mrb[0].mxu0
        %v2836 = vpop.f32.mrb[0].mxu0
        %v2837 = vadd.f32 %v2725, %v2836
        %v2838 = vpop.f32.mrb[0].mxu0
        %2839 = vmatprep.mubr.bf16.mxu0 0
        %2840 = vmatmul.mubr.bf16.gmra.mrb[0].mxu0 %v2698
        %v2841 = vpop.f32.mrb[0].mxu0
        %v2842 = vadd.f32 %v2725, %v2841
        %v2843 = vpop.f32.mrb[0].mxu0
        %v2844 = vpop.f32.mrb[0].mxu0
        %v2845 = vadd.f32 %v2725, %v2844
        %v2846 = vpop.f32.mrb[0].mxu0
        %2847 = vmatprep.mubr.bf16.mxu0 0
        %2848 = vmatmul.mubr.bf16.gmra.mrb[0].mxu0 %v2699
        %v2849 = vpop.f32.mrb[0].mxu0
        %v2850 = vadd.f32 %v2725, %v2849
        %v2851 = vpop.f32.mrb[0].mxu0
        %v2852 = vpop.f32.mrb[0].mxu0
        %v2853 = vadd.f32 %v2725, %v2852
        %v2854 = vpop.f32.mrb[0].mxu0
        %2855 = vmatprep.mubr.bf16.mxu0 0
        %2856 = vmatmul.mubr.bf16.gmra.mrb[0].mxu0 %v2700
        %v2857 = vpop.f32.mrb[0].mxu0
        %v2858 = vadd.f32 %v2725, %v2857
        %v2859 = vpop.f32.mrb[0].mxu0
        %v2860 = vpop.f32.mrb[0].mxu0
        %v2861 = vadd.f32 %v2725, %v2860
        %v2862 = vpop.f32.mrb[0].mxu0
        %2863 = vmatprep.mubr.bf16.mxu0 0
        %2864 = vmatmul.mubr.bf16.gmra.mrb[0].mxu0 %v2701
        %v2865 = vpop.f32.mrb[0].mxu0
        %v2866 = vadd.f32 %v2725, %v2865
        %v2867 = vpop.f32.mrb[0].mxu0
        %v2868 = vpop.f32.mrb[0].mxu0
        %v2869 = vadd.f32 %v2725, %v2868
        %v2870 = vpop.f32.mrb[0].mxu0
        %2871 = vdwg.mxu0
        %v2872 = vadd.f32 %v1320, %v2810
        %v2873 = vadd.f32 %v1321, %v2813
        %v2874 = vadd.f32 %v1322, %v2818
        %v2875 = vadd.f32 %v1323, %v2821
        %v2876 = vadd.f32 %v1324, %v2826
        %v2877 = vadd.f32 %v1325, %v2829
        %v2878 = vadd.f32 %v1326, %v2834
        %v2879 = vadd.f32 %v1327, %v2837
        %v2880 = vadd.f32 %v1328, %v2842
        %v2881 = vadd.f32 %v1329, %v2845
        %v2882 = vadd.f32 %v1330, %v2850
        %v2883 = vadd.f32 %v1331, %v2853
        %v2884 = vadd.f32 %v1332, %v2858
        %v2885 = vadd.f32 %v1333, %v2861
        %v2886 = vadd.f32 %v1334, %v2866
        %v2887 = vadd.f32 %v1335, %v2869
        %v2888 = vpack.c.bf16 %v2873, %v2872
        %v2889 = vpack.c.bf16 %v2875, %v2874
        %v2890 = vpack.c.bf16 %v2877, %v2876
        %v2891 = vpack.c.bf16 %v2879, %v2878
        %v2892 = vpack.c.bf16 %v2881, %v2880
        %v2893 = vpack.c.bf16 %v2883, %v2882
        %v2894 = vpack.c.bf16 %v2885, %v2884
        %v2895 = vpack.c.bf16 %v2887, %v2886
        %s2896 = scalar_lea.vmem [#allocation7], 192
        %v2897 = vld [vmem:[%s2896] sm:$0xf]
        %v2898 = vld [vmem:[%s2896 + $0x4] sm:$0xf]
        %v2899 = vld [vmem:[%s2896 + $0x8] sm:$0xf]
        %v2900 = vld [vmem:[%s2896 + $0xc] sm:$0xf]
        %v2901 = vld [vmem:[%s2896 + $0x10] sm:$0xf]
        %v2902 = vld [vmem:[%s2896 + $0x14] sm:$0xf]
        %v2903 = vld [vmem:[%s2896 + $0x18] sm:$0xf]
        %v2904 = vld [vmem:[%s2896 + $0x1c] sm:$0xf]
        %v2905 = vld [vmem:[%s2896 + $0x20] sm:$0xf]
        %v2906 = vld [vmem:[%s2896 + $0x24] sm:$0xf]
        %v2907 = vld [vmem:[%s2896 + $0x28] sm:$0xf]
        %v2908 = vld [vmem:[%s2896 + $0x2c] sm:$0xf]
        %v2909 = vld [vmem:[%s2896 + $0x30] sm:$0xf]
        %v2910 = vld [vmem:[%s2896 + $0x34] sm:$0xf]
        %v2911 = vld [vmem:[%s2896 + $0x38] sm:$0xf]
        %v2912 = vld [vmem:[%s2896 + $0x3c] sm:$0xf]
        %s2913 = scalar_lea.vmem [#allocation8], 3
        %v2914 = vld [vmem:[%s2913] sm:$0x1]
        %v2916 = vlaneseq
        %v2917 = vshrl.u32 %v2916, 7
        %v2918 = vsub.s32 0, %v2917
        %v2919 = vrot.slane %v2914, %v2918
        %v2937 = vunpack.c.l.b16 %v2897
        %v2938 = vunpack.c.l.b16 %v2898
        %v2939 = vunpack.c.l.b16 %v2899
        %v2940 = vunpack.c.l.b16 %v2900
        %v2941 = vunpack.c.l.b16 %v2901
        %v2942 = vunpack.c.l.b16 %v2902
        %v2943 = vunpack.c.l.b16 %v2903
        %v2944 = vunpack.c.l.b16 %v2904
        %v2945 = vunpack.c.l.b16 %v2905
        %v2946 = vunpack.c.l.b16 %v2906
        %v2947 = vunpack.c.l.b16 %v2907
        %v2948 = vunpack.c.l.b16 %v2908
        %v2949 = vunpack.c.l.b16 %v2909
        %v2950 = vunpack.c.l.b16 %v2910
        %v2951 = vunpack.c.l.b16 %v2911
        %v2952 = vunpack.c.l.b16 %v2912
        %v2953 = vpack.c.b16 %v2938, %v2937
        %v2954 = vpack.c.b16 %v2940, %v2939
        %v2955 = vpack.c.b16 %v2942, %v2941
        %v2956 = vpack.c.b16 %v2944, %v2943
        %v2957 = vpack.c.b16 %v2946, %v2945
        %v2958 = vpack.c.b16 %v2948, %v2947
        %v2959 = vpack.c.b16 %v2950, %v2949
        %v2960 = vpack.c.b16 %v2952, %v2951
        %2969 = vmatprep.subr.bf16.mxu0 0
        %2970 = vmatpush1.bf16.msra.mxu0 %v2953
        %2971 = vmatprep.subr.bf16.mxu0 0
        %2972 = vmatpush1.bf16.msra.mxu0 %v2954
        %2973 = vmatprep.subr.bf16.mxu0 0
        %2974 = vmatpush1.bf16.msra.mxu0 %v2955
        %2975 = vmatprep.subr.bf16.mxu0 0
        %2976 = vmatpush1.bf16.msra.mxu0 %v2956
        %2977 = vmatprep.subr.bf16.mxu0 0
        %2978 = vmatpush1.bf16.msra.mxu0 %v2957
        %2979 = vmatprep.subr.bf16.mxu0 0
        %2980 = vmatpush1.bf16.msra.mxu0 %v2958
        %2981 = vmatprep.subr.bf16.mxu0 0
        %2982 = vmatpush1.bf16.msra.mxu0 %v2959
        %2983 = vmatprep.subr.bf16.mxu0 0
        %2984 = vmatpush1.bf16.msra.mxu0 %v2960
        %2985 = vmatprep.subr.bf16.mxu0 0
        %2986 = vmatpush1.bf16.msra.mxu0 0
        %2987 = vmatprep.subr.bf16.mxu0 0
        %2988 = vmatpush1.bf16.msra.mxu0 0
        %2989 = vmatprep.subr.bf16.mxu0 0
        %2990 = vmatpush1.bf16.msra.mxu0 0
        %2991 = vmatprep.subr.bf16.mxu0 0
        %2992 = vmatpush1.bf16.msra.mxu0 0
        %2993 = vmatprep.subr.bf16.mxu0 0
        %2994 = vmatpush1.bf16.msra.mxu0 0
        %2995 = vmatprep.subr.bf16.mxu0 0
        %2996 = vmatpush1.bf16.msra.mxu0 0
        %2997 = vmatprep.subr.bf16.mxu0 0
        %2998 = vmatpush1.bf16.msra.mxu0 0
        %2999 = vmatprep.subr.bf16.mxu0 0
        %3000 = vmatpush1.bf16.msra.mxu0 0
        %3001 = vmatprep.mubr.bf16.mxu0 0
        %3002 = vmatmul.mubr.bf16.gmra.mrb[0].mxu0 %v2888
        %v3003 = vpop.f32.mrb[0].mxu0
        %v3004 = vadd.f32 %v2919, %v3003
        %v3005 = vpop.f32.mrb[0].mxu0
        %v3006 = vpop.f32.mrb[0].mxu0
        %v3007 = vadd.f32 %v2919, %v3006
        %v3008 = vpop.f32.mrb[0].mxu0
        %3009 = vmatprep.mubr.bf16.mxu0 0
        %3010 = vmatmul.mubr.bf16.gmra.mrb[0].mxu0 %v2889
        %v3011 = vpop.f32.mrb[0].mxu0
        %v3012 = vadd.f32 %v2919, %v3011
        %v3013 = vpop.f32.mrb[0].mxu0
        %v3014 = vpop.f32.mrb[0].mxu0
        %v3015 = vadd.f32 %v2919, %v3014
        %v3016 = vpop.f32.mrb[0].mxu0
        %3017 = vmatprep.mubr.bf16.mxu0 0
        %3018 = vmatmul.mubr.bf16.gmra.mrb[0].mxu0 %v2890
        %v3019 = vpop.f32.mrb[0].mxu0
        %v3020 = vadd.f32 %v2919, %v3019
        %v3021 = vpop.f32.mrb[0].mxu0
        %v3022 = vpop.f32.mrb[0].mxu0
        %v3023 = vadd.f32 %v2919, %v3022
        %v3024 = vpop.f32.mrb[0].mxu0
        %3025 = vmatprep.mubr.bf16.mxu0 0
        %3026 = vmatmul.mubr.bf16.gmra.mrb[0].mxu0 %v2891
        %v3027 = vpop.f32.mrb[0].mxu0
        %v3028 = vadd.f32 %v2919, %v3027
        %v3029 = vpop.f32.mrb[0].mxu0
        %v3030 = vpop.f32.mrb[0].mxu0
        %v3031 = vadd.f32 %v2919, %v3030
        %v3032 = vpop.f32.mrb[0].mxu0
        %3033 = vmatprep.mubr.bf16.mxu0 0
        %3034 = vmatmul.mubr.bf16.gmra.mrb[0].mxu0 %v2892
        %v3035 = vpop.f32.mrb[0].mxu0
        %v3036 = vadd.f32 %v2919, %v3035
        %v3037 = vpop.f32.mrb[0].mxu0
        %v3038 = vpop.f32.mrb[0].mxu0
        %v3039 = vadd.f32 %v2919, %v3038
        %v3040 = vpop.f32.mrb[0].mxu0
        %3041 = vmatprep.mubr.bf16.mxu0 0
        %3042 = vmatmul.mubr.bf16.gmra.mrb[0].mxu0 %v2893
        %v3043 = vpop.f32.mrb[0].mxu0
        %v3044 = vadd.f32 %v2919, %v3043
        %v3045 = vpop.f32.mrb[0].mxu0
        %v3046 = vpop.f32.mrb[0].mxu0
        %v3047 = vadd.f32 %v2919, %v3046
        %v3048 = vpop.f32.mrb[0].mxu0
        %3049 = vmatprep.mubr.bf16.mxu0 0
        %3050 = vmatmul.mubr.bf16.gmra.mrb[0].mxu0 %v2894
        %v3051 = vpop.f32.mrb[0].mxu0
        %v3052 = vadd.f32 %v2919, %v3051
        %v3053 = vpop.f32.mrb[0].mxu0
        %v3054 = vpop.f32.mrb[0].mxu0
        %v3055 = vadd.f32 %v2919, %v3054
        %v3056 = vpop.f32.mrb[0].mxu0
        %3057 = vmatprep.mubr.bf16.mxu0 0
        %3058 = vmatmul.mubr.bf16.gmra.mrb[0].mxu0 %v2895
        %v3059 = vpop.f32.mrb[0].mxu0
        %v3060 = vadd.f32 %v2919, %v3059
        %v3061 = vpop.f32.mrb[0].mxu0
        %v3062 = vpop.f32.mrb[0].mxu0
        %v3063 = vadd.f32 %v2919, %v3062
        %v3064 = vpop.f32.mrb[0].mxu0
        %3065 = vdwg.mxu0
        %v3066 = vmax.f32 %v3004, 0.0
        %v3067 = vmax.f32 %v3007, 0.0
        %v3068 = vmax.f32 %v3012, 0.0
        %v3069 = vmax.f32 %v3015, 0.0
        %v3070 = vmax.f32 %v3020, 0.0
        %v3071 = vmax.f32 %v3023, 0.0
        %v3072 = vmax.f32 %v3028, 0.0
        %v3073 = vmax.f32 %v3031, 0.0
        %v3074 = vmax.f32 %v3036, 0.0
        %v3075 = vmax.f32 %v3039, 0.0
        %v3076 = vmax.f32 %v3044, 0.0
        %v3077 = vmax.f32 %v3047, 0.0
        %v3078 = vmax.f32 %v3052, 0.0
        %v3079 = vmax.f32 %v3055, 0.0
        %v3080 = vmax.f32 %v3060, 0.0
        %v3081 = vmax.f32 %v3063, 0.0
        %v3082 = vpack.c.bf16 %v3067, %v3066
        %v3083 = vpack.c.bf16 %v3069, %v3068
        %v3084 = vpack.c.bf16 %v3071, %v3070
        %v3085 = vpack.c.bf16 %v3073, %v3072
        %v3086 = vpack.c.bf16 %v3075, %v3074
        %v3087 = vpack.c.bf16 %v3077, %v3076
        %v3088 = vpack.c.bf16 %v3079, %v3078
        %v3089 = vpack.c.bf16 %v3081, %v3080
        %s3090 = scalar_lea.vmem [#allocation10], 384
        %v3091 = vld [vmem:[%s3090] sm:$0xf]
        %v3092 = vld [vmem:[%s3090 + $0x4] sm:$0xf]
        %v3093 = vld [vmem:[%s3090 + $0x8] sm:$0xf]
        %v3094 = vld [vmem:[%s3090 + $0xc] sm:$0xf]
        %v3095 = vld [vmem:[%s3090 + $0x10] sm:$0xf]
        %v3096 = vld [vmem:[%s3090 + $0x14] sm:$0xf]
        %v3097 = vld [vmem:[%s3090 + $0x18] sm:$0xf]
        %v3098 = vld [vmem:[%s3090 + $0x1c] sm:$0xf]
        %v3099 = vld [vmem:[%s3090 + $0x20] sm:$0xf]
        %v3100 = vld [vmem:[%s3090 + $0x24] sm:$0xf]
        %v3101 = vld [vmem:[%s3090 + $0x28] sm:$0xf]
        %v3102 = vld [vmem:[%s3090 + $0x2c] sm:$0xf]
        %v3103 = vld [vmem:[%s3090 + $0x30] sm:$0xf]
        %v3104 = vld [vmem:[%s3090 + $0x34] sm:$0xf]
        %v3105 = vld [vmem:[%s3090 + $0x38] sm:$0xf]
        %v3106 = vld [vmem:[%s3090 + $0x3c] sm:$0xf]
        %s3107 = scalar_lea.vmem [#allocation11], 6
        %v3108 = vld [vmem:[%s3107] sm:$0x1]
        %v3110 = vlaneseq
        %v3111 = vshrl.u32 %v3110, 7
        %v3112 = vsub.s32 0, %v3111
        %v3113 = vrot.slane %v3108, %v3112
        %v3131 = vunpack.c.l.b16 %v3091
        %v3132 = vunpack.c.l.b16 %v3092
        %v3133 = vunpack.c.l.b16 %v3093
        %v3134 = vunpack.c.l.b16 %v3094
        %v3135 = vunpack.c.l.b16 %v3095
        %v3136 = vunpack.c.l.b16 %v3096
        %v3137 = vunpack.c.l.b16 %v3097
        %v3138 = vunpack.c.l.b16 %v3098
        %v3139 = vunpack.c.l.b16 %v3099
        %v3140 = vunpack.c.l.b16 %v3100
        %v3141 = vunpack.c.l.b16 %v3101
        %v3142 = vunpack.c.l.b16 %v3102
        %v3143 = vunpack.c.l.b16 %v3103
        %v3144 = vunpack.c.l.b16 %v3104
        %v3145 = vunpack.c.l.b16 %v3105
        %v3146 = vunpack.c.l.b16 %v3106
        %v3147 = vpack.c.b16 %v3132, %v3131
        %v3148 = vpack.c.b16 %v3134, %v3133
        %v3149 = vpack.c.b16 %v3136, %v3135
        %v3150 = vpack.c.b16 %v3138, %v3137
        %v3151 = vpack.c.b16 %v3140, %v3139
        %v3152 = vpack.c.b16 %v3142, %v3141
        %v3153 = vpack.c.b16 %v3144, %v3143
        %v3154 = vpack.c.b16 %v3146, %v3145
        %3163 = vmatprep.subr.bf16.mxu0 0
        %3164 = vmatpush1.bf16.msra.mxu0 %v3147
        %3165 = vmatprep.subr.bf16.mxu0 0
        %3166 = vmatpush1.bf16.msra.mxu0 %v3148
        %3167 = vmatprep.subr.bf16.mxu0 0
        %3168 = vmatpush1.bf16.msra.mxu0 %v3149
        %3169 = vmatprep.subr.bf16.mxu0 0
        %3170 = vmatpush1.bf16.msra.mxu0 %v3150
        %3171 = vmatprep.subr.bf16.mxu0 0
        %3172 = vmatpush1.bf16.msra.mxu0 %v3151
        %3173 = vmatprep.subr.bf16.mxu0 0
        %3174 = vmatpush1.bf16.msra.mxu0 %v3152
        %3175 = vmatprep.subr.bf16.mxu0 0
        %3176 = vmatpush1.bf16.msra.mxu0 %v3153
        %3177 = vmatprep.subr.bf16.mxu0 0
        %3178 = vmatpush1.bf16.msra.mxu0 %v3154
        %3179 = vmatprep.subr.bf16.mxu0 0
        %3180 = vmatpush1.bf16.msra.mxu0 0
        %3181 = vmatprep.subr.bf16.mxu0 0
        %3182 = vmatpush1.bf16.msra.mxu0 0
        %3183 = vmatprep.subr.bf16.mxu0 0
        %3184 = vmatpush1.bf16.msra.mxu0 0
        %3185 = vmatprep.subr.bf16.mxu0 0
        %3186 = vmatpush1.bf16.msra.mxu0 0
        %3187 = vmatprep.subr.bf16.mxu0 0
        %3188 = vmatpush1.bf16.msra.mxu0 0
        %3189 = vmatprep.subr.bf16.mxu0 0
        %3190 = vmatpush1.bf16.msra.mxu0 0
        %3191 = vmatprep.subr.bf16.mxu0 0
        %3192 = vmatpush1.bf16.msra.mxu0 0
        %3193 = vmatprep.subr.bf16.mxu0 0
        %3194 = vmatpush1.bf16.msra.mxu0 0
        %3195 = vmatprep.mubr.bf16.mxu0 0
        %3196 = vmatmul.mubr.bf16.gmra.mrb[0].mxu0 %v3082
        %v3197 = vpop.f32.mrb[0].mxu0
        %v3198 = vadd.f32 %v3113, %v3197
        %v3199 = vpop.f32.mrb[0].mxu0
        %v3200 = vpop.f32.mrb[0].mxu0
        %v3201 = vadd.f32 %v3113, %v3200
        %v3202 = vpop.f32.mrb[0].mxu0
        %3203 = vmatprep.mubr.bf16.mxu0 0
        %3204 = vmatmul.mubr.bf16.gmra.mrb[0].mxu0 %v3083
        %v3205 = vpop.f32.mrb[0].mxu0
        %v3206 = vadd.f32 %v3113, %v3205
        %v3207 = vpop.f32.mrb[0].mxu0
        %v3208 = vpop.f32.mrb[0].mxu0
        %v3209 = vadd.f32 %v3113, %v3208
        %v3210 = vpop.f32.mrb[0].mxu0
        %3211 = vmatprep.mubr.bf16.mxu0 0
        %3212 = vmatmul.mubr.bf16.gmra.mrb[0].mxu0 %v3084
        %v3213 = vpop.f32.mrb[0].mxu0
        %v3214 = vadd.f32 %v3113, %v3213
        %v3215 = vpop.f32.mrb[0].mxu0
        %v3216 = vpop.f32.mrb[0].mxu0
        %v3217 = vadd.f32 %v3113, %v3216
        %v3218 = vpop.f32.mrb[0].mxu0
        %3219 = vmatprep.mubr.bf16.mxu0 0
        %3220 = vmatmul.mubr.bf16.gmra.mrb[0].mxu0 %v3085
        %v3221 = vpop.f32.mrb[0].mxu0
        %v3222 = vadd.f32 %v3113, %v3221
        %v3223 = vpop.f32.mrb[0].mxu0
        %v3224 = vpop.f32.mrb[0].mxu0
        %v3225 = vadd.f32 %v3113, %v3224
        %v3226 = vpop.f32.mrb[0].mxu0
        %3227 = vmatprep.mubr.bf16.mxu0 0
        %3228 = vmatmul.mubr.bf16.gmra.mrb[0].mxu0 %v3086
        %v3229 = vpop.f32.mrb[0].mxu0
        %v3230 = vadd.f32 %v3113, %v3229
        %v3231 = vpop.f32.mrb[0].mxu0
        %v3232 = vpop.f32.mrb[0].mxu0
        %v3233 = vadd.f32 %v3113, %v3232
        %v3234 = vpop.f32.mrb[0].mxu0
        %3235 = vmatprep.mubr.bf16.mxu0 0
        %3236 = vmatmul.mubr.bf16.gmra.mrb[0].mxu0 %v3087
        %v3237 = vpop.f32.mrb[0].mxu0
        %v3238 = vadd.f32 %v3113, %v3237
        %v3239 = vpop.f32.mrb[0].mxu0
        %v3240 = vpop.f32.mrb[0].mxu0
        %v3241 = vadd.f32 %v3113, %v3240
        %v3242 = vpop.f32.mrb[0].mxu0
        %3243 = vmatprep.mubr.bf16.mxu0 0
        %3244 = vmatmul.mubr.bf16.gmra.mrb[0].mxu0 %v3088
        %v3245 = vpop.f32.mrb[0].mxu0
        %v3246 = vadd.f32 %v3113, %v3245
        %v3247 = vpop.f32.mrb[0].mxu0
        %v3248 = vpop.f32.mrb[0].mxu0
        %v3249 = vadd.f32 %v3113, %v3248
        %v3250 = vpop.f32.mrb[0].mxu0
        %3251 = vmatprep.mubr.bf16.mxu0 0
        %3252 = vmatmul.mubr.bf16.gmra.mrb[0].mxu0 %v3089
        %v3253 = vpop.f32.mrb[0].mxu0
        %v3254 = vadd.f32 %v3113, %v3253
        %v3255 = vpop.f32.mrb[0].mxu0
        %v3256 = vpop.f32.mrb[0].mxu0
        %v3257 = vadd.f32 %v3113, %v3256
        %v3258 = vpop.f32.mrb[0].mxu0
        %3259 = vdwg.mxu0
        %v3260 = vmax.f32 %v3198, 0.0
        %v3261 = vmax.f32 %v3201, 0.0
        %v3262 = vmax.f32 %v3206, 0.0
        %v3263 = vmax.f32 %v3209, 0.0
        %v3264 = vmax.f32 %v3214, 0.0
        %v3265 = vmax.f32 %v3217, 0.0
        %v3266 = vmax.f32 %v3222, 0.0
        %v3267 = vmax.f32 %v3225, 0.0
        %v3268 = vmax.f32 %v3230, 0.0
        %v3269 = vmax.f32 %v3233, 0.0
        %v3270 = vmax.f32 %v3238, 0.0
        %v3271 = vmax.f32 %v3241, 0.0
        %v3272 = vmax.f32 %v3246, 0.0
        %v3273 = vmax.f32 %v3249, 0.0
        %v3274 = vmax.f32 %v3254, 0.0
        %v3275 = vmax.f32 %v3257, 0.0
        %v3276 = vpack.c.bf16 %v3261, %v3260
        %v3277 = vpack.c.bf16 %v3263, %v3262
        %v3278 = vpack.c.bf16 %v3265, %v3264
        %v3279 = vpack.c.bf16 %v3267, %v3266
        %v3280 = vpack.c.bf16 %v3269, %v3268
        %v3281 = vpack.c.bf16 %v3271, %v3270
        %v3282 = vpack.c.bf16 %v3273, %v3272
        %v3283 = vpack.c.bf16 %v3275, %v3274
        %s3284 = scalar_lea.vmem [#allocation10], 448
        %v3285 = vld [vmem:[%s3284] sm:$0xf]
        %v3286 = vld [vmem:[%s3284 + $0x4] sm:$0xf]
        %v3287 = vld [vmem:[%s3284 + $0x8] sm:$0xf]
        %v3288 = vld [vmem:[%s3284 + $0xc] sm:$0xf]
        %v3289 = vld [vmem:[%s3284 + $0x10] sm:$0xf]
        %v3290 = vld [vmem:[%s3284 + $0x14] sm:$0xf]
        %v3291 = vld [vmem:[%s3284 + $0x18] sm:$0xf]
        %v3292 = vld [vmem:[%s3284 + $0x1c] sm:$0xf]
        %v3293 = vld [vmem:[%s3284 + $0x20] sm:$0xf]
        %v3294 = vld [vmem:[%s3284 + $0x24] sm:$0xf]
        %v3295 = vld [vmem:[%s3284 + $0x28] sm:$0xf]
        %v3296 = vld [vmem:[%s3284 + $0x2c] sm:$0xf]
        %v3297 = vld [vmem:[%s3284 + $0x30] sm:$0xf]
        %v3298 = vld [vmem:[%s3284 + $0x34] sm:$0xf]
        %v3299 = vld [vmem:[%s3284 + $0x38] sm:$0xf]
        %v3300 = vld [vmem:[%s3284 + $0x3c] sm:$0xf]
        %s3301 = scalar_lea.vmem [#allocation11], 7
        %v3302 = vld [vmem:[%s3301] sm:$0x1]
        %v3304 = vlaneseq
        %v3305 = vshrl.u32 %v3304, 7
        %v3306 = vsub.s32 0, %v3305
        %v3307 = vrot.slane %v3302, %v3306
        %v3325 = vunpack.c.l.b16 %v3285
        %v3326 = vunpack.c.l.b16 %v3286
        %v3327 = vunpack.c.l.b16 %v3287
        %v3328 = vunpack.c.l.b16 %v3288
        %v3329 = vunpack.c.l.b16 %v3289
        %v3330 = vunpack.c.l.b16 %v3290
        %v3331 = vunpack.c.l.b16 %v3291
        %v3332 = vunpack.c.l.b16 %v3292
        %v3333 = vunpack.c.l.b16 %v3293
        %v3334 = vunpack.c.l.b16 %v3294
        %v3335 = vunpack.c.l.b16 %v3295
        %v3336 = vunpack.c.l.b16 %v3296
        %v3337 = vunpack.c.l.b16 %v3297
        %v3338 = vunpack.c.l.b16 %v3298
        %v3339 = vunpack.c.l.b16 %v3299
        %v3340 = vunpack.c.l.b16 %v3300
        %v3341 = vpack.c.b16 %v3326, %v3325
        %v3342 = vpack.c.b16 %v3328, %v3327
        %v3343 = vpack.c.b16 %v3330, %v3329
        %v3344 = vpack.c.b16 %v3332, %v3331
        %v3345 = vpack.c.b16 %v3334, %v3333
        %v3346 = vpack.c.b16 %v3336, %v3335
        %v3347 = vpack.c.b16 %v3338, %v3337
        %v3348 = vpack.c.b16 %v3340, %v3339
        %3357 = vmatprep.subr.bf16.mxu0 0
        %3358 = vmatpush1.bf16.msra.mxu0 %v3341
        %3359 = vmatprep.subr.bf16.mxu0 0
        %3360 = vmatpush1.bf16.msra.mxu0 %v3342
        %3361 = vmatprep.subr.bf16.mxu0 0
        %3362 = vmatpush1.bf16.msra.mxu0 %v3343
        %3363 = vmatprep.subr.bf16.mxu0 0
        %3364 = vmatpush1.bf16.msra.mxu0 %v3344
        %3365 = vmatprep.subr.bf16.mxu0 0
        %3366 = vmatpush1.bf16.msra.mxu0 %v3345
        %3367 = vmatprep.subr.bf16.mxu0 0
        %3368 = vmatpush1.bf16.msra.mxu0 %v3346
        %3369 = vmatprep.subr.bf16.mxu0 0
        %3370 = vmatpush1.bf16.msra.mxu0 %v3347
        %3371 = vmatprep.subr.bf16.mxu0 0
        %3372 = vmatpush1.bf16.msra.mxu0 %v3348
        %3373 = vmatprep.subr.bf16.mxu0 0
        %3374 = vmatpush1.bf16.msra.mxu0 0
        %3375 = vmatprep.subr.bf16.mxu0 0
        %3376 = vmatpush1.bf16.msra.mxu0 0
        %3377 = vmatprep.subr.bf16.mxu0 0
        %3378 = vmatpush1.bf16.msra.mxu0 0
        %3379 = vmatprep.subr.bf16.mxu0 0
        %3380 = vmatpush1.bf16.msra.mxu0 0
        %3381 = vmatprep.subr.bf16.mxu0 0
        %3382 = vmatpush1.bf16.msra.mxu0 0
        %3383 = vmatprep.subr.bf16.mxu0 0
        %3384 = vmatpush1.bf16.msra.mxu0 0
        %3385 = vmatprep.subr.bf16.mxu0 0
        %3386 = vmatpush1.bf16.msra.mxu0 0
        %3387 = vmatprep.subr.bf16.mxu0 0
        %3388 = vmatpush1.bf16.msra.mxu0 0
        %3389 = vmatprep.mubr.bf16.mxu0 0
        %3390 = vmatmul.mubr.bf16.gmra.mrb[0].mxu0 %v3276
        %v3391 = vpop.f32.mrb[0].mxu0
        %v3392 = vadd.f32 %v3307, %v3391
        %v3393 = vpop.f32.mrb[0].mxu0
        %v3394 = vpop.f32.mrb[0].mxu0
        %v3395 = vadd.f32 %v3307, %v3394
        %v3396 = vpop.f32.mrb[0].mxu0
        %3397 = vmatprep.mubr.bf16.mxu0 0
        %3398 = vmatmul.mubr.bf16.gmra.mrb[0].mxu0 %v3277
        %v3399 = vpop.f32.mrb[0].mxu0
        %v3400 = vadd.f32 %v3307, %v3399
        %v3401 = vpop.f32.mrb[0].mxu0
        %v3402 = vpop.f32.mrb[0].mxu0
        %v3403 = vadd.f32 %v3307, %v3402
        %v3404 = vpop.f32.mrb[0].mxu0
        %3405 = vmatprep.mubr.bf16.mxu0 0
        %3406 = vmatmul.mubr.bf16.gmra.mrb[0].mxu0 %v3278
        %v3407 = vpop.f32.mrb[0].mxu0
        %v3408 = vadd.f32 %v3307, %v3407
        %v3409 = vpop.f32.mrb[0].mxu0
        %v3410 = vpop.f32.mrb[0].mxu0
        %v3411 = vadd.f32 %v3307, %v3410
        %v3412 = vpop.f32.mrb[0].mxu0
        %3413 = vmatprep.mubr.bf16.mxu0 0
        %3414 = vmatmul.mubr.bf16.gmra.mrb[0].mxu0 %v3279
        %v3415 = vpop.f32.mrb[0].mxu0
        %v3416 = vadd.f32 %v3307, %v3415
        %v3417 = vpop.f32.mrb[0].mxu0
        %v3418 = vpop.f32.mrb[0].mxu0
        %v3419 = vadd.f32 %v3307, %v3418
        %v3420 = vpop.f32.mrb[0].mxu0
        %3421 = vmatprep.mubr.bf16.mxu0 0
        %3422 = vmatmul.mubr.bf16.gmra.mrb[0].mxu0 %v3280
        %v3423 = vpop.f32.mrb[0].mxu0
        %v3424 = vadd.f32 %v3307, %v3423
        %v3425 = vpop.f32.mrb[0].mxu0
        %v3426 = vpop.f32.mrb[0].mxu0
        %v3427 = vadd.f32 %v3307, %v3426
        %v3428 = vpop.f32.mrb[0].mxu0
        %3429 = vmatprep.mubr.bf16.mxu0 0
        %3430 = vmatmul.mubr.bf16.gmra.mrb[0].mxu0 %v3281
        %v3431 = vpop.f32.mrb[0].mxu0
        %v3432 = vadd.f32 %v3307, %v3431
        %v3433 = vpop.f32.mrb[0].mxu0
        %v3434 = vpop.f32.mrb[0].mxu0
        %v3435 = vadd.f32 %v3307, %v3434
        %v3436 = vpop.f32.mrb[0].mxu0
        %3437 = vmatprep.mubr.bf16.mxu0 0
        %3438 = vmatmul.mubr.bf16.gmra.mrb[0].mxu0 %v3282
        %v3439 = vpop.f32.mrb[0].mxu0
        %v3440 = vadd.f32 %v3307, %v3439
        %v3441 = vpop.f32.mrb[0].mxu0
        %v3442 = vpop.f32.mrb[0].mxu0
        %v3443 = vadd.f32 %v3307, %v3442
        %v3444 = vpop.f32.mrb[0].mxu0
        %3445 = vmatprep.mubr.bf16.mxu0 0
        %3446 = vmatmul.mubr.bf16.gmra.mrb[0].mxu0 %v3283
        %v3447 = vpop.f32.mrb[0].mxu0
        %v3448 = vadd.f32 %v3307, %v3447
        %v3449 = vpop.f32.mrb[0].mxu0
        %v3450 = vpop.f32.mrb[0].mxu0
        %v3451 = vadd.f32 %v3307, %v3450
        %v3452 = vpop.f32.mrb[0].mxu0
        %3453 = vdwg.mxu0
        %v3454 = vmax.f32 %v3392, 0.0
        %v3455 = vmax.f32 %v3395, 0.0
        %v3456 = vmax.f32 %v3400, 0.0
        %v3457 = vmax.f32 %v3403, 0.0
        %v3458 = vmax.f32 %v3408, 0.0
        %v3459 = vmax.f32 %v3411, 0.0
        %v3460 = vmax.f32 %v3416, 0.0
        %v3461 = vmax.f32 %v3419, 0.0
        %v3462 = vmax.f32 %v3424, 0.0
        %v3463 = vmax.f32 %v3427, 0.0
        %v3464 = vmax.f32 %v3432, 0.0
        %v3465 = vmax.f32 %v3435, 0.0
        %v3466 = vmax.f32 %v3440, 0.0
        %v3467 = vmax.f32 %v3443, 0.0
        %v3468 = vmax.f32 %v3448, 0.0
        %v3469 = vmax.f32 %v3451, 0.0
        %v3470 = vpack.c.bf16 %v3455, %v3454
        %v3471 = vpack.c.bf16 %v3457, %v3456
        %v3472 = vpack.c.bf16 %v3459, %v3458
        %v3473 = vpack.c.bf16 %v3461, %v3460
        %v3474 = vpack.c.bf16 %v3463, %v3462
        %v3475 = vpack.c.bf16 %v3465, %v3464
        %v3476 = vpack.c.bf16 %v3467, %v3466
        %v3477 = vpack.c.bf16 %v3469, %v3468
        %s3478 = scalar_lea.vmem [#allocation13], 192
        %v3479 = vld [vmem:[%s3478] sm:$0xf]
        %v3480 = vld [vmem:[%s3478 + $0x4] sm:$0xf]
        %v3481 = vld [vmem:[%s3478 + $0x8] sm:$0xf]
        %v3482 = vld [vmem:[%s3478 + $0xc] sm:$0xf]
        %v3483 = vld [vmem:[%s3478 + $0x10] sm:$0xf]
        %v3484 = vld [vmem:[%s3478 + $0x14] sm:$0xf]
        %v3485 = vld [vmem:[%s3478 + $0x18] sm:$0xf]
        %v3486 = vld [vmem:[%s3478 + $0x1c] sm:$0xf]
        %v3487 = vld [vmem:[%s3478 + $0x20] sm:$0xf]
        %v3488 = vld [vmem:[%s3478 + $0x24] sm:$0xf]
        %v3489 = vld [vmem:[%s3478 + $0x28] sm:$0xf]
        %v3490 = vld [vmem:[%s3478 + $0x2c] sm:$0xf]
        %v3491 = vld [vmem:[%s3478 + $0x30] sm:$0xf]
        %v3492 = vld [vmem:[%s3478 + $0x34] sm:$0xf]
        %v3493 = vld [vmem:[%s3478 + $0x38] sm:$0xf]
        %v3494 = vld [vmem:[%s3478 + $0x3c] sm:$0xf]
        %s3495 = scalar_lea.vmem [#allocation14], 3
        %v3496 = vld [vmem:[%s3495] sm:$0x1]
        %v3498 = vlaneseq
        %v3499 = vshrl.u32 %v3498, 7
        %v3500 = vsub.s32 0, %v3499
        %v3501 = vrot.slane %v3496, %v3500
        %v3519 = vunpack.c.l.b16 %v3479
        %v3520 = vunpack.c.l.b16 %v3480
        %v3521 = vunpack.c.l.b16 %v3481
        %v3522 = vunpack.c.l.b16 %v3482
        %v3523 = vunpack.c.l.b16 %v3483
        %v3524 = vunpack.c.l.b16 %v3484
        %v3525 = vunpack.c.l.b16 %v3485
        %v3526 = vunpack.c.l.b16 %v3486
        %v3527 = vunpack.c.l.b16 %v3487
        %v3528 = vunpack.c.l.b16 %v3488
        %v3529 = vunpack.c.l.b16 %v3489
        %v3530 = vunpack.c.l.b16 %v3490
        %v3531 = vunpack.c.l.b16 %v3491
        %v3532 = vunpack.c.l.b16 %v3492
        %v3533 = vunpack.c.l.b16 %v3493
        %v3534 = vunpack.c.l.b16 %v3494
        %v3535 = vpack.c.b16 %v3520, %v3519
        %v3536 = vpack.c.b16 %v3522, %v3521
        %v3537 = vpack.c.b16 %v3524, %v3523
        %v3538 = vpack.c.b16 %v3526, %v3525
        %v3539 = vpack.c.b16 %v3528, %v3527
        %v3540 = vpack.c.b16 %v3530, %v3529
        %v3541 = vpack.c.b16 %v3532, %v3531
        %v3542 = vpack.c.b16 %v3534, %v3533
        %3551 = vmatprep.subr.bf16.mxu0 0
        %3552 = vmatpush1.bf16.msra.mxu0 %v3535
        %3553 = vmatprep.subr.bf16.mxu0 0
        %3554 = vmatpush1.bf16.msra.mxu0 %v3536
        %3555 = vmatprep.subr.bf16.mxu0 0
        %3556 = vmatpush1.bf16.msra.mxu0 %v3537
        %3557 = vmatprep.subr.bf16.mxu0 0
        %3558 = vmatpush1.bf16.msra.mxu0 %v3538
        %3559 = vmatprep.subr.bf16.mxu0 0
        %3560 = vmatpush1.bf16.msra.mxu0 %v3539
        %3561 = vmatprep.subr.bf16.mxu0 0
        %3562 = vmatpush1.bf16.msra.mxu0 %v3540
        %3563 = vmatprep.subr.bf16.mxu0 0
        %3564 = vmatpush1.bf16.msra.mxu0 %v3541
        %3565 = vmatprep.subr.bf16.mxu0 0
        %3566 = vmatpush1.bf16.msra.mxu0 %v3542
        %3567 = vmatprep.subr.bf16.mxu0 0
        %3568 = vmatpush1.bf16.msra.mxu0 0
        %3569 = vmatprep.subr.bf16.mxu0 0
        %3570 = vmatpush1.bf16.msra.mxu0 0
        %3571 = vmatprep.subr.bf16.mxu0 0
        %3572 = vmatpush1.bf16.msra.mxu0 0
        %3573 = vmatprep.subr.bf16.mxu0 0
        %3574 = vmatpush1.bf16.msra.mxu0 0
        %3575 = vmatprep.subr.bf16.mxu0 0
        %3576 = vmatpush1.bf16.msra.mxu0 0
        %3577 = vmatprep.subr.bf16.mxu0 0
        %3578 = vmatpush1.bf16.msra.mxu0 0
        %3579 = vmatprep.subr.bf16.mxu0 0
        %3580 = vmatpush1.bf16.msra.mxu0 0
        %3581 = vmatprep.subr.bf16.mxu0 0
        %3582 = vmatpush1.bf16.msra.mxu0 0
        %3583 = vmatprep.mubr.bf16.mxu0 0
        %3584 = vmatmul.mubr.bf16.gmra.mrb[0].mxu0 %v3470
        %v3585 = vpop.f32.mrb[0].mxu0
        %v3586 = vadd.f32 %v3501, %v3585
        %v3587 = vpop.f32.mrb[0].mxu0
        %v3588 = vpop.f32.mrb[0].mxu0
        %v3589 = vadd.f32 %v3501, %v3588
        %v3590 = vpop.f32.mrb[0].mxu0
        %3591 = vmatprep.mubr.bf16.mxu0 0
        %3592 = vmatmul.mubr.bf16.gmra.mrb[0].mxu0 %v3471
        %v3593 = vpop.f32.mrb[0].mxu0
        %v3594 = vadd.f32 %v3501, %v3593
        %v3595 = vpop.f32.mrb[0].mxu0
        %v3596 = vpop.f32.mrb[0].mxu0
        %v3597 = vadd.f32 %v3501, %v3596
        %v3598 = vpop.f32.mrb[0].mxu0
        %3599 = vmatprep.mubr.bf16.mxu0 0
        %3600 = vmatmul.mubr.bf16.gmra.mrb[0].mxu0 %v3472
        %v3601 = vpop.f32.mrb[0].mxu0
        %v3602 = vadd.f32 %v3501, %v3601
        %v3603 = vpop.f32.mrb[0].mxu0
        %v3604 = vpop.f32.mrb[0].mxu0
        %v3605 = vadd.f32 %v3501, %v3604
        %v3606 = vpop.f32.mrb[0].mxu0
        %3607 = vmatprep.mubr.bf16.mxu0 0
        %3608 = vmatmul.mubr.bf16.gmra.mrb[0].mxu0 %v3473
        %v3609 = vpop.f32.mrb[0].mxu0
        %v3610 = vadd.f32 %v3501, %v3609
        %v3611 = vpop.f32.mrb[0].mxu0
        %v3612 = vpop.f32.mrb[0].mxu0
        %v3613 = vadd.f32 %v3501, %v3612
        %v3614 = vpop.f32.mrb[0].mxu0
        %3615 = vmatprep.mubr.bf16.mxu0 0
        %3616 = vmatmul.mubr.bf16.gmra.mrb[0].mxu0 %v3474
        %v3617 = vpop.f32.mrb[0].mxu0
        %v3618 = vadd.f32 %v3501, %v3617
        %v3619 = vpop.f32.mrb[0].mxu0
        %v3620 = vpop.f32.mrb[0].mxu0
        %v3621 = vadd.f32 %v3501, %v3620
        %v3622 = vpop.f32.mrb[0].mxu0
        %3623 = vmatprep.mubr.bf16.mxu0 0
        %3624 = vmatmul.mubr.bf16.gmra.mrb[0].mxu0 %v3475
        %v3625 = vpop.f32.mrb[0].mxu0
        %v3626 = vadd.f32 %v3501, %v3625
        %v3627 = vpop.f32.mrb[0].mxu0
        %v3628 = vpop.f32.mrb[0].mxu0
        %v3629 = vadd.f32 %v3501, %v3628
        %v3630 = vpop.f32.mrb[0].mxu0
        %3631 = vmatprep.mubr.bf16.mxu0 0
        %3632 = vmatmul.mubr.bf16.gmra.mrb[0].mxu0 %v3476
        %v3633 = vpop.f32.mrb[0].mxu0
        %v3634 = vadd.f32 %v3501, %v3633
        %v3635 = vpop.f32.mrb[0].mxu0
        %v3636 = vpop.f32.mrb[0].mxu0
        %v3637 = vadd.f32 %v3501, %v3636
        %v3638 = vpop.f32.mrb[0].mxu0
        %3639 = vmatprep.mubr.bf16.mxu0 0
        %3640 = vmatmul.mubr.bf16.gmra.mrb[0].mxu0 %v3477
        %v3641 = vpop.f32.mrb[0].mxu0
        %v3642 = vadd.f32 %v3501, %v3641
        %v3643 = vpop.f32.mrb[0].mxu0
        %v3644 = vpop.f32.mrb[0].mxu0
        %v3645 = vadd.f32 %v3501, %v3644
        %v3646 = vpop.f32.mrb[0].mxu0
        %3647 = vdwg.mxu0
        %v3648 = vadd.f32 %v2096, %v3586
        %v3649 = vadd.f32 %v2097, %v3589
        %v3650 = vadd.f32 %v2098, %v3594
        %v3651 = vadd.f32 %v2099, %v3597
        %v3652 = vadd.f32 %v2100, %v3602
        %v3653 = vadd.f32 %v2101, %v3605
        %v3654 = vadd.f32 %v2102, %v3610
        %v3655 = vadd.f32 %v2103, %v3613
        %v3656 = vadd.f32 %v2104, %v3618
        %v3657 = vadd.f32 %v2105, %v3621
        %v3658 = vadd.f32 %v2106, %v3626
        %v3659 = vadd.f32 %v2107, %v3629
        %v3660 = vadd.f32 %v2108, %v3634
        %v3661 = vadd.f32 %v2109, %v3637
        %v3662 = vadd.f32 %v2110, %v3642
        %v3663 = vadd.f32 %v2111, %v3645
        %v3664 = vld [vmem:[#allocation16] sm:$0x1]
        %v3666 = vlaneseq
        %v3667 = vshrl.u32 %v3666, 7
        %v3668 = vsub.s32 0, %v3667
        %v3669 = vrot.slane %v3664, %v3668
        %v3671 = vmul.f32 %v2872, %v3669
        %v3672 = vmul.f32 %v2873, %v3669
        %v3673 = vmul.f32 %v2874, %v3669
        %v3674 = vmul.f32 %v2875, %v3669
        %v3675 = vmul.f32 %v2876, %v3669
        %v3676 = vmul.f32 %v2877, %v3669
        %v3677 = vmul.f32 %v2878, %v3669
        %v3678 = vmul.f32 %v2879, %v3669
        %v3679 = vmul.f32 %v2880, %v3669
        %v3680 = vmul.f32 %v2881, %v3669
        %v3681 = vmul.f32 %v2882, %v3669
        %v3682 = vmul.f32 %v2883, %v3669
        %v3683 = vmul.f32 %v2884, %v3669
        %v3684 = vmul.f32 %v2885, %v3669
        %v3685 = vmul.f32 %v2886, %v3669
        %v3686 = vmul.f32 %v2887, %v3669
        %v3687 = vld [vmem:[#allocation17] sm:$0x1]
        %v3689 = vlaneseq
        %v3690 = vshrl.u32 %v3689, 7
        %v3691 = vsub.s32 0, %v3690
        %v3692 = vrot.slane %v3687, %v3691
        %v3694 = vmul.f32 %v3648, %v3692
        %v3695 = vmul.f32 %v3649, %v3692
        %v3696 = vmul.f32 %v3650, %v3692
        %v3697 = vmul.f32 %v3651, %v3692
        %v3698 = vmul.f32 %v3652, %v3692
        %v3699 = vmul.f32 %v3653, %v3692
        %v3700 = vmul.f32 %v3654, %v3692
        %v3701 = vmul.f32 %v3655, %v3692
        %v3702 = vmul.f32 %v3656, %v3692
        %v3703 = vmul.f32 %v3657, %v3692
        %v3704 = vmul.f32 %v3658, %v3692
        %v3705 = vmul.f32 %v3659, %v3692
        %v3706 = vmul.f32 %v3660, %v3692
        %v3707 = vmul.f32 %v3661, %v3692
        %v3708 = vmul.f32 %v3662, %v3692
        %v3709 = vmul.f32 %v3663, %v3692
        %v3710 = vlaneseq
        %v3711 = vand.u32 %v3710, 127
        %vm3712 = vcmp.lt.s32.totalorder %v3711, 32
        %v3713 = vsel %vm3712, 1, 0
        %v3714 = vcvt.s32.f32 %v3713
        %v3715 = vand.u32 2147483647, %v3671
        %v3716 = vand.u32 2147483647, %v3672
        %v3717 = vand.u32 2147483647, %v3673
        %v3718 = vand.u32 2147483647, %v3674
        %v3719 = vand.u32 2147483647, %v3675
        %v3720 = vand.u32 2147483647, %v3676
        %v3721 = vand.u32 2147483647, %v3677
        %v3722 = vand.u32 2147483647, %v3678
        %v3723 = vand.u32 2147483647, %v3679
        %v3724 = vand.u32 2147483647, %v3680
        %v3725 = vand.u32 2147483647, %v3681
        %v3726 = vand.u32 2147483647, %v3682
        %v3727 = vand.u32 2147483647, %v3683
        %v3728 = vand.u32 2147483647, %v3684
        %v3729 = vand.u32 2147483647, %v3685
        %v3730 = vand.u32 2147483647, %v3686
        %v3731 = vsub.f32 0.0, %v3715
        %v3732 = vsub.f32 0.0, %v3716
        %v3733 = vsub.f32 0.0, %v3717
        %v3734 = vsub.f32 0.0, %v3718
        %v3735 = vsub.f32 0.0, %v3719
        %v3736 = vsub.f32 0.0, %v3720
        %v3737 = vsub.f32 0.0, %v3721
        %v3738 = vsub.f32 0.0, %v3722
        %v3739 = vsub.f32 0.0, %v3723
        %v3740 = vsub.f32 0.0, %v3724
        %v3741 = vsub.f32 0.0, %v3725
        %v3742 = vsub.f32 0.0, %v3726
        %v3743 = vsub.f32 0.0, %v3727
        %v3744 = vsub.f32 0.0, %v3728
        %v3745 = vsub.f32 0.0, %v3729
        %v3746 = vsub.f32 0.0, %v3730
        %v3747 = vmul.f32 %v3731, 1.442695
        %v3748 = vpow.pop %v3747
        %v3749 = vmul.f32 %v3732, 1.442695
        %v3750 = vpow.pop %v3749
        %v3751 = vmul.f32 %v3733, 1.442695
        %v3752 = vpow.pop %v3751
        %v3753 = vmul.f32 %v3734, 1.442695
        %v3754 = vpow.pop %v3753
        %v3755 = vmul.f32 %v3735, 1.442695
        %v3756 = vpow.pop %v3755
        %v3757 = vmul.f32 %v3736, 1.442695
        %v3758 = vpow.pop %v3757
        %v3759 = vmul.f32 %v3737, 1.442695
        %v3760 = vpow.pop %v3759
        %v3761 = vmul.f32 %v3738, 1.442695
        %v3762 = vpow.pop %v3761
        %v3763 = vmul.f32 %v3739, 1.442695
        %v3764 = vpow.pop %v3763
        %v3765 = vmul.f32 %v3740, 1.442695
        %v3766 = vpow.pop %v3765
        %v3767 = vmul.f32 %v3741, 1.442695
        %v3768 = vpow.pop %v3767
        %v3769 = vmul.f32 %v3742, 1.442695
        %v3770 = vpow.pop %v3769
        %v3771 = vmul.f32 %v3743, 1.442695
        %v3772 = vpow.pop %v3771
        %v3773 = vmul.f32 %v3744, 1.442695
        %v3774 = vpow.pop %v3773
        %v3775 = vmul.f32 %v3745, 1.442695
        %v3776 = vpow.pop %v3775
        %v3777 = vmul.f32 %v3746, 1.442695
        %v3778 = vpow.pop %v3777
        %v3779 = vadd.f32 %v3748, 1.0
        %v3780 = vlog2.pop %v3779
        %v3781 = vmul.f32 %v3780, 0.6931472
        %v3782 = vmul.f32 -0.5, %v3748
        %v3783 = vadd.f32 %v3782, 1.0
        %v3784 = vmul.f32 %v3783, %v3748
        %v3785 = vand.u32 2147483647, %v3748
        %vm3786 = vcmp.lt.f32.partialorder %v3785, 0.0004427343
        %v3787 = vsel %vm3786, %v3784, %v3781
        %v3788 = vadd.f32 %v3750, 1.0
        %v3789 = vlog2.pop %v3788
        %v3790 = vmul.f32 %v3789, 0.6931472
        %v3791 = vmul.f32 -0.5, %v3750
        %v3792 = vadd.f32 %v3791, 1.0
        %v3793 = vmul.f32 %v3792, %v3750
        %v3794 = vand.u32 2147483647, %v3750
        %vm3795 = vcmp.lt.f32.partialorder %v3794, 0.0004427343
        %v3796 = vsel %vm3795, %v3793, %v3790
        %v3797 = vadd.f32 %v3752, 1.0
        %v3798 = vlog2.pop %v3797
        %v3799 = vmul.f32 %v3798, 0.6931472
        %v3800 = vmul.f32 -0.5, %v3752
        %v3801 = vadd.f32 %v3800, 1.0
        %v3802 = vmul.f32 %v3801, %v3752
        %v3803 = vand.u32 2147483647, %v3752
        %vm3804 = vcmp.lt.f32.partialorder %v3803, 0.0004427343
        %v3805 = vsel %vm3804, %v3802, %v3799
        %v3806 = vadd.f32 %v3754, 1.0
        %v3807 = vlog2.pop %v3806
        %v3808 = vmul.f32 %v3807, 0.6931472
        %v3809 = vmul.f32 -0.5, %v3754
        %v3810 = vadd.f32 %v3809, 1.0
        %v3811 = vmul.f32 %v3810, %v3754
        %v3812 = vand.u32 2147483647, %v3754
        %vm3813 = vcmp.lt.f32.partialorder %v3812, 0.0004427343
        %v3814 = vsel %vm3813, %v3811, %v3808
        %v3815 = vadd.f32 %v3756, 1.0
        %v3816 = vlog2.pop %v3815
        %v3817 = vmul.f32 %v3816, 0.6931472
        %v3818 = vmul.f32 -0.5, %v3756
        %v3819 = vadd.f32 %v3818, 1.0
        %v3820 = vmul.f32 %v3819, %v3756
        %v3821 = vand.u32 2147483647, %v3756
        %vm3822 = vcmp.lt.f32.partialorder %v3821, 0.0004427343
        %v3823 = vsel %vm3822, %v3820, %v3817
        %v3824 = vadd.f32 %v3758, 1.0
        %v3825 = vlog2.pop %v3824
        %v3826 = vmul.f32 %v3825, 0.6931472
        %v3827 = vmul.f32 -0.5, %v3758
        %v3828 = vadd.f32 %v3827, 1.0
        %v3829 = vmul.f32 %v3828, %v3758
        %v3830 = vand.u32 2147483647, %v3758
        %vm3831 = vcmp.lt.f32.partialorder %v3830, 0.0004427343
        %v3832 = vsel %vm3831, %v3829, %v3826
        %v3833 = vadd.f32 %v3760, 1.0
        %v3834 = vlog2.pop %v3833
        %v3835 = vmul.f32 %v3834, 0.6931472
        %v3836 = vmul.f32 -0.5, %v3760
        %v3837 = vadd.f32 %v3836, 1.0
        %v3838 = vmul.f32 %v3837, %v3760
        %v3839 = vand.u32 2147483647, %v3760
        %vm3840 = vcmp.lt.f32.partialorder %v3839, 0.0004427343
        %v3841 = vsel %vm3840, %v3838, %v3835
        %v3842 = vadd.f32 %v3762, 1.0
        %v3843 = vlog2.pop %v3842
        %v3844 = vmul.f32 %v3843, 0.6931472
        %v3845 = vmul.f32 -0.5, %v3762
        %v3846 = vadd.f32 %v3845, 1.0
        %v3847 = vmul.f32 %v3846, %v3762
        %v3848 = vand.u32 2147483647, %v3762
        %vm3849 = vcmp.lt.f32.partialorder %v3848, 0.0004427343
        %v3850 = vsel %vm3849, %v3847, %v3844
        %v3851 = vadd.f32 %v3764, 1.0
        %v3852 = vlog2.pop %v3851
        %v3853 = vmul.f32 %v3852, 0.6931472
        %v3854 = vmul.f32 -0.5, %v3764
        %v3855 = vadd.f32 %v3854, 1.0
        %v3856 = vmul.f32 %v3855, %v3764
        %v3857 = vand.u32 2147483647, %v3764
        %vm3858 = vcmp.lt.f32.partialorder %v3857, 0.0004427343
        %v3859 = vsel %vm3858, %v3856, %v3853
        %v3860 = vadd.f32 %v3766, 1.0
        %v3861 = vlog2.pop %v3860
        %v3862 = vmul.f32 %v3861, 0.6931472
        %v3863 = vmul.f32 -0.5, %v3766
        %v3864 = vadd.f32 %v3863, 1.0
        %v3865 = vmul.f32 %v3864, %v3766
        %v3866 = vand.u32 2147483647, %v3766
        %vm3867 = vcmp.lt.f32.partialorder %v3866, 0.0004427343
        %v3868 = vsel %vm3867, %v3865, %v3862
        %v3869 = vadd.f32 %v3768, 1.0
        %v3870 = vlog2.pop %v3869
        %v3871 = vmul.f32 %v3870, 0.6931472
        %v3872 = vmul.f32 -0.5, %v3768
        %v3873 = vadd.f32 %v3872, 1.0
        %v3874 = vmul.f32 %v3873, %v3768
        %v3875 = vand.u32 2147483647, %v3768
        %vm3876 = vcmp.lt.f32.partialorder %v3875, 0.0004427343
        %v3877 = vsel %vm3876, %v3874, %v3871
        %v3878 = vadd.f32 %v3770, 1.0
        %v3879 = vlog2.pop %v3878
        %v3880 = vmul.f32 %v3879, 0.6931472
        %v3881 = vmul.f32 -0.5, %v3770
        %v3882 = vadd.f32 %v3881, 1.0
        %v3883 = vmul.f32 %v3882, %v3770
        %v3884 = vand.u32 2147483647, %v3770
        %vm3885 = vcmp.lt.f32.partialorder %v3884, 0.0004427343
        %v3886 = vsel %vm3885, %v3883, %v3880
        %v3887 = vadd.f32 %v3772, 1.0
        %v3888 = vlog2.pop %v3887
        %v3889 = vmul.f32 %v3888, 0.6931472
        %v3890 = vmul.f32 -0.5, %v3772
        %v3891 = vadd.f32 %v3890, 1.0
        %v3892 = vmul.f32 %v3891, %v3772
        %v3893 = vand.u32 2147483647, %v3772
        %vm3894 = vcmp.lt.f32.partialorder %v3893, 0.0004427343
        %v3895 = vsel %vm3894, %v3892, %v3889
        %v3896 = vadd.f32 %v3774, 1.0
        %v3897 = vlog2.pop %v3896
        %v3898 = vmul.f32 %v3897, 0.6931472
        %v3899 = vmul.f32 -0.5, %v3774
        %v3900 = vadd.f32 %v3899, 1.0
        %v3901 = vmul.f32 %v3900, %v3774
        %v3902 = vand.u32 2147483647, %v3774
        %vm3903 = vcmp.lt.f32.partialorder %v3902, 0.0004427343
        %v3904 = vsel %vm3903, %v3901, %v3898
        %v3905 = vadd.f32 %v3776, 1.0
        %v3906 = vlog2.pop %v3905
        %v3907 = vmul.f32 %v3906, 0.6931472
        %v3908 = vmul.f32 -0.5, %v3776
        %v3909 = vadd.f32 %v3908, 1.0
        %v3910 = vmul.f32 %v3909, %v3776
        %v3911 = vand.u32 2147483647, %v3776
        %vm3912 = vcmp.lt.f32.partialorder %v3911, 0.0004427343
        %v3913 = vsel %vm3912, %v3910, %v3907
        %v3914 = vadd.f32 %v3778, 1.0
        %v3915 = vlog2.pop %v3914
        %v3916 = vmul.f32 %v3915, 0.6931472
        %v3917 = vmul.f32 -0.5, %v3778
        %v3918 = vadd.f32 %v3917, 1.0
        %v3919 = vmul.f32 %v3918, %v3778
        %v3920 = vand.u32 2147483647, %v3778
        %vm3921 = vcmp.lt.f32.partialorder %v3920, 0.0004427343
        %v3922 = vsel %vm3921, %v3919, %v3916
        %v3923 = vmul.f32 %v3787, 2.0
        %v3924 = vmul.f32 %v3796, 2.0
        %v3925 = vmul.f32 %v3805, 2.0
        %v3926 = vmul.f32 %v3814, 2.0
        %v3927 = vmul.f32 %v3823, 2.0
        %v3928 = vmul.f32 %v3832, 2.0
        %v3929 = vmul.f32 %v3841, 2.0
        %v3930 = vmul.f32 %v3850, 2.0
        %v3931 = vmul.f32 %v3859, 2.0
        %v3932 = vmul.f32 %v3868, 2.0
        %v3933 = vmul.f32 %v3877, 2.0
        %v3934 = vmul.f32 %v3886, 2.0
        %v3935 = vmul.f32 %v3895, 2.0
        %v3936 = vmul.f32 %v3904, 2.0
        %v3937 = vmul.f32 %v3913, 2.0
        %v3938 = vmul.f32 %v3922, 2.0
        %v3939 = vadd.f32 %v3715, %v3923
        %v3940 = vadd.f32 %v3716, %v3924
        %v3941 = vadd.f32 %v3717, %v3925
        %v3942 = vadd.f32 %v3718, %v3926
        %v3943 = vadd.f32 %v3719, %v3927
        %v3944 = vadd.f32 %v3720, %v3928
        %v3945 = vadd.f32 %v3721, %v3929
        %v3946 = vadd.f32 %v3722, %v3930
        %v3947 = vadd.f32 %v3723, %v3931
        %v3948 = vadd.f32 %v3724, %v3932
        %v3949 = vadd.f32 %v3725, %v3933
        %v3950 = vadd.f32 %v3726, %v3934
        %v3951 = vadd.f32 %v3727, %v3935
        %v3952 = vadd.f32 %v3728, %v3936
        %v3953 = vadd.f32 %v3729, %v3937
        %v3954 = vadd.f32 %v3730, %v3938
        %v3955 = vsub.f32 0.0, %v3939
        %v3956 = vsub.f32 0.0, %v3940
        %v3957 = vsub.f32 0.0, %v3941
        %v3958 = vsub.f32 0.0, %v3942
        %v3959 = vsub.f32 0.0, %v3943
        %v3960 = vsub.f32 0.0, %v3944
        %v3961 = vsub.f32 0.0, %v3945
        %v3962 = vsub.f32 0.0, %v3946
        %v3963 = vsub.f32 0.0, %v3947
        %v3964 = vsub.f32 0.0, %v3948
        %v3965 = vsub.f32 0.0, %v3949
        %v3966 = vsub.f32 0.0, %v3950
        %v3967 = vsub.f32 0.0, %v3951
        %v3968 = vsub.f32 0.0, %v3952
        %v3969 = vsub.f32 0.0, %v3953
        %v3970 = vsub.f32 0.0, %v3954
        %v3971 = vmul.f32 %v3955, %v3714
        %v3972 = vmul.f32 %v3956, %v3714
        %v3973 = vmul.f32 %v3957, %v3714
        %v3974 = vmul.f32 %v3958, %v3714
        %v3975 = vmul.f32 %v3959, %v3714
        %v3976 = vmul.f32 %v3960, %v3714
        %v3977 = vmul.f32 %v3961, %v3714
        %v3978 = vmul.f32 %v3962, %v3714
        %v3979 = vmul.f32 %v3963, %v3714
        %v3980 = vmul.f32 %v3964, %v3714
        %v3981 = vmul.f32 %v3965, %v3714
        %v3982 = vmul.f32 %v3966, %v3714
        %v3983 = vmul.f32 %v3967, %v3714
        %v3984 = vmul.f32 %v3968, %v3714
        %v3985 = vmul.f32 %v3969, %v3714
        %v3986 = vmul.f32 %v3970, %v3714
        %3987 = vadd.xlane.f32.xlu0 %v3971
        %v3988 = vpop.xlane.xlu0 %3987
        %3989 = vadd.xlane.f32.xlu0 %v3972
        %v3990 = vpop.xlane.xlu0 %3989
        %3991 = vadd.xlane.f32.xlu0 %v3973
        %v3992 = vpop.xlane.xlu0 %3991
        %3993 = vadd.xlane.f32.xlu0 %v3974
        %v3994 = vpop.xlane.xlu0 %3993
        %3995 = vadd.xlane.f32.xlu0 %v3975
        %v3996 = vpop.xlane.xlu0 %3995
        %3997 = vadd.xlane.f32.xlu0 %v3976
        %v3998 = vpop.xlane.xlu0 %3997
        %3999 = vadd.xlane.f32.xlu0 %v3977
        %v4000 = vpop.xlane.xlu0 %3999
        %4001 = vadd.xlane.f32.xlu0 %v3978
        %v4002 = vpop.xlane.xlu0 %4001
        %4003 = vadd.xlane.f32.xlu0 %v3979
        %v4004 = vpop.xlane.xlu0 %4003
        %4005 = vadd.xlane.f32.xlu0 %v3980
        %v4006 = vpop.xlane.xlu0 %4005
        %4007 = vadd.xlane.f32.xlu0 %v3981
        %v4008 = vpop.xlane.xlu0 %4007
        %4009 = vadd.xlane.f32.xlu0 %v3982
        %v4010 = vpop.xlane.xlu0 %4009
        %4011 = vadd.xlane.f32.xlu0 %v3983
        %v4012 = vpop.xlane.xlu0 %4011
        %4013 = vadd.xlane.f32.xlu0 %v3984
        %v4014 = vpop.xlane.xlu0 %4013
        %4015 = vadd.xlane.f32.xlu0 %v3985
        %v4016 = vpop.xlane.xlu0 %4015
        %4017 = vadd.xlane.f32.xlu0 %v3986
        %v4018 = vpop.xlane.xlu0 %4017
        %v4019 = vand.u32 2147483647, %v3694
        %v4020 = vand.u32 2147483647, %v3695
        %v4021 = vand.u32 2147483647, %v3696
        %v4022 = vand.u32 2147483647, %v3697
        %v4023 = vand.u32 2147483647, %v3698
        %v4024 = vand.u32 2147483647, %v3699
        %v4025 = vand.u32 2147483647, %v3700
        %v4026 = vand.u32 2147483647, %v3701
        %v4027 = vand.u32 2147483647, %v3702
        %v4028 = vand.u32 2147483647, %v3703
        %v4029 = vand.u32 2147483647, %v3704
        %v4030 = vand.u32 2147483647, %v3705
        %v4031 = vand.u32 2147483647, %v3706
        %v4032 = vand.u32 2147483647, %v3707
        %v4033 = vand.u32 2147483647, %v3708
        %v4034 = vand.u32 2147483647, %v3709
        %v4035 = vsub.f32 0.0, %v4019
        %v4036 = vsub.f32 0.0, %v4020
        %v4037 = vsub.f32 0.0, %v4021
        %v4038 = vsub.f32 0.0, %v4022
        %v4039 = vsub.f32 0.0, %v4023
        %v4040 = vsub.f32 0.0, %v4024
        %v4041 = vsub.f32 0.0, %v4025
        %v4042 = vsub.f32 0.0, %v4026
        %v4043 = vsub.f32 0.0, %v4027
        %v4044 = vsub.f32 0.0, %v4028
        %v4045 = vsub.f32 0.0, %v4029
        %v4046 = vsub.f32 0.0, %v4030
        %v4047 = vsub.f32 0.0, %v4031
        %v4048 = vsub.f32 0.0, %v4032
        %v4049 = vsub.f32 0.0, %v4033
        %v4050 = vsub.f32 0.0, %v4034
        %v4051 = vmul.f32 %v4035, 1.442695
        %v4052 = vpow.pop %v4051
        %v4053 = vmul.f32 %v4036, 1.442695
        %v4054 = vpow.pop %v4053
        %v4055 = vmul.f32 %v4037, 1.442695
        %v4056 = vpow.pop %v4055
        %v4057 = vmul.f32 %v4038, 1.442695
        %v4058 = vpow.pop %v4057
        %v4059 = vmul.f32 %v4039, 1.442695
        %v4060 = vpow.pop %v4059
        %v4061 = vmul.f32 %v4040, 1.442695
        %v4062 = vpow.pop %v4061
        %v4063 = vmul.f32 %v4041, 1.442695
        %v4064 = vpow.pop %v4063
        %v4065 = vmul.f32 %v4042, 1.442695
        %v4066 = vpow.pop %v4065
        %v4067 = vmul.f32 %v4043, 1.442695
        %v4068 = vpow.pop %v4067
        %v4069 = vmul.f32 %v4044, 1.442695
        %v4070 = vpow.pop %v4069
        %v4071 = vmul.f32 %v4045, 1.442695
        %v4072 = vpow.pop %v4071
        %v4073 = vmul.f32 %v4046, 1.442695
        %v4074 = vpow.pop %v4073
        %v4075 = vmul.f32 %v4047, 1.442695
        %v4076 = vpow.pop %v4075
        %v4077 = vmul.f32 %v4048, 1.442695
        %v4078 = vpow.pop %v4077
        %v4079 = vmul.f32 %v4049, 1.442695
        %v4080 = vpow.pop %v4079
        %v4081 = vmul.f32 %v4050, 1.442695
        %v4082 = vpow.pop %v4081
        %v4083 = vadd.f32 %v4052, 1.0
        %v4084 = vlog2.pop %v4083
        %v4085 = vmul.f32 %v4084, 0.6931472
        %v4086 = vmul.f32 -0.5, %v4052
        %v4087 = vadd.f32 %v4086, 1.0
        %v4088 = vmul.f32 %v4087, %v4052
        %v4089 = vand.u32 2147483647, %v4052
        %vm4090 = vcmp.lt.f32.partialorder %v4089, 0.0004427343
        %v4091 = vsel %vm4090, %v4088, %v4085
        %v4092 = vadd.f32 %v4054, 1.0
        %v4093 = vlog2.pop %v4092
        %v4094 = vmul.f32 %v4093, 0.6931472
        %v4095 = vmul.f32 -0.5, %v4054
        %v4096 = vadd.f32 %v4095, 1.0
        %v4097 = vmul.f32 %v4096, %v4054
        %v4098 = vand.u32 2147483647, %v4054
        %vm4099 = vcmp.lt.f32.partialorder %v4098, 0.0004427343
        %v4100 = vsel %vm4099, %v4097, %v4094
        %v4101 = vadd.f32 %v4056, 1.0
        %v4102 = vlog2.pop %v4101
        %v4103 = vmul.f32 %v4102, 0.6931472
        %v4104 = vmul.f32 -0.5, %v4056
        %v4105 = vadd.f32 %v4104, 1.0
        %v4106 = vmul.f32 %v4105, %v4056
        %v4107 = vand.u32 2147483647, %v4056
        %vm4108 = vcmp.lt.f32.partialorder %v4107, 0.0004427343
        %v4109 = vsel %vm4108, %v4106, %v4103
        %v4110 = vadd.f32 %v4058, 1.0
        %v4111 = vlog2.pop %v4110
        %v4112 = vmul.f32 %v4111, 0.6931472
        %v4113 = vmul.f32 -0.5, %v4058
        %v4114 = vadd.f32 %v4113, 1.0
        %v4115 = vmul.f32 %v4114, %v4058
        %v4116 = vand.u32 2147483647, %v4058
        %vm4117 = vcmp.lt.f32.partialorder %v4116, 0.0004427343
        %v4118 = vsel %vm4117, %v4115, %v4112
        %v4119 = vadd.f32 %v4060, 1.0
        %v4120 = vlog2.pop %v4119
        %v4121 = vmul.f32 %v4120, 0.6931472
        %v4122 = vmul.f32 -0.5, %v4060
        %v4123 = vadd.f32 %v4122, 1.0
        %v4124 = vmul.f32 %v4123, %v4060
        %v4125 = vand.u32 2147483647, %v4060
        %vm4126 = vcmp.lt.f32.partialorder %v4125, 0.0004427343
        %v4127 = vsel %vm4126, %v4124, %v4121
        %v4128 = vadd.f32 %v4062, 1.0
        %v4129 = vlog2.pop %v4128
        %v4130 = vmul.f32 %v4129, 0.6931472
        %v4131 = vmul.f32 -0.5, %v4062
        %v4132 = vadd.f32 %v4131, 1.0
        %v4133 = vmul.f32 %v4132, %v4062
        %v4134 = vand.u32 2147483647, %v4062
        %vm4135 = vcmp.lt.f32.partialorder %v4134, 0.0004427343
        %v4136 = vsel %vm4135, %v4133, %v4130
        %v4137 = vadd.f32 %v4064, 1.0
        %v4138 = vlog2.pop %v4137
        %v4139 = vmul.f32 %v4138, 0.6931472
        %v4140 = vmul.f32 -0.5, %v4064
        %v4141 = vadd.f32 %v4140, 1.0
        %v4142 = vmul.f32 %v4141, %v4064
        %v4143 = vand.u32 2147483647, %v4064
        %vm4144 = vcmp.lt.f32.partialorder %v4143, 0.0004427343
        %v4145 = vsel %vm4144, %v4142, %v4139
        %v4146 = vadd.f32 %v4066, 1.0
        %v4147 = vlog2.pop %v4146
        %v4148 = vmul.f32 %v4147, 0.6931472
        %v4149 = vmul.f32 -0.5, %v4066
        %v4150 = vadd.f32 %v4149, 1.0
        %v4151 = vmul.f32 %v4150, %v4066
        %v4152 = vand.u32 2147483647, %v4066
        %vm4153 = vcmp.lt.f32.partialorder %v4152, 0.0004427343
        %v4154 = vsel %vm4153, %v4151, %v4148
        %v4155 = vadd.f32 %v4068, 1.0
        %v4156 = vlog2.pop %v4155
        %v4157 = vmul.f32 %v4156, 0.6931472
        %v4158 = vmul.f32 -0.5, %v4068
        %v4159 = vadd.f32 %v4158, 1.0
        %v4160 = vmul.f32 %v4159, %v4068
        %v4161 = vand.u32 2147483647, %v4068
        %vm4162 = vcmp.lt.f32.partialorder %v4161, 0.0004427343
        %v4163 = vsel %vm4162, %v4160, %v4157
        %v4164 = vadd.f32 %v4070, 1.0
        %v4165 = vlog2.pop %v4164
        %v4166 = vmul.f32 %v4165, 0.6931472
        %v4167 = vmul.f32 -0.5, %v4070
        %v4168 = vadd.f32 %v4167, 1.0
        %v4169 = vmul.f32 %v4168, %v4070
        %v4170 = vand.u32 2147483647, %v4070
        %vm4171 = vcmp.lt.f32.partialorder %v4170, 0.0004427343
        %v4172 = vsel %vm4171, %v4169, %v4166
        %v4173 = vadd.f32 %v4072, 1.0
        %v4174 = vlog2.pop %v4173
        %v4175 = vmul.f32 %v4174, 0.6931472
        %v4176 = vmul.f32 -0.5, %v4072
        %v4177 = vadd.f32 %v4176, 1.0
        %v4178 = vmul.f32 %v4177, %v4072
        %v4179 = vand.u32 2147483647, %v4072
        %vm4180 = vcmp.lt.f32.partialorder %v4179, 0.0004427343
        %v4181 = vsel %vm4180, %v4178, %v4175
        %v4182 = vadd.f32 %v4074, 1.0
        %v4183 = vlog2.pop %v4182
        %v4184 = vmul.f32 %v4183, 0.6931472
        %v4185 = vmul.f32 -0.5, %v4074
        %v4186 = vadd.f32 %v4185, 1.0
        %v4187 = vmul.f32 %v4186, %v4074
        %v4188 = vand.u32 2147483647, %v4074
        %vm4189 = vcmp.lt.f32.partialorder %v4188, 0.0004427343
        %v4190 = vsel %vm4189, %v4187, %v4184
        %v4191 = vadd.f32 %v4076, 1.0
        %v4192 = vlog2.pop %v4191
        %v4193 = vmul.f32 %v4192, 0.6931472
        %v4194 = vmul.f32 -0.5, %v4076
        %v4195 = vadd.f32 %v4194, 1.0
        %v4196 = vmul.f32 %v4195, %v4076
        %v4197 = vand.u32 2147483647, %v4076
        %vm4198 = vcmp.lt.f32.partialorder %v4197, 0.0004427343
        %v4199 = vsel %vm4198, %v4196, %v4193
        %v4200 = vadd.f32 %v4078, 1.0
        %v4201 = vlog2.pop %v4200
        %v4202 = vmul.f32 %v4201, 0.6931472
        %v4203 = vmul.f32 -0.5, %v4078
        %v4204 = vadd.f32 %v4203, 1.0
        %v4205 = vmul.f32 %v4204, %v4078
        %v4206 = vand.u32 2147483647, %v4078
        %vm4207 = vcmp.lt.f32.partialorder %v4206, 0.0004427343
        %v4208 = vsel %vm4207, %v4205, %v4202
        %v4209 = vadd.f32 %v4080, 1.0
        %v4210 = vlog2.pop %v4209
        %v4211 = vmul.f32 %v4210, 0.6931472
        %v4212 = vmul.f32 -0.5, %v4080
        %v4213 = vadd.f32 %v4212, 1.0
        %v4214 = vmul.f32 %v4213, %v4080
        %v4215 = vand.u32 2147483647, %v4080
        %vm4216 = vcmp.lt.f32.partialorder %v4215, 0.0004427343
        %v4217 = vsel %vm4216, %v4214, %v4211
        %v4218 = vadd.f32 %v4082, 1.0
        %v4219 = vlog2.pop %v4218
        %v4220 = vmul.f32 %v4219, 0.6931472
        %v4221 = vmul.f32 -0.5, %v4082
        %v4222 = vadd.f32 %v4221, 1.0
        %v4223 = vmul.f32 %v4222, %v4082
        %v4224 = vand.u32 2147483647, %v4082
        %vm4225 = vcmp.lt.f32.partialorder %v4224, 0.0004427343
        %v4226 = vsel %vm4225, %v4223, %v4220
        %v4227 = vmul.f32 %v4091, 2.0
        %v4228 = vmul.f32 %v4100, 2.0
        %v4229 = vmul.f32 %v4109, 2.0
        %v4230 = vmul.f32 %v4118, 2.0
        %v4231 = vmul.f32 %v4127, 2.0
        %v4232 = vmul.f32 %v4136, 2.0
        %v4233 = vmul.f32 %v4145, 2.0
        %v4234 = vmul.f32 %v4154, 2.0
        %v4235 = vmul.f32 %v4163, 2.0
        %v4236 = vmul.f32 %v4172, 2.0
        %v4237 = vmul.f32 %v4181, 2.0
        %v4238 = vmul.f32 %v4190, 2.0
        %v4239 = vmul.f32 %v4199, 2.0
        %v4240 = vmul.f32 %v4208, 2.0
        %v4241 = vmul.f32 %v4217, 2.0
        %v4242 = vmul.f32 %v4226, 2.0
        %v4243 = vadd.f32 %v4019, %v4227
        %v4244 = vadd.f32 %v4020, %v4228
        %v4245 = vadd.f32 %v4021, %v4229
        %v4246 = vadd.f32 %v4022, %v4230
        %v4247 = vadd.f32 %v4023, %v4231
        %v4248 = vadd.f32 %v4024, %v4232
        %v4249 = vadd.f32 %v4025, %v4233
        %v4250 = vadd.f32 %v4026, %v4234
        %v4251 = vadd.f32 %v4027, %v4235
        %v4252 = vadd.f32 %v4028, %v4236
        %v4253 = vadd.f32 %v4029, %v4237
        %v4254 = vadd.f32 %v4030, %v4238
        %v4255 = vadd.f32 %v4031, %v4239
        %v4256 = vadd.f32 %v4032, %v4240
        %v4257 = vadd.f32 %v4033, %v4241
        %v4258 = vadd.f32 %v4034, %v4242
        %v4259 = vsub.f32 0.0, %v4243
        %v4260 = vsub.f32 0.0, %v4244
        %v4261 = vsub.f32 0.0, %v4245
        %v4262 = vsub.f32 0.0, %v4246
        %v4263 = vsub.f32 0.0, %v4247
        %v4264 = vsub.f32 0.0, %v4248
        %v4265 = vsub.f32 0.0, %v4249
        %v4266 = vsub.f32 0.0, %v4250
        %v4267 = vsub.f32 0.0, %v4251
        %v4268 = vsub.f32 0.0, %v4252
        %v4269 = vsub.f32 0.0, %v4253
        %v4270 = vsub.f32 0.0, %v4254
        %v4271 = vsub.f32 0.0, %v4255
        %v4272 = vsub.f32 0.0, %v4256
        %v4273 = vsub.f32 0.0, %v4257
        %v4274 = vsub.f32 0.0, %v4258
        %v4275 = vmul.f32 %v4259, %v3714
        %v4276 = vmul.f32 %v4260, %v3714
        %v4277 = vmul.f32 %v4261, %v3714
        %v4278 = vmul.f32 %v4262, %v3714
        %v4279 = vmul.f32 %v4263, %v3714
        %v4280 = vmul.f32 %v4264, %v3714
        %v4281 = vmul.f32 %v4265, %v3714
        %v4282 = vmul.f32 %v4266, %v3714
        %v4283 = vmul.f32 %v4267, %v3714
        %v4284 = vmul.f32 %v4268, %v3714
        %v4285 = vmul.f32 %v4269, %v3714
        %v4286 = vmul.f32 %v4270, %v3714
        %v4287 = vmul.f32 %v4271, %v3714
        %v4288 = vmul.f32 %v4272, %v3714
        %v4289 = vmul.f32 %v4273, %v3714
        %v4290 = vmul.f32 %v4274, %v3714
        %4291 = vadd.xlane.f32.xlu0 %v4275
        %v4292 = vpop.xlane.xlu0 %4291
        %4293 = vadd.xlane.f32.xlu0 %v4276
        %v4294 = vpop.xlane.xlu0 %4293
        %4295 = vadd.xlane.f32.xlu0 %v4277
        %v4296 = vpop.xlane.xlu0 %4295
        %4297 = vadd.xlane.f32.xlu0 %v4278
        %v4298 = vpop.xlane.xlu0 %4297
        %4299 = vadd.xlane.f32.xlu0 %v4279
        %v4300 = vpop.xlane.xlu0 %4299
        %4301 = vadd.xlane.f32.xlu0 %v4280
        %v4302 = vpop.xlane.xlu0 %4301
        %4303 = vadd.xlane.f32.xlu0 %v4281
        %v4304 = vpop.xlane.xlu0 %4303
        %4305 = vadd.xlane.f32.xlu0 %v4282
        %v4306 = vpop.xlane.xlu0 %4305
        %4307 = vadd.xlane.f32.xlu0 %v4283
        %v4308 = vpop.xlane.xlu0 %4307
        %4309 = vadd.xlane.f32.xlu0 %v4284
        %v4310 = vpop.xlane.xlu0 %4309
        %4311 = vadd.xlane.f32.xlu0 %v4285
        %v4312 = vpop.xlane.xlu0 %4311
        %4313 = vadd.xlane.f32.xlu0 %v4286
        %v4314 = vpop.xlane.xlu0 %4313
        %4315 = vadd.xlane.f32.xlu0 %v4287
        %v4316 = vpop.xlane.xlu0 %4315
        %4317 = vadd.xlane.f32.xlu0 %v4288
        %v4318 = vpop.xlane.xlu0 %4317
        %4319 = vadd.xlane.f32.xlu0 %v4289
        %v4320 = vpop.xlane.xlu0 %4319
        %4321 = vadd.xlane.f32.xlu0 %v4290
        %v4322 = vpop.xlane.xlu0 %4321
        %v4323 = vadd.f32 %v3988, %v4292
        %v4324 = vadd.f32 %v3990, %v4294
        %v4325 = vadd.f32 %v3992, %v4296
        %v4326 = vadd.f32 %v3994, %v4298
        %v4327 = vadd.f32 %v3996, %v4300
        %v4328 = vadd.f32 %v3998, %v4302
        %v4329 = vadd.f32 %v4000, %v4304
        %v4330 = vadd.f32 %v4002, %v4306
        %v4331 = vadd.f32 %v4004, %v4308
        %v4332 = vadd.f32 %v4006, %v4310
        %v4333 = vadd.f32 %v4008, %v4312
        %v4334 = vadd.f32 %v4010, %v4314
        %v4335 = vadd.f32 %v4012, %v4316
        %v4336 = vadd.f32 %v4014, %v4318
        %v4337 = vadd.f32 %v4016, %v4320
        %v4338 = vadd.f32 %v4018, %v4322
        %4339 = vst [vmem:[%s529] sm:$0xff] %v4323
        %4340 = vst [vmem:[%s529 + $0x8] sm:$0xff] %v4324
        %4341 = vst [vmem:[%s529 + $0x10] sm:$0xff] %v4325
        %4342 = vst [vmem:[%s529 + $0x18] sm:$0xff] %v4326
        %4343 = vst [vmem:[%s529 + $0x20] sm:$0xff] %v4327
        %4344 = vst [vmem:[%s529 + $0x28] sm:$0xff] %v4328
        %4345 = vst [vmem:[%s529 + $0x30] sm:$0xff] %v4329
        %4346 = vst [vmem:[%s529 + $0x38] sm:$0xff] %v4330
        %4347 = vst [vmem:[%s529 + $0x40] sm:$0xff] %v4331
        %4348 = vst [vmem:[%s529 + $0x48] sm:$0xff] %v4332
        %4349 = vst [vmem:[%s529 + $0x50] sm:$0xff] %v4333
        %4350 = vst [vmem:[%s529 + $0x58] sm:$0xff] %v4334
        %4351 = vst [vmem:[%s529 + $0x60] sm:$0xff] %v4335
        %4352 = vst [vmem:[%s529 + $0x68] sm:$0xff] %v4336
        %4353 = vst [vmem:[%s529 + $0x70] sm:$0xff] %v4337
        %4354 = vst [vmem:[%s529 + $0x78] sm:$0xff] %v4338
        %s4355 = sand.u32 %s262, 1
        %s4356 = scalar_lea.sflag [#allocation4], %s4355
        %s4357 = sand.u32 %s262, 1
        %s4358 = smul.addr %s4357, 128
        %s4359 = scalar_lea.vmem [#allocation19], %s4358
        // Predicated region
        $region101: #{tpu_custom_call.1} parent=59 // pred_check
          %p4360 = pneg %p272
        $region102: #{tpu_custom_call.1} parent=59 // pred_check_branch
          %4362 = sbr.rel (%p4360) target = $region104
        $region103: #{tpu_custom_call.1} parent=59 // pred_region
          %s4363 = smul.u32 16, %s34
          %s4365 = ssub.s32 2048, 2048
          %4366 = vsyncadd %s4356, %s4365
          %s4367 = smul.addr %s4363, 128
          %s4368 = scalar_lea.hbm %s10, %s4367
          %s4369 = sshll.u32 %s4359, 4
          %s4370 = int_to_ptr.vmem [resolvable:$true] %s4369
          %4375 = dma.vmem_to_hbm [thread:$0]  %s4370, 2048, %s4368, %s4356, 128, 128, 8
        $region104: #{tpu_custom_call.1} parent=59 // pred_fallthru
          _
      $region60: #{tpu_custom_call.1} parent=5 // pred_fallthru
        _
      %p4376 = scmp.le.s32.totalorder 2, %s29
      // Predicated region
      $region105: #{tpu_custom_call.1} parent=5 // pred_check
        %p4377 = pneg %p4376
      $region106: #{tpu_custom_call.1} parent=5 // pred_check_branch
        %4379 = sbr.rel (%p4377) target = $region108
      $region107: #{tpu_custom_call.1} parent=5 // pred_region
        %s4380 = ssub.s32 %s29, 2
        // Predicated region
        $region109: #{tpu_custom_call.1} parent=107 // pred_check
          %p4381 = pneg %p278
        $region110: #{tpu_custom_call.1} parent=107 // pred_check_branch
          %4383 = sbr.rel (%p4381) target = $region112
        $region111: #{tpu_custom_call.1} parent=107 // pred_region
          %s4384 = sand.u32 %s263, 1
          %s4385 = scalar_lea.sflag [#allocation4], %s4384
          %s4386 = sand.u32 %s263, 1
          %s4387 = smul.addr %s4386, 128
          %s4388 = scalar_lea.vmem [#allocation19], %s4387
          %4389 = dma.done %s4385, 2048
        $region112: #{tpu_custom_call.1} parent=107 // pred_fallthru
          _
      $region108: #{tpu_custom_call.1} parent=5 // pred_fallthru
        _
    $region6: #{tpu_custom_call.1} parent=1 // loop_footer
      %s33 = sadd.s32 1, %s29
    $region7: #{tpu_custom_call.1} parent=1 // loop_footer_branch
      %28 = sbr.rel target = $region3
    $region8: #{tpu_custom_call.1} parent=1 // loop_exit
      _
    %4390 = vsyncpa [#allocation3], 1
    %s4391 = scalar_lea.sflag [#allocation3], 1
    %4392 = vsyncpa %s4391, 1
    %4393 = vsyncpa [#allocation6], 1
    %s4394 = scalar_lea.sflag [#allocation6], 1
    %4395 = vsyncpa %s4394, 1
    %4396 = vsyncpa [#allocation9], 1
    %4397 = vsyncpa [#allocation12], 1
    %4398 = vsyncpa [#allocation15], 1
    %4399 = vsyncpa [#allocation18], 1
    %4400 = vsyncpa [#allocation4], 1
    %s4401 = scalar_lea.sflag [#allocation4], 1
    %4402 = vsyncpa %s4401, 1

</llo_original>
